<compile_context>
chip_gen: v5e
topology: v5e:2x2
jax: 0.10.0
libtpu: 0.0.40
codegen_flags: <defaults>
</compile_context>

<pallas_src>
import functools

import numpy as np
import jax
import jax.numpy as jnp
from jax import lax
from jax.experimental import pallas as pl
from jax.experimental.pallas import tpu as pltpu


# ---- fixed srf-mode dimensions implied by the module (flatten = 60 * 64) -------------
C_IN, C1, C2 = 16, 32, 64
D_IN, H_IN, W_IN = 4, 4, 60
W_PAD = 64                     # time axis zero-padded 60 -> 64 for aligned tiles
NQ = 4                         # 2x2 conv_2 taps == 2x2 conv_1 output positions used
ROWS_PER_SAMPLE = NQ * W_PAD   # 256 im2col rows per sample for conv_1
OUT_ROWS_PER_SAMPLE = W_PAD    # 64 rows per sample after conv_2
FEAT_PAD = C2 * W_PAD          # 4096 (dense_1 input, padded; pad rows get zero weights)
HID, NCLS = 32, 4
BN_EPS = 1e-5


# ======================= kernel A: conv_1/bn/elu + conv_2/bn/elu ======================
def _conv_stage_kernel(tb, p_ref, w1_ref, s1_ref, t1_ref, w2_ref, s2_ref, t2_ref, o_ref):
    # p_ref : (tb*256, 64)  im2col patches, rows = (sample, q, w), cols = (ci, kd, kh)
    # w1_ref: (64, 32)      conv_1 weight (im2col form)
    # w2_ref: (128, 64)     conv_2 weight, rows grouped per tap q (4 blocks of 32)
    # s*,t* : (1, C)        folded (conv bias + eval-mode BatchNorm) scale / shift
    # o_ref : (tb*64, 64)   per-sample (time, channel) activations after elu_2
    h1 = jnp.dot(p_ref[...], w1_ref[...], preferred_element_type=jnp.float32)
    h1 = h1 * s1_ref[...] + t1_ref[...]
    h1 = jnp.where(h1 > 0.0, h1, jnp.exp(h1) - 1.0)          # ELU(alpha=1)

    for b in range(tb):                                      # small static unroll
        acc = jnp.zeros((W_PAD, C2), jnp.float32)
        for q in range(NQ):                                  # 2x2 taps of conv_2
            lhs = h1[b * ROWS_PER_SAMPLE + q * W_PAD:
                     b * ROWS_PER_SAMPLE + (q + 1) * W_PAD, :]      # (64, 32), aligned
            rhs = w2_ref[q * C1:(q + 1) * C1, :]                    # (32, 64), aligned
            acc = acc + jnp.dot(lhs, rhs, preferred_element_type=jnp.float32)
        y2 = acc * s2_ref[...] + t2_ref[...]
        y2 = jnp.where(y2 > 0.0, y2, jnp.exp(y2) - 1.0)
        o_ref[b * W_PAD:(b + 1) * W_PAD, :] = y2             # aligned, unmasked store


# =================== kernel B: dense_1..dense_3 + batchnorms + softmax ================
def _mlp_head_kernel(h_ref, wd1_ref, s3_ref, t3_ref, wd2_ref, s4_ref, t4_ref,
                     wd3_ref, b3_ref, o_ref):
    z = jnp.dot(h_ref[...], wd1_ref[...], preferred_element_type=jnp.float32)
    z = jnp.maximum(z * s3_ref[...] + t3_ref[...], 0.0)
    z = jnp.dot(z, wd2_ref[...], preferred_element_type=jnp.float32)
    z = jnp.maximum(z * s4_ref[...] + t4_ref[...], 0.0)
    z = jnp.dot(z, wd3_ref[...], preferred_element_type=jnp.float32) + b3_ref[...]
    z = z - jnp.max(z, axis=-1, keepdims=True)
    e = jnp.exp(z)
    o_ref[...] = e / jnp.sum(e, axis=-1, keepdims=True)


# ======================================= wrapper ======================================
def branch3dcnn_srf_forward(x, params):
    x = x.astype(jnp.float32)
    B = x.shape[0]
    assert x.shape[1:] == (C_IN, D_IN, H_IN, W_IN), x.shape
    P = params

    # ---- fold conv/linear biases + eval-mode BatchNorm into per-channel scale / shift
    def fold(bias, g, be, m, v):
        s = g / jnp.sqrt(v + BN_EPS)
        return s.reshape(1, -1), ((bias - m) * s + be).reshape(1, -1)

    s1, t1 = fold(P['b1'],  P['g1'], P['be1'], P['m1'], P['v1'])      # (1, 32)
    s2, t2 = fold(P['b2'],  P['g2'], P['be2'], P['m2'], P['v2'])      # (1, 64)
    s3, t3 = fold(P['bd1'], P['g3'], P['be3'], P['m3'], P['v3'])      # (1, 32)
    s4, t4 = fold(P['bd2'], P['g4'], P['be4'], P['m4'], P['v4'])      # (1, 32)
    b3 = P['bd3'].reshape(1, -1)                                      # (1, 4)

    # ---- weights in matmul (im2col) layout; torch's (C, D, H, W) flatten order is folded
    #      into dense_1's weight (consumer-side fusion -> no transpose kernel).
    w1m = P['w1'][..., 0].reshape(C1, C_IN * 4).T                         # (64, 32)
    w2m = P['w2'][..., 0].transpose(2, 3, 1, 0).reshape(NQ * C1, C2)      # (128, 64)
    wd1_wcj = P['wd1'].reshape(HID, C2, W_IN).transpose(2, 1, 0)          # (60, 64, 32)
    wd1p = jnp.pad(wd1_wcj, ((0, W_PAD - W_IN), (0, 0), (0, 0))).reshape(FEAT_PAD, HID)
    wd2t = P['wd2'].T                                                     # (32, 32)
    wd3t = P['wd3'].T                                                     # (32, 4)

    # ---- im2col for conv_1 (pure indexing, zero-expansion: stride == kernel on D/H).
    #      Only the 2x2 conv_1 output positions that feed conv_2 (and the output) are kept.
    x_pad = jnp.pad(x, ((0, 0), (0, 0), (1, 1), (1, 1), (0, W_PAD - W_IN)))
    x_top = x_pad[:, :, :4, :4, :]                                        # (B,16,4,4,64)
    patches = (x_top.reshape(B, C_IN, 2, 2, 2, 2, W_PAD)
               .transpose(0, 2, 4, 6, 1, 3, 5)                            # (B,d,h,w,ci,kd,kh)
               .reshape(B * ROWS_PER_SAMPLE, C_IN * 4))                   # (B*256, 64)

    # ---- kernel A: fused conv stage, TB samples per grid step (weights stay in VMEM)
    TB = B if B <= 8 else 8
    assert B % TB == 0
    conv_out = pl.pallas_call(
        functools.partial(_conv_stage_kernel, TB),
        out_shape=jax.ShapeDtypeStruct((B * OUT_ROWS_PER_SAMPLE, C2), jnp.float32),
        grid=(B // TB,),
        in_specs=[
            pl.BlockSpec((TB * ROWS_PER_SAMPLE, C_IN * 4), lambda i: (i, 0)),
            pl.BlockSpec((C_IN * 4, C1), lambda i: (0, 0)),
            pl.BlockSpec((1, C1), lambda i: (0, 0)),
            pl.BlockSpec((1, C1), lambda i: (0, 0)),
            pl.BlockSpec((NQ * C1, C2), lambda i: (0, 0)),
            pl.BlockSpec((1, C2), lambda i: (0, 0)),
            pl.BlockSpec((1, C2), lambda i: (0, 0)),
        ],
        out_specs=pl.BlockSpec((TB * OUT_ROWS_PER_SAMPLE, C2), lambda i: (i, 0)),
        compiler_params=pltpu.CompilerParams(dimension_semantics=("parallel",)),
    )(patches, w1m, s1, t1, w2m, s2, t2)

    # free contiguous reshape: (B*64, 64) -> (B, 4096), feature index = w*64 + c
    h_flat = conv_out.reshape(B, FEAT_PAD)

    # ---- kernel B: fused MLP head (everything fits VMEM in one step)
    out = pl.pallas_call(
        _mlp_head_kernel,
        out_shape=jax.ShapeDtypeStruct((B, NCLS), jnp.float32),
        grid=(1,),
        in_specs=[
            pl.BlockSpec((B, FEAT_PAD), lambda i: (0, 0)),
            pl.BlockSpec((FEAT_PAD, HID), lambda i: (0, 0)),
            pl.BlockSpec((1, HID), lambda i: (0, 0)),
            pl.BlockSpec((1, HID), lambda i: (0, 0)),
            pl.BlockSpec((HID, HID), lambda i: (0, 0)),
            pl.BlockSpec((1, HID), lambda i: (0, 0)),
            pl.BlockSpec((1, HID), lambda i: (0, 0)),
            pl.BlockSpec((HID, NCLS), lambda i: (0, 0)),
            pl.BlockSpec((1, NCLS), lambda i: (0, 0)),
        ],
        out_specs=pl.BlockSpec((B, NCLS), lambda i: (0, 0)),
        compiler_params=pltpu.CompilerParams(dimension_semantics=("arbitrary",)),
    )(h_flat, wd1p, s3, t3, wd2t, s4, t4, wd3t, b3)
    return out


# ============================= pure-JAX reference (XLA) ===============================
def branch3dcnn_srf_reference(x, P):
    prec = lax.Precision.HIGHEST

    def bn(y, g, be, m, v):
        shape = (1, -1) + (1,) * (y.ndim - 2)
        s = (g / jnp.sqrt(v + BN_EPS)).reshape(shape)
        return (y - m.reshape(shape)) * s + be.reshape(shape)

    y = lax.conv_general_dilated(x, P['w1'], window_strides=(2, 2, 1),
                                 padding=((1, 1), (1, 1), (0, 0)),
                                 dimension_numbers=('NCDHW', 'OIDHW', 'NCDHW'),
                                 precision=prec)
    y = y + P['b1'].reshape(1, -1, 1, 1, 1)
    y = jax.nn.elu(bn(y, P['g1'], P['be1'], P['m1'], P['v1']))
    y = lax.conv_general_dilated(y, P['w2'], window_strides=(2, 2, 1),
                                 padding=((0, 0), (0, 0), (0, 0)),
                                 dimension_numbers=('NCDHW', 'OIDHW', 'NCDHW'),
                                 precision=prec)
    y = y + P['b2'].reshape(1, -1, 1, 1, 1)
    y = jax.nn.elu(bn(y, P['g2'], P['be2'], P['m2'], P['v2']))
    z = y.reshape(x.shape[0], -1)                       # torch nn.Flatten (C, D, H, W) order
    z = jnp.dot(z, P['wd1'].T, precision=prec) + P['bd1']
    z = jax.nn.relu(bn(z, P['g3'], P['be3'], P['m3'], P['v3']))
    z = jnp.dot(z, P['wd2'].T, precision=prec) + P['bd2']
    z = jax.nn.relu(bn(z, P['g4'], P['be4'], P['m4'], P['v4']))
    z = jnp.dot(z, P['wd3'].T, precision=prec) + P['bd3']
    return jax.nn.softmax(z, axis=-1)


# ==================================== parameters ======================================
def init_params(key):
    ks = iter(jax.random.split(key, 32))

    def xavier_conv(shape):
        rf = shape[2] * shape[3] * shape[4]
        lim = float(np.sqrt(6.0 / (shape[1] * rf + shape[0] * rf)))
        return jax.random.uniform(next(ks), shape, jnp.float32, -lim, lim)

    def xavier_lin(shape):
        lim = float(np.sqrt(6.0 / (shape[0] + shape[1])))
        return jax.random.uniform(next(ks), shape, jnp.float32, -lim, lim)

    def bn_params(c):
        return (1.0 + 0.1 * jax.random.normal(next(ks), (c,), jnp.float32),        # gamma
                0.1 * jax.random.normal(next(ks), (c,), jnp.float32),              # beta
                0.1 * jax.random.normal(next(ks), (c,), jnp.float32),              # running_mean
                1.0 + 0.1 * jnp.abs(jax.random.normal(next(ks), (c,), jnp.float32)))  # running_var

    P = {}
    P['w1'] = xavier_conv((C1, C_IN, 2, 2, 1))
    P['b1'] = 0.05 * jax.random.normal(next(ks), (C1,), jnp.float32)
    P['g1'], P['be1'], P['m1'], P['v1'] = bn_params(C1)
    P['w2'] = xavier_conv((C2, C1, 2, 2, 1))
    P['b2'] = 0.05 * jax.random.normal(next(ks), (C2,), jnp.float32)
    P['g2'], P['be2'], P['m2'], P['v2'] = bn_params(C2)
    P['wd1'] = xavier_lin((HID, C2 * W_IN))
    P['bd1'] = 0.05 * jax.random.normal(next(ks), (HID,), jnp.float32)
    P['g3'], P['be3'], P['m3'], P['v3'] = bn_params(HID)
    P['wd2'] = xavier_lin((HID, HID))
    P['bd2'] = 0.05 * jax.random.normal(next(ks), (HID,), jnp.float32)
    P['g4'], P['be4'], P['m4'], P['v4'] = bn_params(HID)
    P['wd3'] = xavier_lin((NCLS, HID))
    P['bd3'] = 0.05 * jax.random.normal(next(ks), (NCLS,), jnp.float32)
    return P


if __name__ == "__main__":
    key = jax.random.PRNGKey(0)
    k_x, k_p = jax.random.split(key)
    B = 2
    x = jax.random.normal(k_x, (B, C_IN, D_IN, H_IN, W_IN), dtype=jnp.float32)
    params = init_params(k_p)

    fwd = jax.jit(branch3dcnn_srf_forward)
    out = jax.block_until_ready(fwd(x, params))

    ref = jax.block_until_ready(branch3dcnn_srf_reference(x, params))

    assert out.shape == (B, NCLS), out.shape
    assert bool(jnp.all(jnp.isfinite(out)))
    np.testing.assert_allclose(np.asarray(jnp.sum(out, axis=-1)), np.ones(B), atol=1e-5)
    np.testing.assert_allclose(np.asarray(out), np.asarray(ref), atol=5e-3, rtol=5e-3)

    print("KERNEL_OK")
</pallas_src>

<mosaic_0001>
module attributes {stable_mosaic.version = 11 : i64} {
  func.func @_conv_stage_kernel(%arg0: i32, %arg1: memref<512x64xf32, #tpu.memory_space<vmem>>, %arg2: memref<64x32xf32, #tpu.memory_space<vmem>>, %arg3: memref<1x32xf32, #tpu.memory_space<vmem>>, %arg4: memref<1x32xf32, #tpu.memory_space<vmem>>, %arg5: memref<128x64xf32, #tpu.memory_space<vmem>>, %arg6: memref<1x64xf32, #tpu.memory_space<vmem>>, %arg7: memref<1x64xf32, #tpu.memory_space<vmem>>, %arg8: memref<128x64xf32, #tpu.memory_space<vmem>>) attributes {dimension_semantics = [#tpu.dimension_semantics<parallel>], iteration_bounds = array<i64: 1>, scalar_prefetch = 0 : i64, scratch_operands = 0 : i64, tpu.core_type = #tpu.core_type<tc>, window_params = [{transform_indices = @transform_0, window_bounds = array<i64: 512, 64>}, {pipeline_mode = #tpu.pipeline_mode<synchronous>, transform_indices = @transform_1, window_bounds = array<i64: 64, 32>}, {pipeline_mode = #tpu.pipeline_mode<synchronous>, transform_indices = @transform_2, window_bounds = array<i64: 1, 32>}, {pipeline_mode = #tpu.pipeline_mode<synchronous>, transform_indices = @transform_3, window_bounds = array<i64: 1, 32>}, {pipeline_mode = #tpu.pipeline_mode<synchronous>, transform_indices = @transform_4, window_bounds = array<i64: 128, 64>}, {pipeline_mode = #tpu.pipeline_mode<synchronous>, transform_indices = @transform_5, window_bounds = array<i64: 1, 64>}, {pipeline_mode = #tpu.pipeline_mode<synchronous>, transform_indices = @transform_6, window_bounds = array<i64: 1, 64>}, {transform_indices = @transform_7, window_bounds = array<i64: 128, 64>}]} {
    %c0 = arith.constant 0 : index
    %c0_0 = arith.constant 0 : index
    %0 = vector.load %arg1[%c0, %c0_0] : memref<512x64xf32, #tpu.memory_space<vmem>>, vector<512x64xf32>
    %c0_1 = arith.constant 0 : index
    %c0_2 = arith.constant 0 : index
    %1 = vector.load %arg2[%c0_1, %c0_2] : memref<64x32xf32, #tpu.memory_space<vmem>>, vector<64x32xf32>
    %cst = arith.constant dense<0.000000e+00> : vector<512x32xf32>
    %2 = tpu.matmul %0, %1, %cst {dimension_numbers = #tpu.dot_dimension_numbers<[1], [0], [0], [1], [0, 0, 1, 1], [], []>} : vector<512x64xf32>, vector<64x32xf32>, vector<512x32xf32> -> vector<512x32xf32>
    %c0_3 = arith.constant 0 : index
    %c0_4 = arith.constant 0 : index
    %3 = vector.load %arg3[%c0_3, %c0_4] : memref<1x32xf32, #tpu.memory_space<vmem>>, vector<1x32xf32>
    %4 = vector.broadcast %3 : vector<1x32xf32> to vector<512x32xf32>
    %5 = arith.mulf %2, %4 : vector<512x32xf32>
    %c0_5 = arith.constant 0 : index
    %c0_6 = arith.constant 0 : index
    %6 = vector.load %arg4[%c0_5, %c0_6] : memref<1x32xf32, #tpu.memory_space<vmem>>, vector<1x32xf32>
    %7 = vector.broadcast %6 : vector<1x32xf32> to vector<512x32xf32>
    %8 = arith.addf %5, %7 : vector<512x32xf32>
    %cst_7 = arith.constant 0.000000e+00 : f32
    %9 = vector.broadcast %cst_7 : f32 to vector<512x32xf32>
    %10 = arith.cmpf ogt, %8, %9 : vector<512x32xf32>
    %11 = math.exp %8 : vector<512x32xf32>
    %cst_8 = arith.constant 1.000000e+00 : f32
    %12 = vector.broadcast %cst_8 : f32 to vector<512x32xf32>
    %13 = arith.subf %11, %12 : vector<512x32xf32>
    %14 = arith.select %10, %8, %13 : vector<512x32xi1>, vector<512x32xf32>
    %cst_9 = arith.constant 0.000000e+00 : f32
    %15 = vector.broadcast %cst_9 : f32 to vector<64x64xf32>
    %16 = vector.extract_strided_slice %14 {offsets = [0, 0], sizes = [64, 32], strides = [1, 1]} : vector<512x32xf32> to vector<64x32xf32>
    %c0_10 = arith.constant 0 : index
    %c0_11 = arith.constant 0 : index
    %17 = vector.load %arg5[%c0_10, %c0_11] : memref<128x64xf32, #tpu.memory_space<vmem>>, vector<32x64xf32>
    %cst_12 = arith.constant dense<0.000000e+00> : vector<64x64xf32>
    %18 = tpu.matmul %16, %17, %cst_12 {dimension_numbers = #tpu.dot_dimension_numbers<[1], [0], [0], [1], [0, 0, 1, 1], [], []>} : vector<64x32xf32>, vector<32x64xf32>, vector<64x64xf32> -> vector<64x64xf32>
    %19 = arith.addf %15, %18 : vector<64x64xf32>
    %20 = vector.extract_strided_slice %14 {offsets = [64, 0], sizes = [64, 32], strides = [1, 1]} : vector<512x32xf32> to vector<64x32xf32>
    %c32 = arith.constant 32 : index
    %c0_13 = arith.constant 0 : index
    %21 = vector.load %arg5[%c32, %c0_13] : memref<128x64xf32, #tpu.memory_space<vmem>>, vector<32x64xf32>
    %cst_14 = arith.constant dense<0.000000e+00> : vector<64x64xf32>
    %22 = tpu.matmul %20, %21, %cst_14 {dimension_numbers = #tpu.dot_dimension_numbers<[1], [0], [0], [1], [0, 0, 1, 1], [], []>} : vector<64x32xf32>, vector<32x64xf32>, vector<64x64xf32> -> vector<64x64xf32>
    %23 = arith.addf %19, %22 : vector<64x64xf32>
    %24 = vector.extract_strided_slice %14 {offsets = [128, 0], sizes = [64, 32], strides = [1, 1]} : vector<512x32xf32> to vector<64x32xf32>
    %c64 = arith.constant 64 : index
    %c0_15 = arith.constant 0 : index
    %25 = vector.load %arg5[%c64, %c0_15] : memref<128x64xf32, #tpu.memory_space<vmem>>, vector<32x64xf32>
    %cst_16 = arith.constant dense<0.000000e+00> : vector<64x64xf32>
    %26 = tpu.matmul %24, %25, %cst_16 {dimension_numbers = #tpu.dot_dimension_numbers<[1], [0], [0], [1], [0, 0, 1, 1], [], []>} : vector<64x32xf32>, vector<32x64xf32>, vector<64x64xf32> -> vector<64x64xf32>
    %27 = arith.addf %23, %26 : vector<64x64xf32>
    %28 = vector.extract_strided_slice %14 {offsets = [192, 0], sizes = [64, 32], strides = [1, 1]} : vector<512x32xf32> to vector<64x32xf32>
    %c96 = arith.constant 96 : index
    %c0_17 = arith.constant 0 : index
    %29 = vector.load %arg5[%c96, %c0_17] : memref<128x64xf32, #tpu.memory_space<vmem>>, vector<32x64xf32>
    %cst_18 = arith.constant dense<0.000000e+00> : vector<64x64xf32>
    %30 = tpu.matmul %28, %29, %cst_18 {dimension_numbers = #tpu.dot_dimension_numbers<[1], [0], [0], [1], [0, 0, 1, 1], [], []>} : vector<64x32xf32>, vector<32x64xf32>, vector<64x64xf32> -> vector<64x64xf32>
    %31 = arith.addf %27, %30 : vector<64x64xf32>
    %c0_19 = arith.constant 0 : index
    %c0_20 = arith.constant 0 : index
    %32 = vector.load %arg6[%c0_19, %c0_20] : memref<1x64xf32, #tpu.memory_space<vmem>>, vector<1x64xf32>
    %33 = vector.broadcast %32 : vector<1x64xf32> to vector<64x64xf32>
    %34 = arith.mulf %31, %33 : vector<64x64xf32>
    %c0_21 = arith.constant 0 : index
    %c0_22 = arith.constant 0 : index
    %35 = vector.load %arg7[%c0_21, %c0_22] : memref<1x64xf32, #tpu.memory_space<vmem>>, vector<1x64xf32>
    %36 = vector.broadcast %35 : vector<1x64xf32> to vector<64x64xf32>
    %37 = arith.addf %34, %36 : vector<64x64xf32>
    %cst_23 = arith.constant 0.000000e+00 : f32
    %38 = vector.broadcast %cst_23 : f32 to vector<64x64xf32>
    %39 = arith.cmpf ogt, %37, %38 : vector<64x64xf32>
    %40 = math.exp %37 : vector<64x64xf32>
    %cst_24 = arith.constant 1.000000e+00 : f32
    %41 = vector.broadcast %cst_24 : f32 to vector<64x64xf32>
    %42 = arith.subf %40, %41 : vector<64x64xf32>
    %43 = arith.select %39, %37, %42 : vector<64x64xi1>, vector<64x64xf32>
    %c0_25 = arith.constant 0 : index
    %c0_26 = arith.constant 0 : index
    %44 = vector.load %arg8[%c0_25, %c0_26] : memref<128x64xf32, #tpu.memory_space<vmem>>, vector<64x64xf32>
    tpu.vector_store %arg8[%c0_25, %c0_26], %43 {strides = array<i32>} : memref<128x64xf32, #tpu.memory_space<vmem>>, vector<64x64xf32>,
    %cst_27 = arith.constant 0.000000e+00 : f32
    %45 = vector.broadcast %cst_27 : f32 to vector<64x64xf32>
    %46 = vector.extract_strided_slice %14 {offsets = [256, 0], sizes = [64, 32], strides = [1, 1]} : vector<512x32xf32> to vector<64x32xf32>
    %c0_28 = arith.constant 0 : index
    %c0_29 = arith.constant 0 : index
    %47 = vector.load %arg5[%c0_28, %c0_29] : memref<128x64xf32, #tpu.memory_space<vmem>>, vector<32x64xf32>
    %cst_30 = arith.constant dense<0.000000e+00> : vector<64x64xf32>
    %48 = tpu.matmul %46, %47, %cst_30 {dimension_numbers = #tpu.dot_dimension_numbers<[1], [0], [0], [1], [0, 0, 1, 1], [], []>} : vector<64x32xf32>, vector<32x64xf32>, vector<64x64xf32> -> vector<64x64xf32>
    %49 = arith.addf %45, %48 : vector<64x64xf32>
    %50 = vector.extract_strided_slice %14 {offsets = [320, 0], sizes = [64, 32], strides = [1, 1]} : vector<512x32xf32> to vector<64x32xf32>
    %c32_31 = arith.constant 32 : index
    %c0_32 = arith.constant 0 : index
    %51 = vector.load %arg5[%c32_31, %c0_32] : memref<128x64xf32, #tpu.memory_space<vmem>>, vector<32x64xf32>
    %cst_33 = arith.constant dense<0.000000e+00> : vector<64x64xf32>
    %52 = tpu.matmul %50, %51, %cst_33 {dimension_numbers = #tpu.dot_dimension_numbers<[1], [0], [0], [1], [0, 0, 1, 1], [], []>} : vector<64x32xf32>, vector<32x64xf32>, vector<64x64xf32> -> vector<64x64xf32>
    %53 = arith.addf %49, %52 : vector<64x64xf32>
    %54 = vector.extract_strided_slice %14 {offsets = [384, 0], sizes = [64, 32], strides = [1, 1]} : vector<512x32xf32> to vector<64x32xf32>
    %c64_34 = arith.constant 64 : index
    %c0_35 = arith.constant 0 : index
    %55 = vector.load %arg5[%c64_34, %c0_35] : memref<128x64xf32, #tpu.memory_space<vmem>>, vector<32x64xf32>
    %cst_36 = arith.constant dense<0.000000e+00> : vector<64x64xf32>
    %56 = tpu.matmul %54, %55, %cst_36 {dimension_numbers = #tpu.dot_dimension_numbers<[1], [0], [0], [1], [0, 0, 1, 1], [], []>} : vector<64x32xf32>, vector<32x64xf32>, vector<64x64xf32> -> vector<64x64xf32>
    %57 = arith.addf %53, %56 : vector<64x64xf32>
    %58 = vector.extract_strided_slice %14 {offsets = [448, 0], sizes = [64, 32], strides = [1, 1]} : vector<512x32xf32> to vector<64x32xf32>
    %c96_37 = arith.constant 96 : index
    %c0_38 = arith.constant 0 : index
    %59 = vector.load %arg5[%c96_37, %c0_38] : memref<128x64xf32, #tpu.memory_space<vmem>>, vector<32x64xf32>
    %cst_39 = arith.constant dense<0.000000e+00> : vector<64x64xf32>
    %60 = tpu.matmul %58, %59, %cst_39 {dimension_numbers = #tpu.dot_dimension_numbers<[1], [0], [0], [1], [0, 0, 1, 1], [], []>} : vector<64x32xf32>, vector<32x64xf32>, vector<64x64xf32> -> vector<64x64xf32>
    %61 = arith.addf %57, %60 : vector<64x64xf32>
    %c0_40 = arith.constant 0 : index
    %c0_41 = arith.constant 0 : index
    %62 = vector.load %arg6[%c0_40, %c0_41] : memref<1x64xf32, #tpu.memory_space<vmem>>, vector<1x64xf32>
    %63 = vector.broadcast %62 : vector<1x64xf32> to vector<64x64xf32>
    %64 = arith.mulf %61, %63 : vector<64x64xf32>
    %c0_42 = arith.constant 0 : index
    %c0_43 = arith.constant 0 : index
    %65 = vector.load %arg7[%c0_42, %c0_43] : memref<1x64xf32, #tpu.memory_space<vmem>>, vector<1x64xf32>
    %66 = vector.broadcast %65 : vector<1x64xf32> to vector<64x64xf32>
    %67 = arith.addf %64, %66 : vector<64x64xf32>
    %cst_44 = arith.constant 0.000000e+00 : f32
    %68 = vector.broadcast %cst_44 : f32 to vector<64x64xf32>
    %69 = arith.cmpf ogt, %67, %68 : vector<64x64xf32>
    %70 = math.exp %67 : vector<64x64xf32>
    %cst_45 = arith.constant 1.000000e+00 : f32
    %71 = vector.broadcast %cst_45 : f32 to vector<64x64xf32>
    %72 = arith.subf %70, %71 : vector<64x64xf32>
    %73 = arith.select %69, %67, %72 : vector<64x64xi1>, vector<64x64xf32>
    %c64_46 = arith.constant 64 : index
    %c0_47 = arith.constant 0 : index
    %74 = vector.load %arg8[%c64_46, %c0_47] : memref<128x64xf32, #tpu.memory_space<vmem>>, vector<64x64xf32>
    tpu.vector_store %arg8[%c64_46, %c0_47], %73 {strides = array<i32>} : memref<128x64xf32, #tpu.memory_space<vmem>>, vector<64x64xf32>,
    return
  }
  func.func @transform_0(%arg0: i32) -> (i32, i32) {
    %c0_i32 = arith.constant 0 : i32
    %c0_i32_0 = arith.constant 0 : i32
    return %arg0, %c0_i32 : i32, i32
  }
  func.func @transform_1(%arg0: i32) -> (i32, i32) {
    %c0_i32 = arith.constant 0 : i32
    %c0_i32_0 = arith.constant 0 : i32
    %c0_i32_1 = arith.constant 0 : i32
    return %c0_i32, %c0_i32_0 : i32, i32
  }
  func.func @transform_2(%arg0: i32) -> (i32, i32) {
    %c0_i32 = arith.constant 0 : i32
    %c0_i32_0 = arith.constant 0 : i32
    %c0_i32_1 = arith.constant 0 : i32
    return %c0_i32, %c0_i32_0 : i32, i32
  }
  func.func @transform_3(%arg0: i32) -> (i32, i32) {
    %c0_i32 = arith.constant 0 : i32
    %c0_i32_0 = arith.constant 0 : i32
    %c0_i32_1 = arith.constant 0 : i32
    return %c0_i32, %c0_i32_0 : i32, i32
  }
  func.func @transform_4(%arg0: i32) -> (i32, i32) {
    %c0_i32 = arith.constant 0 : i32
    %c0_i32_0 = arith.constant 0 : i32
    %c0_i32_1 = arith.constant 0 : i32
    return %c0_i32, %c0_i32_0 : i32, i32
  }
  func.func @transform_5(%arg0: i32) -> (i32, i32) {
    %c0_i32 = arith.constant 0 : i32
    %c0_i32_0 = arith.constant 0 : i32
    %c0_i32_1 = arith.constant 0 : i32
    return %c0_i32, %c0_i32_0 : i32, i32
  }
  func.func @transform_6(%arg0: i32) -> (i32, i32) {
    %c0_i32 = arith.constant 0 : i32
    %c0_i32_0 = arith.constant 0 : i32
    %c0_i32_1 = arith.constant 0 : i32
    return %c0_i32, %c0_i32_0 : i32, i32
  }
  func.func @transform_7(%arg0: i32) -> (i32, i32) {
    %c0_i32 = arith.constant 0 : i32
    %c0_i32_0 = arith.constant 0 : i32
    return %arg0, %c0_i32 : i32, i32
  }
}

module attributes {stable_mosaic.version = 11 : i64} {
  func.func @_mlp_head_kernel(%arg0: i32, %arg1: memref<2x4096xf32, #tpu.memory_space<vmem>>, %arg2: memref<4096x32xf32, #tpu.memory_space<vmem>>, %arg3: memref<1x32xf32, #tpu.memory_space<vmem>>, %arg4: memref<1x32xf32, #tpu.memory_space<vmem>>, %arg5: memref<32x32xf32, #tpu.memory_space<vmem>>, %arg6: memref<1x32xf32, #tpu.memory_space<vmem>>, %arg7: memref<1x32xf32, #tpu.memory_space<vmem>>, %arg8: memref<32x4xf32, #tpu.memory_space<vmem>>, %arg9: memref<1x4xf32, #tpu.memory_space<vmem>>, %arg10: memref<2x4xf32, #tpu.memory_space<vmem>>) attributes {dimension_semantics = [#tpu.dimension_semantics<arbitrary>], iteration_bounds = array<i64: 1>, scalar_prefetch = 0 : i64, scratch_operands = 0 : i64, tpu.core_type = #tpu.core_type<tc>, window_params = [{pipeline_mode = #tpu.pipeline_mode<synchronous>, transform_indices = @transform_0, window_bounds = array<i64: 2, 4096>}, {pipeline_mode = #tpu.pipeline_mode<synchronous>, transform_indices = @transform_1, window_bounds = array<i64: 4096, 32>}, {pipeline_mode = #tpu.pipeline_mode<synchronous>, transform_indices = @transform_2, window_bounds = array<i64: 1, 32>}, {pipeline_mode = #tpu.pipeline_mode<synchronous>, transform_indices = @transform_3, window_bounds = array<i64: 1, 32>}, {pipeline_mode = #tpu.pipeline_mode<synchronous>, transform_indices = @transform_4, window_bounds = array<i64: 32, 32>}, {pipeline_mode = #tpu.pipeline_mode<synchronous>, transform_indices = @transform_5, window_bounds = array<i64: 1, 32>}, {pipeline_mode = #tpu.pipeline_mode<synchronous>, transform_indices = @transform_6, window_bounds = array<i64: 1, 32>}, {pipeline_mode = #tpu.pipeline_mode<synchronous>, transform_indices = @transform_7, window_bounds = array<i64: 32, 4>}, {pipeline_mode = #tpu.pipeline_mode<synchronous>, transform_indices = @transform_8, window_bounds = array<i64: 1, 4>}, {pipeline_mode = #tpu.pipeline_mode<synchronous>, transform_indices = @transform_9, window_bounds = array<i64: 2, 4>}]} {
    %c0 = arith.constant 0 : index
    %c0_0 = arith.constant 0 : index
    %0 = vector.load %arg1[%c0, %c0_0] : memref<2x4096xf32, #tpu.memory_space<vmem>>, vector<2x4096xf32>
    %c0_1 = arith.constant 0 : index
    %c0_2 = arith.constant 0 : index
    %1 = vector.load %arg2[%c0_1, %c0_2] : memref<4096x32xf32, #tpu.memory_space<vmem>>, vector<4096x32xf32>
    %cst = arith.constant dense<0.000000e+00> : vector<2x32xf32>
    %2 = tpu.matmul %0, %1, %cst {dimension_numbers = #tpu.dot_dimension_numbers<[1], [0], [0], [1], [0, 0, 1, 1], [], []>} : vector<2x4096xf32>, vector<4096x32xf32>, vector<2x32xf32> -> vector<2x32xf32>
    %c0_3 = arith.constant 0 : index
    %c0_4 = arith.constant 0 : index
    %3 = vector.load %arg3[%c0_3, %c0_4] : memref<1x32xf32, #tpu.memory_space<vmem>>, vector<1x32xf32>
    %4 = vector.broadcast %3 : vector<1x32xf32> to vector<2x32xf32>
    %5 = arith.mulf %2, %4 : vector<2x32xf32>
    %c0_5 = arith.constant 0 : index
    %c0_6 = arith.constant 0 : index
    %6 = vector.load %arg4[%c0_5, %c0_6] : memref<1x32xf32, #tpu.memory_space<vmem>>, vector<1x32xf32>
    %7 = vector.broadcast %6 : vector<1x32xf32> to vector<2x32xf32>
    %8 = arith.addf %5, %7 : vector<2x32xf32>
    %cst_7 = arith.constant 0.000000e+00 : f32
    %9 = vector.broadcast %cst_7 : f32 to vector<2x32xf32>
    %10 = arith.maximumf %8, %9 : vector<2x32xf32>
    %c0_8 = arith.constant 0 : index
    %c0_9 = arith.constant 0 : index
    %11 = vector.load %arg5[%c0_8, %c0_9] : memref<32x32xf32, #tpu.memory_space<vmem>>, vector<32x32xf32>
    %cst_10 = arith.constant dense<0.000000e+00> : vector<2x32xf32>
    %12 = tpu.matmul %10, %11, %cst_10 {dimension_numbers = #tpu.dot_dimension_numbers<[1], [0], [0], [1], [0, 0, 1, 1], [], []>} : vector<2x32xf32>, vector<32x32xf32>, vector<2x32xf32> -> vector<2x32xf32>
    %c0_11 = arith.constant 0 : index
    %c0_12 = arith.constant 0 : index
    %13 = vector.load %arg6[%c0_11, %c0_12] : memref<1x32xf32, #tpu.memory_space<vmem>>, vector<1x32xf32>
    %14 = vector.broadcast %13 : vector<1x32xf32> to vector<2x32xf32>
    %15 = arith.mulf %12, %14 : vector<2x32xf32>
    %c0_13 = arith.constant 0 : index
    %c0_14 = arith.constant 0 : index
    %16 = vector.load %arg7[%c0_13, %c0_14] : memref<1x32xf32, #tpu.memory_space<vmem>>, vector<1x32xf32>
    %17 = vector.broadcast %16 : vector<1x32xf32> to vector<2x32xf32>
    %18 = arith.addf %15, %17 : vector<2x32xf32>
    %cst_15 = arith.constant 0.000000e+00 : f32
    %19 = vector.broadcast %cst_15 : f32 to vector<2x32xf32>
    %20 = arith.maximumf %18, %19 : vector<2x32xf32>
    %c0_16 = arith.constant 0 : index
    %c0_17 = arith.constant 0 : index
    %21 = vector.load %arg8[%c0_16, %c0_17] : memref<32x4xf32, #tpu.memory_space<vmem>>, vector<32x4xf32>
    %cst_18 = arith.constant dense<0.000000e+00> : vector<2x4xf32>
    %22 = tpu.matmul %20, %21, %cst_18 {dimension_numbers = #tpu.dot_dimension_numbers<[1], [0], [0], [1], [0, 0, 1, 1], [], []>} : vector<2x32xf32>, vector<32x4xf32>, vector<2x4xf32> -> vector<2x4xf32>
    %c0_19 = arith.constant 0 : index
    %c0_20 = arith.constant 0 : index
    %23 = vector.load %arg9[%c0_19, %c0_20] : memref<1x4xf32, #tpu.memory_space<vmem>>, vector<1x4xf32>
    %24 = vector.broadcast %23 : vector<1x4xf32> to vector<2x4xf32>
    %25 = arith.addf %22, %24 : vector<2x4xf32>
    %cst_21 = arith.constant dense<0xFF800000> : vector<2xf32>
    %26 = vector.multi_reduction <maximumf>, %25, %cst_21 [1] : vector<2x4xf32> to vector<2xf32>
    %27 = vector.shape_cast %26 : vector<2xf32> to vector<2x1xf32>
    %28 = vector.broadcast %27 : vector<2x1xf32> to vector<2x4xf32>
    %29 = arith.subf %25, %28 : vector<2x4xf32>
    %30 = math.exp %29 : vector<2x4xf32>
    %cst_22 = arith.constant dense<0.000000e+00> : vector<2xf32>
    %31 = vector.multi_reduction <add>, %30, %cst_22 [1] : vector<2x4xf32> to vector<2xf32>
    %32 = vector.shape_cast %31 : vector<2xf32> to vector<2x1xf32>
    %33 = vector.broadcast %32 : vector<2x1xf32> to vector<2x4xf32>
    %34 = arith.divf %30, %33 : vector<2x4xf32>
    %c0_23 = arith.constant 0 : index
    %c0_24 = arith.constant 0 : index
    %35 = vector.load %arg10[%c0_23, %c0_24] : memref<2x4xf32, #tpu.memory_space<vmem>>, vector<2x4xf32>
    tpu.vector_store %arg10[%c0_23, %c0_24], %34 {strides = array<i32>} : memref<2x4xf32, #tpu.memory_space<vmem>>, vector<2x4xf32>,
    return
  }
  func.func @transform_0(%arg0: i32) -> (i32, i32) {
    %c0_i32 = arith.constant 0 : i32
    %c0_i32_0 = arith.constant 0 : i32
    %c0_i32_1 = arith.constant 0 : i32
    return %c0_i32, %c0_i32_0 : i32, i32
  }
  func.func @transform_1(%arg0: i32) -> (i32, i32) {
    %c0_i32 = arith.constant 0 : i32
    %c0_i32_0 = arith.constant 0 : i32
    %c0_i32_1 = arith.constant 0 : i32
    return %c0_i32, %c0_i32_0 : i32, i32
  }
  func.func @transform_2(%arg0: i32) -> (i32, i32) {
    %c0_i32 = arith.constant 0 : i32
    %c0_i32_0 = arith.constant 0 : i32
    %c0_i32_1 = arith.constant 0 : i32
    return %c0_i32, %c0_i32_0 : i32, i32
  }
  func.func @transform_3(%arg0: i32) -> (i32, i32) {
    %c0_i32 = arith.constant 0 : i32
    %c0_i32_0 = arith.constant 0 : i32
    %c0_i32_1 = arith.constant 0 : i32
    return %c0_i32, %c0_i32_0 : i32, i32
  }
  func.func @transform_4(%arg0: i32) -> (i32, i32) {
    %c0_i32 = arith.constant 0 : i32
    %c0_i32_0 = arith.constant 0 : i32
    %c0_i32_1 = arith.constant 0 : i32
    return %c0_i32, %c0_i32_0 : i32, i32
  }
  func.func @transform_5(%arg0: i32) -> (i32, i32) {
    %c0_i32 = arith.constant 0 : i32
    %c0_i32_0 = arith.constant 0 : i32
    %c0_i32_1 = arith.constant 0 : i32
    return %c0_i32, %c0_i32_0 : i32, i32
  }
  func.func @transform_6(%arg0: i32) -> (i32, i32) {
    %c0_i32 = arith.constant 0 : i32
    %c0_i32_0 = arith.constant 0 : i32
    %c0_i32_1 = arith.constant 0 : i32
    return %c0_i32, %c0_i32_0 : i32, i32
  }
  func.func @transform_7(%arg0: i32) -> (i32, i32) {
    %c0_i32 = arith.constant 0 : i32
    %c0_i32_0 = arith.constant 0 : i32
    %c0_i32_1 = arith.constant 0 : i32
    return %c0_i32, %c0_i32_0 : i32, i32
  }
  func.func @transform_8(%arg0: i32) -> (i32, i32) {
    %c0_i32 = arith.constant 0 : i32
    %c0_i32_0 = arith.constant 0 : i32
    %c0_i32_1 = arith.constant 0 : i32
    return %c0_i32, %c0_i32_0 : i32, i32
  }
  func.func @transform_9(%arg0: i32) -> (i32, i32) {
    %c0_i32 = arith.constant 0 : i32
    %c0_i32_0 = arith.constant 0 : i32
    %c0_i32_1 = arith.constant 0 : i32
    return %c0_i32, %c0_i32_0 : i32, i32
  }
}

</mosaic_0001>

<llo_original>
// kernel: branch3dcnn_srf_forward.2
$region0: #{branch3dcnn_srf_forward.2}
  #allocation0 [shape = 'u32[]', space=smem, size = 0x4, offset = 0x4, fixed_abs, tag = 'smem constant byte address 0x4 - core index']
  #allocation1 [shape = 'u32[72,128]{1,0:T(1,128)}', space=vmem, size = 0x9000, scoped, tag = 'internal scratch']
  %s0 = inlined_call_operand.vmem [shape: f32[512,64], index: 0, kind: input, shape index: {}]
  %s1 = inlined_call_operand.hbm [shape: f32[64,32], index: 1, kind: input, shape index: {}]
  %s2 = inlined_call_operand.vmem [shape: f32[1,32], index: 2, kind: input, shape index: {}]
  %s3 = inlined_call_operand.vmem [shape: f32[1,32], index: 3, kind: input, shape index: {}]
  %s4 = inlined_call_operand.vmem [shape: f32[128,64], index: 4, kind: input, shape index: {}]
  %s5 = inlined_call_operand.vmem [shape: f32[1,64], index: 5, kind: input, shape index: {}]
  %s6 = inlined_call_operand.vmem [shape: f32[1,64], index: 6, kind: input, shape index: {}]
  %s7 = inlined_call_operand.vmem [shape: f32[128,64], index: 7, kind: output, shape index: {}]
  %s8 = sld [smem:[#allocation0]]
  $region42: #{branch3dcnn_srf_forward.2} parent=0
    _
  %s10 = ssub.s32 1, %s8
  %s11 = scalar_select 0, %s10, %s8
  $region1: #{branch3dcnn_srf_forward.2} parent=0
    #allocation2 [shape = 'u8[32768]{0}', space=vmem, size = 0x8000, scoped, tag = 'input window, operand 1, single buffered']
    #allocation3 [shape = 's32[1]{0}', space=sflag, size = 0x4, scoped, tag = 'scoped memory for branch3dcnn_srf_forward.2']
    %12 = vsyncpa [#allocation3], 0
    // Predicated region
    $region2: #{branch3dcnn_srf_forward.2} parent=1 // pred_check
      _
    $region3: #{branch3dcnn_srf_forward.2} parent=1 // pred_check_branch
      %14 = sbr.rel (0) target = $region5
    $region4: #{branch3dcnn_srf_forward.2} parent=1 // pred_region
      _
    $region5: #{branch3dcnn_srf_forward.2} parent=1 // pred_fallthru
      _
    // Predicated region
    $region6: #{branch3dcnn_srf_forward.2} parent=1 // pred_check
      _
    $region7: #{branch3dcnn_srf_forward.2} parent=1 // pred_check_branch
      %16 = sbr.rel (0) target = $region9
    $region8: #{branch3dcnn_srf_forward.2} parent=1 // pred_region
      %18 = vsyncadd [#allocation3], 0
      %s19 = sshll.u32 %s1, 4
      %s20 = int_to_ptr.hbm [resolvable:$true] %s19
      %s21 = sshll.u32 [#allocation2], 4
      %s22 = int_to_ptr.vmem [resolvable:$true] %s21
      %27 = dma.hbm_to_vmem [thread:$0]  %s20, 1024, %s22, [#allocation3], 128, 128, 8
    $region9: #{branch3dcnn_srf_forward.2} parent=1 // pred_fallthru
      _
    // Predicated region
    $region10: #{branch3dcnn_srf_forward.2} parent=1 // pred_check
      _
    $region11: #{branch3dcnn_srf_forward.2} parent=1 // pred_check_branch
      %29 = sbr.rel (0) target = $region13
    $region12: #{branch3dcnn_srf_forward.2} parent=1 // pred_region
      _
    $region13: #{branch3dcnn_srf_forward.2} parent=1 // pred_fallthru
      _
    // Predicated region
    $region14: #{branch3dcnn_srf_forward.2} parent=1 // pred_check
      _
    $region15: #{branch3dcnn_srf_forward.2} parent=1 // pred_check_branch
      %31 = sbr.rel (0) target = $region17
    $region16: #{branch3dcnn_srf_forward.2} parent=1 // pred_region
      _
    $region17: #{branch3dcnn_srf_forward.2} parent=1 // pred_fallthru
      _
    // Predicated region
    $region18: #{branch3dcnn_srf_forward.2} parent=1 // pred_check
      _
    $region19: #{branch3dcnn_srf_forward.2} parent=1 // pred_check_branch
      %33 = sbr.rel (0) target = $region21
    $region20: #{branch3dcnn_srf_forward.2} parent=1 // pred_region
      _
    $region21: #{branch3dcnn_srf_forward.2} parent=1 // pred_fallthru
      _
    // Predicated region
    $region22: #{branch3dcnn_srf_forward.2} parent=1 // pred_check
      _
    $region23: #{branch3dcnn_srf_forward.2} parent=1 // pred_check_branch
      %35 = sbr.rel (0) target = $region25
    $region24: #{branch3dcnn_srf_forward.2} parent=1 // pred_region
      _
    $region25: #{branch3dcnn_srf_forward.2} parent=1 // pred_fallthru
      _
    // Predicated region
    $region26: #{branch3dcnn_srf_forward.2} parent=1 // pred_check
      _
    $region27: #{branch3dcnn_srf_forward.2} parent=1 // pred_check_branch
      %37 = sbr.rel (0) target = $region29
    $region28: #{branch3dcnn_srf_forward.2} parent=1 // pred_region
      _
    $region29: #{branch3dcnn_srf_forward.2} parent=1 // pred_fallthru
      _
    // Predicated region
    $region30: #{branch3dcnn_srf_forward.2} parent=1 // pred_check
      _
    $region31: #{branch3dcnn_srf_forward.2} parent=1 // pred_check_branch
      %39 = sbr.rel (0) target = $region33
    $region32: #{branch3dcnn_srf_forward.2} parent=1 // pred_region
      %41 = dma.done [#allocation3], 1024
    $region33: #{branch3dcnn_srf_forward.2} parent=1 // pred_fallthru
      _
    %v42 = vld [vmem:[%s0] sm:$0xff]
    %v43 = vld [vmem:[%s0 + $0x8] sm:$0xff]
    %v44 = vld [vmem:[%s0 + $0x10] sm:$0xff]
    %v45 = vld [vmem:[%s0 + $0x18] sm:$0xff]
    %v46 = vld [vmem:[%s0 + $0x20] sm:$0xff]
    %v47 = vld [vmem:[%s0 + $0x28] sm:$0xff]
    %v48 = vld [vmem:[%s0 + $0x30] sm:$0xff]
    %v49 = vld [vmem:[%s0 + $0x38] sm:$0xff]
    %v50 = vld [vmem:[%s0 + $0x40] sm:$0xff]
    %v51 = vld [vmem:[%s0 + $0x48] sm:$0xff]
    %v52 = vld [vmem:[%s0 + $0x50] sm:$0xff]
    %v53 = vld [vmem:[%s0 + $0x58] sm:$0xff]
    %v54 = vld [vmem:[%s0 + $0x60] sm:$0xff]
    %v55 = vld [vmem:[%s0 + $0x68] sm:$0xff]
    %v56 = vld [vmem:[%s0 + $0x70] sm:$0xff]
    %v57 = vld [vmem:[%s0 + $0x78] sm:$0xff]
    %v58 = vld [vmem:[%s0 + $0x80] sm:$0xff]
    %v59 = vld [vmem:[%s0 + $0x88] sm:$0xff]
    %v60 = vld [vmem:[%s0 + $0x90] sm:$0xff]
    %v61 = vld [vmem:[%s0 + $0x98] sm:$0xff]
    %v62 = vld [vmem:[%s0 + $0xa0] sm:$0xff]
    %v63 = vld [vmem:[%s0 + $0xa8] sm:$0xff]
    %v64 = vld [vmem:[%s0 + $0xb0] sm:$0xff]
    %v65 = vld [vmem:[%s0 + $0xb8] sm:$0xff]
    %v66 = vld [vmem:[%s0 + $0xc0] sm:$0xff]
    %v67 = vld [vmem:[%s0 + $0xc8] sm:$0xff]
    %v68 = vld [vmem:[%s0 + $0xd0] sm:$0xff]
    %v69 = vld [vmem:[%s0 + $0xd8] sm:$0xff]
    %v70 = vld [vmem:[%s0 + $0xe0] sm:$0xff]
    %v71 = vld [vmem:[%s0 + $0xe8] sm:$0xff]
    %v72 = vld [vmem:[%s0 + $0xf0] sm:$0xff]
    %v73 = vld [vmem:[%s0 + $0xf8] sm:$0xff]
    %v74 = vld [vmem:[%s0 + $0x100] sm:$0xff]
    %v75 = vld [vmem:[%s0 + $0x108] sm:$0xff]
    %v76 = vld [vmem:[%s0 + $0x110] sm:$0xff]
    %v77 = vld [vmem:[%s0 + $0x118] sm:$0xff]
    %v78 = vld [vmem:[%s0 + $0x120] sm:$0xff]
    %v79 = vld [vmem:[%s0 + $0x128] sm:$0xff]
    %v80 = vld [vmem:[%s0 + $0x130] sm:$0xff]
    %v81 = vld [vmem:[%s0 + $0x138] sm:$0xff]
    %v82 = vld [vmem:[%s0 + $0x140] sm:$0xff]
    %v83 = vld [vmem:[%s0 + $0x148] sm:$0xff]
    %v84 = vld [vmem:[%s0 + $0x150] sm:$0xff]
    %v85 = vld [vmem:[%s0 + $0x158] sm:$0xff]
    %v86 = vld [vmem:[%s0 + $0x160] sm:$0xff]
    %v87 = vld [vmem:[%s0 + $0x168] sm:$0xff]
    %v88 = vld [vmem:[%s0 + $0x170] sm:$0xff]
    %v89 = vld [vmem:[%s0 + $0x178] sm:$0xff]
    %v90 = vld [vmem:[%s0 + $0x180] sm:$0xff]
    %v91 = vld [vmem:[%s0 + $0x188] sm:$0xff]
    %v92 = vld [vmem:[%s0 + $0x190] sm:$0xff]
    %v93 = vld [vmem:[%s0 + $0x198] sm:$0xff]
    %v94 = vld [vmem:[%s0 + $0x1a0] sm:$0xff]
    %v95 = vld [vmem:[%s0 + $0x1a8] sm:$0xff]
    %v96 = vld [vmem:[%s0 + $0x1b0] sm:$0xff]
    %v97 = vld [vmem:[%s0 + $0x1b8] sm:$0xff]
    %v98 = vld [vmem:[%s0 + $0x1c0] sm:$0xff]
    %v99 = vld [vmem:[%s0 + $0x1c8] sm:$0xff]
    %v100 = vld [vmem:[%s0 + $0x1d0] sm:$0xff]
    %v101 = vld [vmem:[%s0 + $0x1d8] sm:$0xff]
    %v102 = vld [vmem:[%s0 + $0x1e0] sm:$0xff]
    %v103 = vld [vmem:[%s0 + $0x1e8] sm:$0xff]
    %v104 = vld [vmem:[%s0 + $0x1f0] sm:$0xff]
    %v105 = vld [vmem:[%s0 + $0x1f8] sm:$0xff]
    %v106 = vld [vmem:[#allocation2] sm:$0xff]
    %v107 = vld [vmem:[#allocation2 + $0x8] sm:$0xff]
    %v108 = vld [vmem:[#allocation2 + $0x10] sm:$0xff]
    %v109 = vld [vmem:[#allocation2 + $0x18] sm:$0xff]
    %v110 = vld [vmem:[#allocation2 + $0x20] sm:$0xff]
    %v111 = vld [vmem:[#allocation2 + $0x28] sm:$0xff]
    %v112 = vld [vmem:[#allocation2 + $0x30] sm:$0xff]
    %v113 = vld [vmem:[#allocation2 + $0x38] sm:$0xff]
    %vm114 = vcmask 523264
    %v116 = vsel %vm114, %v42, 0
    %v119 = vsel %vm114, %v43, 0
    %v122 = vsel %vm114, %v44, 0
    %v125 = vsel %vm114, %v45, 0
    %v128 = vsel %vm114, %v46, 0
    %v131 = vsel %vm114, %v47, 0
    %v134 = vsel %vm114, %v48, 0
    %v137 = vsel %vm114, %v49, 0
    %v140 = vsel %vm114, %v50, 0
    %v143 = vsel %vm114, %v51, 0
    %v146 = vsel %vm114, %v52, 0
    %v149 = vsel %vm114, %v53, 0
    %v152 = vsel %vm114, %v54, 0
    %v155 = vsel %vm114, %v55, 0
    %v158 = vsel %vm114, %v56, 0
    %v161 = vsel %vm114, %v57, 0
    %v164 = vsel %vm114, %v58, 0
    %v167 = vsel %vm114, %v59, 0
    %v170 = vsel %vm114, %v60, 0
    %v173 = vsel %vm114, %v61, 0
    %v176 = vsel %vm114, %v62, 0
    %v179 = vsel %vm114, %v63, 0
    %v182 = vsel %vm114, %v64, 0
    %v185 = vsel %vm114, %v65, 0
    %v188 = vsel %vm114, %v66, 0
    %v191 = vsel %vm114, %v67, 0
    %v194 = vsel %vm114, %v68, 0
    %v197 = vsel %vm114, %v69, 0
    %v200 = vsel %vm114, %v70, 0
    %v203 = vsel %vm114, %v71, 0
    %v206 = vsel %vm114, %v72, 0
    %v209 = vsel %vm114, %v73, 0
    %v212 = vsel %vm114, %v74, 0
    %v215 = vsel %vm114, %v75, 0
    %v218 = vsel %vm114, %v76, 0
    %v221 = vsel %vm114, %v77, 0
    %v224 = vsel %vm114, %v78, 0
    %v227 = vsel %vm114, %v79, 0
    %v230 = vsel %vm114, %v80, 0
    %v233 = vsel %vm114, %v81, 0
    %v236 = vsel %vm114, %v82, 0
    %v239 = vsel %vm114, %v83, 0
    %v242 = vsel %vm114, %v84, 0
    %v245 = vsel %vm114, %v85, 0
    %v248 = vsel %vm114, %v86, 0
    %v251 = vsel %vm114, %v87, 0
    %v254 = vsel %vm114, %v88, 0
    %v257 = vsel %vm114, %v89, 0
    %v260 = vsel %vm114, %v90, 0
    %v263 = vsel %vm114, %v91, 0
    %v266 = vsel %vm114, %v92, 0
    %v269 = vsel %vm114, %v93, 0
    %v272 = vsel %vm114, %v94, 0
    %v275 = vsel %vm114, %v95, 0
    %v278 = vsel %vm114, %v96, 0
    %v281 = vsel %vm114, %v97, 0
    %v284 = vsel %vm114, %v98, 0
    %v287 = vsel %vm114, %v99, 0
    %v290 = vsel %vm114, %v100, 0
    %v293 = vsel %vm114, %v101, 0
    %v296 = vsel %vm114, %v102, 0
    %v299 = vsel %vm114, %v103, 0
    %v302 = vsel %vm114, %v104, 0
    %v305 = vsel %vm114, %v105, 0
    %307 = vmatpush.msra.mxu0 0.0
    %308 = vmatpush.msra.mxu0 0.0
    %309 = vmatpush.msra.mxu0 0.0
    %310 = vmatpush.msra.mxu0 0.0
    %311 = vmatpush.msra.mxu0 0.0
    %312 = vmatpush.msra.mxu0 0.0
    %313 = vmatpush.msra.mxu0 0.0
    %314 = vmatpush.msra.mxu0 0.0
    %315 = vmatpush.msra.mxu0 %v113
    %316 = vmatpush.msra.mxu0 %v112
    %317 = vmatpush.msra.mxu0 %v111
    %318 = vmatpush.msra.mxu0 %v110
    %319 = vmatpush.msra.mxu0 %v109
    %320 = vmatpush.msra.mxu0 %v108
    %321 = vmatpush.msra.mxu0 %v107
    %322 = vmatpush.msra.mxu0 %v106
    %323 = vmatmul.f32.gmra.mxu0 %v116
    %v324 = vpop.f32.mrf.mxu0
    %v325 = vadd.f32 0.0, %v324
    %326 = vmatmul.f32.gmra.mxu0 %v119
    %v327 = vpop.f32.mrf.mxu0
    %v328 = vadd.f32 0.0, %v327
    %329 = vmatmul.f32.gmra.mxu0 %v122
    %v330 = vpop.f32.mrf.mxu0
    %v331 = vadd.f32 0.0, %v330
    %332 = vmatmul.f32.gmra.mxu0 %v125
    %v333 = vpop.f32.mrf.mxu0
    %v334 = vadd.f32 0.0, %v333
    %335 = vmatmul.f32.gmra.mxu0 %v128
    %v336 = vpop.f32.mrf.mxu0
    %v337 = vadd.f32 0.0, %v336
    %338 = vmatmul.f32.gmra.mxu0 %v131
    %v339 = vpop.f32.mrf.mxu0
    %v340 = vadd.f32 0.0, %v339
    %341 = vmatmul.f32.gmra.mxu0 %v134
    %v342 = vpop.f32.mrf.mxu0
    %v343 = vadd.f32 0.0, %v342
    %344 = vmatmul.f32.gmra.mxu0 %v137
    %v345 = vpop.f32.mrf.mxu0
    %v346 = vadd.f32 0.0, %v345
    %347 = vmatmul.f32.gmra.mxu0 %v140
    %v348 = vpop.f32.mrf.mxu0
    %v349 = vadd.f32 0.0, %v348
    %350 = vmatmul.f32.gmra.mxu0 %v143
    %v351 = vpop.f32.mrf.mxu0
    %v352 = vadd.f32 0.0, %v351
    %353 = vmatmul.f32.gmra.mxu0 %v146
    %v354 = vpop.f32.mrf.mxu0
    %v355 = vadd.f32 0.0, %v354
    %356 = vmatmul.f32.gmra.mxu0 %v149
    %v357 = vpop.f32.mrf.mxu0
    %v358 = vadd.f32 0.0, %v357
    %359 = vmatmul.f32.gmra.mxu0 %v152
    %v360 = vpop.f32.mrf.mxu0
    %v361 = vadd.f32 0.0, %v360
    %362 = vmatmul.f32.gmra.mxu0 %v155
    %v363 = vpop.f32.mrf.mxu0
    %v364 = vadd.f32 0.0, %v363
    %365 = vmatmul.f32.gmra.mxu0 %v158
    %v366 = vpop.f32.mrf.mxu0
    %v367 = vadd.f32 0.0, %v366
    %368 = vmatmul.f32.gmra.mxu0 %v161
    %v369 = vpop.f32.mrf.mxu0
    %v370 = vadd.f32 0.0, %v369
    %371 = vmatmul.f32.gmra.mxu0 %v164
    %v372 = vpop.f32.mrf.mxu0
    %v373 = vadd.f32 0.0, %v372
    %374 = vmatmul.f32.gmra.mxu0 %v167
    %v375 = vpop.f32.mrf.mxu0
    %v376 = vadd.f32 0.0, %v375
    %377 = vmatmul.f32.gmra.mxu0 %v170
    %v378 = vpop.f32.mrf.mxu0
    %v379 = vadd.f32 0.0, %v378
    %380 = vmatmul.f32.gmra.mxu0 %v173
    %v381 = vpop.f32.mrf.mxu0
    %v382 = vadd.f32 0.0, %v381
    %383 = vmatmul.f32.gmra.mxu0 %v176
    %v384 = vpop.f32.mrf.mxu0
    %v385 = vadd.f32 0.0, %v384
    %386 = vmatmul.f32.gmra.mxu0 %v179
    %v387 = vpop.f32.mrf.mxu0
    %v388 = vadd.f32 0.0, %v387
    %389 = vmatmul.f32.gmra.mxu0 %v182
    %v390 = vpop.f32.mrf.mxu0
    %v391 = vadd.f32 0.0, %v390
    %392 = vmatmul.f32.gmra.mxu0 %v185
    %v393 = vpop.f32.mrf.mxu0
    %v394 = vadd.f32 0.0, %v393
    %395 = vmatmul.f32.gmra.mxu0 %v188
    %v396 = vpop.f32.mrf.mxu0
    %v397 = vadd.f32 0.0, %v396
    %398 = vmatmul.f32.gmra.mxu0 %v191
    %v399 = vpop.f32.mrf.mxu0
    %v400 = vadd.f32 0.0, %v399
    %401 = vmatmul.f32.gmra.mxu0 %v194
    %v402 = vpop.f32.mrf.mxu0
    %v403 = vadd.f32 0.0, %v402
    %404 = vmatmul.f32.gmra.mxu0 %v197
    %v405 = vpop.f32.mrf.mxu0
    %v406 = vadd.f32 0.0, %v405
    %407 = vmatmul.f32.gmra.mxu0 %v200
    %v408 = vpop.f32.mrf.mxu0
    %v409 = vadd.f32 0.0, %v408
    %410 = vmatmul.f32.gmra.mxu0 %v203
    %v411 = vpop.f32.mrf.mxu0
    %v412 = vadd.f32 0.0, %v411
    %413 = vmatmul.f32.gmra.mxu0 %v206
    %v414 = vpop.f32.mrf.mxu0
    %v415 = vadd.f32 0.0, %v414
    %416 = vmatmul.f32.gmra.mxu0 %v209
    %v417 = vpop.f32.mrf.mxu0
    %v418 = vadd.f32 0.0, %v417
    %419 = vmatmul.f32.gmra.mxu0 %v212
    %v420 = vpop.f32.mrf.mxu0
    %v421 = vadd.f32 0.0, %v420
    %422 = vmatmul.f32.gmra.mxu0 %v215
    %v423 = vpop.f32.mrf.mxu0
    %v424 = vadd.f32 0.0, %v423
    %425 = vmatmul.f32.gmra.mxu0 %v218
    %v426 = vpop.f32.mrf.mxu0
    %v427 = vadd.f32 0.0, %v426
    %428 = vmatmul.f32.gmra.mxu0 %v221
    %v429 = vpop.f32.mrf.mxu0
    %v430 = vadd.f32 0.0, %v429
    %431 = vmatmul.f32.gmra.mxu0 %v224
    %v432 = vpop.f32.mrf.mxu0
    %v433 = vadd.f32 0.0, %v432
    %434 = vmatmul.f32.gmra.mxu0 %v227
    %v435 = vpop.f32.mrf.mxu0
    %v436 = vadd.f32 0.0, %v435
    %437 = vmatmul.f32.gmra.mxu0 %v230
    %v438 = vpop.f32.mrf.mxu0
    %v439 = vadd.f32 0.0, %v438
    %440 = vmatmul.f32.gmra.mxu0 %v233
    %v441 = vpop.f32.mrf.mxu0
    %v442 = vadd.f32 0.0, %v441
    %443 = vmatmul.f32.gmra.mxu0 %v236
    %v444 = vpop.f32.mrf.mxu0
    %v445 = vadd.f32 0.0, %v444
    %446 = vmatmul.f32.gmra.mxu0 %v239
    %v447 = vpop.f32.mrf.mxu0
    %v448 = vadd.f32 0.0, %v447
    %449 = vmatmul.f32.gmra.mxu0 %v242
    %v450 = vpop.f32.mrf.mxu0
    %v451 = vadd.f32 0.0, %v450
    %452 = vmatmul.f32.gmra.mxu0 %v245
    %v453 = vpop.f32.mrf.mxu0
    %v454 = vadd.f32 0.0, %v453
    %455 = vmatmul.f32.gmra.mxu0 %v248
    %v456 = vpop.f32.mrf.mxu0
    %v457 = vadd.f32 0.0, %v456
    %458 = vmatmul.f32.gmra.mxu0 %v251
    %v459 = vpop.f32.mrf.mxu0
    %v460 = vadd.f32 0.0, %v459
    %461 = vmatmul.f32.gmra.mxu0 %v254
    %v462 = vpop.f32.mrf.mxu0
    %v463 = vadd.f32 0.0, %v462
    %464 = vmatmul.f32.gmra.mxu0 %v257
    %v465 = vpop.f32.mrf.mxu0
    %v466 = vadd.f32 0.0, %v465
    %467 = vmatmul.f32.gmra.mxu0 %v260
    %v468 = vpop.f32.mrf.mxu0
    %v469 = vadd.f32 0.0, %v468
    %470 = vmatmul.f32.gmra.mxu0 %v263
    %v471 = vpop.f32.mrf.mxu0
    %v472 = vadd.f32 0.0, %v471
    %473 = vmatmul.f32.gmra.mxu0 %v266
    %v474 = vpop.f32.mrf.mxu0
    %v475 = vadd.f32 0.0, %v474
    %476 = vmatmul.f32.gmra.mxu0 %v269
    %v477 = vpop.f32.mrf.mxu0
    %v478 = vadd.f32 0.0, %v477
    %479 = vmatmul.f32.gmra.mxu0 %v272
    %v480 = vpop.f32.mrf.mxu0
    %v481 = vadd.f32 0.0, %v480
    %482 = vmatmul.f32.gmra.mxu0 %v275
    %v483 = vpop.f32.mrf.mxu0
    %v484 = vadd.f32 0.0, %v483
    %485 = vmatmul.f32.gmra.mxu0 %v278
    %v486 = vpop.f32.mrf.mxu0
    %v487 = vadd.f32 0.0, %v486
    %488 = vmatmul.f32.gmra.mxu0 %v281
    %v489 = vpop.f32.mrf.mxu0
    %v490 = vadd.f32 0.0, %v489
    %491 = vmatmul.f32.gmra.mxu0 %v284
    %v492 = vpop.f32.mrf.mxu0
    %v493 = vadd.f32 0.0, %v492
    %494 = vmatmul.f32.gmra.mxu0 %v287
    %v495 = vpop.f32.mrf.mxu0
    %v496 = vadd.f32 0.0, %v495
    %497 = vmatmul.f32.gmra.mxu0 %v290
    %v498 = vpop.f32.mrf.mxu0
    %v499 = vadd.f32 0.0, %v498
    %500 = vmatmul.f32.gmra.mxu0 %v293
    %v501 = vpop.f32.mrf.mxu0
    %v502 = vadd.f32 0.0, %v501
    %503 = vmatmul.f32.gmra.mxu0 %v296
    %v504 = vpop.f32.mrf.mxu0
    %v505 = vadd.f32 0.0, %v504
    %506 = vmatmul.f32.gmra.mxu0 %v299
    %v507 = vpop.f32.mrf.mxu0
    %v508 = vadd.f32 0.0, %v507
    %509 = vmatmul.f32.gmra.mxu0 %v302
    %v510 = vpop.f32.mrf.mxu0
    %v511 = vadd.f32 0.0, %v510
    %512 = vmatmul.f32.gmra.mxu0 %v305
    %v513 = vpop.f32.mrf.mxu0
    %v514 = vadd.f32 0.0, %v513
    %515 = vdwg.mxu0
    %v516 = vld [vmem:[%s2] sm:$0x1]
    %v518 = vperm.slane %v516, 0
    %v520 = vmul.f32 %v325, %v518
    %v521 = vmul.f32 %v328, %v518
    %v522 = vmul.f32 %v331, %v518
    %v523 = vmul.f32 %v334, %v518
    %v524 = vmul.f32 %v337, %v518
    %v525 = vmul.f32 %v340, %v518
    %v526 = vmul.f32 %v343, %v518
    %v527 = vmul.f32 %v346, %v518
    %v528 = vmul.f32 %v349, %v518
    %v529 = vmul.f32 %v352, %v518
    %v530 = vmul.f32 %v355, %v518
    %v531 = vmul.f32 %v358, %v518
    %v532 = vmul.f32 %v361, %v518
    %v533 = vmul.f32 %v364, %v518
    %v534 = vmul.f32 %v367, %v518
    %v535 = vmul.f32 %v370, %v518
    %v536 = vmul.f32 %v373, %v518
    %v537 = vmul.f32 %v376, %v518
    %v538 = vmul.f32 %v379, %v518
    %v539 = vmul.f32 %v382, %v518
    %v540 = vmul.f32 %v385, %v518
    %v541 = vmul.f32 %v388, %v518
    %v542 = vmul.f32 %v391, %v518
    %v543 = vmul.f32 %v394, %v518
    %v544 = vmul.f32 %v397, %v518
    %v545 = vmul.f32 %v400, %v518
    %v546 = vmul.f32 %v403, %v518
    %v547 = vmul.f32 %v406, %v518
    %v548 = vmul.f32 %v409, %v518
    %v549 = vmul.f32 %v412, %v518
    %v550 = vmul.f32 %v415, %v518
    %v551 = vmul.f32 %v418, %v518
    %v552 = vmul.f32 %v421, %v518
    %v553 = vmul.f32 %v424, %v518
    %v554 = vmul.f32 %v427, %v518
    %v555 = vmul.f32 %v430, %v518
    %v556 = vmul.f32 %v433, %v518
    %v557 = vmul.f32 %v436, %v518
    %v558 = vmul.f32 %v439, %v518
    %v559 = vmul.f32 %v442, %v518
    %v560 = vmul.f32 %v445, %v518
    %v561 = vmul.f32 %v448, %v518
    %v562 = vmul.f32 %v451, %v518
    %v563 = vmul.f32 %v454, %v518
    %v564 = vmul.f32 %v457, %v518
    %v565 = vmul.f32 %v460, %v518
    %v566 = vmul.f32 %v463, %v518
    %v567 = vmul.f32 %v466, %v518
    %v568 = vmul.f32 %v469, %v518
    %v569 = vmul.f32 %v472, %v518
    %v570 = vmul.f32 %v475, %v518
    %v571 = vmul.f32 %v478, %v518
    %v572 = vmul.f32 %v481, %v518
    %v573 = vmul.f32 %v484, %v518
    %v574 = vmul.f32 %v487, %v518
    %v575 = vmul.f32 %v490, %v518
    %v576 = vmul.f32 %v493, %v518
    %v577 = vmul.f32 %v496, %v518
    %v578 = vmul.f32 %v499, %v518
    %v579 = vmul.f32 %v502, %v518
    %v580 = vmul.f32 %v505, %v518
    %v581 = vmul.f32 %v508, %v518
    %v582 = vmul.f32 %v511, %v518
    %v583 = vmul.f32 %v514, %v518
    %v584 = vld [vmem:[%s3] sm:$0x1]
    %v586 = vperm.slane %v584, 0
    %v588 = vadd.f32 %v520, %v586
    %v589 = vadd.f32 %v521, %v586
    %v590 = vadd.f32 %v522, %v586
    %v591 = vadd.f32 %v523, %v586
    %v592 = vadd.f32 %v524, %v586
    %v593 = vadd.f32 %v525, %v586
    %v594 = vadd.f32 %v526, %v586
    %v595 = vadd.f32 %v527, %v586
    %v596 = vadd.f32 %v528, %v586
    %v597 = vadd.f32 %v529, %v586
    %v598 = vadd.f32 %v530, %v586
    %v599 = vadd.f32 %v531, %v586
    %v600 = vadd.f32 %v532, %v586
    %v601 = vadd.f32 %v533, %v586
    %v602 = vadd.f32 %v534, %v586
    %v603 = vadd.f32 %v535, %v586
    %v604 = vadd.f32 %v536, %v586
    %v605 = vadd.f32 %v537, %v586
    %v606 = vadd.f32 %v538, %v586
    %v607 = vadd.f32 %v539, %v586
    %v608 = vadd.f32 %v540, %v586
    %v609 = vadd.f32 %v541, %v586
    %v610 = vadd.f32 %v542, %v586
    %v611 = vadd.f32 %v543, %v586
    %v612 = vadd.f32 %v544, %v586
    %v613 = vadd.f32 %v545, %v586
    %v614 = vadd.f32 %v546, %v586
    %v615 = vadd.f32 %v547, %v586
    %v616 = vadd.f32 %v548, %v586
    %v617 = vadd.f32 %v549, %v586
    %v618 = vadd.f32 %v550, %v586
    %v619 = vadd.f32 %v551, %v586
    %v620 = vadd.f32 %v552, %v586
    %v621 = vadd.f32 %v553, %v586
    %v622 = vadd.f32 %v554, %v586
    %v623 = vadd.f32 %v555, %v586
    %v624 = vadd.f32 %v556, %v586
    %v625 = vadd.f32 %v557, %v586
    %v626 = vadd.f32 %v558, %v586
    %v627 = vadd.f32 %v559, %v586
    %v628 = vadd.f32 %v560, %v586
    %v629 = vadd.f32 %v561, %v586
    %v630 = vadd.f32 %v562, %v586
    %v631 = vadd.f32 %v563, %v586
    %v632 = vadd.f32 %v564, %v586
    %v633 = vadd.f32 %v565, %v586
    %v634 = vadd.f32 %v566, %v586
    %v635 = vadd.f32 %v567, %v586
    %v636 = vadd.f32 %v568, %v586
    %v637 = vadd.f32 %v569, %v586
    %v638 = vadd.f32 %v570, %v586
    %v639 = vadd.f32 %v571, %v586
    %v640 = vadd.f32 %v572, %v586
    %v641 = vadd.f32 %v573, %v586
    %v642 = vadd.f32 %v574, %v586
    %v643 = vadd.f32 %v575, %v586
    %v644 = vadd.f32 %v576, %v586
    %v645 = vadd.f32 %v577, %v586
    %v646 = vadd.f32 %v578, %v586
    %v647 = vadd.f32 %v579, %v586
    %v648 = vadd.f32 %v580, %v586
    %v649 = vadd.f32 %v581, %v586
    %v650 = vadd.f32 %v582, %v586
    %v651 = vadd.f32 %v583, %v586
    %vm652 = vcmp.gt.f32.partialorder %v588, 0.0
    %vm653 = vcmp.gt.f32.partialorder %v589, 0.0
    %vm654 = vcmp.gt.f32.partialorder %v590, 0.0
    %vm655 = vcmp.gt.f32.partialorder %v591, 0.0
    %vm656 = vcmp.gt.f32.partialorder %v592, 0.0
    %vm657 = vcmp.gt.f32.partialorder %v593, 0.0
    %vm658 = vcmp.gt.f32.partialorder %v594, 0.0
    %vm659 = vcmp.gt.f32.partialorder %v595, 0.0
    %vm660 = vcmp.gt.f32.partialorder %v596, 0.0
    %vm661 = vcmp.gt.f32.partialorder %v597, 0.0
    %vm662 = vcmp.gt.f32.partialorder %v598, 0.0
    %vm663 = vcmp.gt.f32.partialorder %v599, 0.0
    %vm664 = vcmp.gt.f32.partialorder %v600, 0.0
    %vm665 = vcmp.gt.f32.partialorder %v601, 0.0
    %vm666 = vcmp.gt.f32.partialorder %v602, 0.0
    %vm667 = vcmp.gt.f32.partialorder %v603, 0.0
    %vm668 = vcmp.gt.f32.partialorder %v604, 0.0
    %vm669 = vcmp.gt.f32.partialorder %v605, 0.0
    %vm670 = vcmp.gt.f32.partialorder %v606, 0.0
    %vm671 = vcmp.gt.f32.partialorder %v607, 0.0
    %vm672 = vcmp.gt.f32.partialorder %v608, 0.0
    %vm673 = vcmp.gt.f32.partialorder %v609, 0.0
    %vm674 = vcmp.gt.f32.partialorder %v610, 0.0
    %vm675 = vcmp.gt.f32.partialorder %v611, 0.0
    %vm676 = vcmp.gt.f32.partialorder %v612, 0.0
    %vm677 = vcmp.gt.f32.partialorder %v613, 0.0
    %vm678 = vcmp.gt.f32.partialorder %v614, 0.0
    %vm679 = vcmp.gt.f32.partialorder %v615, 0.0
    %vm680 = vcmp.gt.f32.partialorder %v616, 0.0
    %vm681 = vcmp.gt.f32.partialorder %v617, 0.0
    %vm682 = vcmp.gt.f32.partialorder %v618, 0.0
    %vm683 = vcmp.gt.f32.partialorder %v619, 0.0
    %vm684 = vcmp.gt.f32.partialorder %v620, 0.0
    %vm685 = vcmp.gt.f32.partialorder %v621, 0.0
    %vm686 = vcmp.gt.f32.partialorder %v622, 0.0
    %vm687 = vcmp.gt.f32.partialorder %v623, 0.0
    %vm688 = vcmp.gt.f32.partialorder %v624, 0.0
    %vm689 = vcmp.gt.f32.partialorder %v625, 0.0
    %vm690 = vcmp.gt.f32.partialorder %v626, 0.0
    %vm691 = vcmp.gt.f32.partialorder %v627, 0.0
    %vm692 = vcmp.gt.f32.partialorder %v628, 0.0
    %vm693 = vcmp.gt.f32.partialorder %v629, 0.0
    %vm694 = vcmp.gt.f32.partialorder %v630, 0.0
    %vm695 = vcmp.gt.f32.partialorder %v631, 0.0
    %vm696 = vcmp.gt.f32.partialorder %v632, 0.0
    %vm697 = vcmp.gt.f32.partialorder %v633, 0.0
    %vm698 = vcmp.gt.f32.partialorder %v634, 0.0
    %vm699 = vcmp.gt.f32.partialorder %v635, 0.0
    %vm700 = vcmp.gt.f32.partialorder %v636, 0.0
    %vm701 = vcmp.gt.f32.partialorder %v637, 0.0
    %vm702 = vcmp.gt.f32.partialorder %v638, 0.0
    %vm703 = vcmp.gt.f32.partialorder %v639, 0.0
    %vm704 = vcmp.gt.f32.partialorder %v640, 0.0
    %vm705 = vcmp.gt.f32.partialorder %v641, 0.0
    %vm706 = vcmp.gt.f32.partialorder %v642, 0.0
    %vm707 = vcmp.gt.f32.partialorder %v643, 0.0
    %vm708 = vcmp.gt.f32.partialorder %v644, 0.0
    %vm709 = vcmp.gt.f32.partialorder %v645, 0.0
    %vm710 = vcmp.gt.f32.partialorder %v646, 0.0
    %vm711 = vcmp.gt.f32.partialorder %v647, 0.0
    %vm712 = vcmp.gt.f32.partialorder %v648, 0.0
    %vm713 = vcmp.gt.f32.partialorder %v649, 0.0
    %vm714 = vcmp.gt.f32.partialorder %v650, 0.0
    %vm715 = vcmp.gt.f32.partialorder %v651, 0.0
    %v716 = vmul.f32 %v588, 1.442695
    %v717 = vpow.pop %v716
    %v718 = vmul.f32 %v589, 1.442695
    %v719 = vpow.pop %v718
    %v720 = vmul.f32 %v590, 1.442695
    %v721 = vpow.pop %v720
    %v722 = vmul.f32 %v591, 1.442695
    %v723 = vpow.pop %v722
    %v724 = vmul.f32 %v592, 1.442695
    %v725 = vpow.pop %v724
    %v726 = vmul.f32 %v593, 1.442695
    %v727 = vpow.pop %v726
    %v728 = vmul.f32 %v594, 1.442695
    %v729 = vpow.pop %v728
    %v730 = vmul.f32 %v595, 1.442695
    %v731 = vpow.pop %v730
    %v732 = vmul.f32 %v596, 1.442695
    %v733 = vpow.pop %v732
    %v734 = vmul.f32 %v597, 1.442695
    %v735 = vpow.pop %v734
    %v736 = vmul.f32 %v598, 1.442695
    %v737 = vpow.pop %v736
    %v738 = vmul.f32 %v599, 1.442695
    %v739 = vpow.pop %v738
    %v740 = vmul.f32 %v600, 1.442695
    %v741 = vpow.pop %v740
    %v742 = vmul.f32 %v601, 1.442695
    %v743 = vpow.pop %v742
    %v744 = vmul.f32 %v602, 1.442695
    %v745 = vpow.pop %v744
    %v746 = vmul.f32 %v603, 1.442695
    %v747 = vpow.pop %v746
    %v748 = vmul.f32 %v604, 1.442695
    %v749 = vpow.pop %v748
    %v750 = vmul.f32 %v605, 1.442695
    %v751 = vpow.pop %v750
    %v752 = vmul.f32 %v606, 1.442695
    %v753 = vpow.pop %v752
    %v754 = vmul.f32 %v607, 1.442695
    %v755 = vpow.pop %v754
    %v756 = vmul.f32 %v608, 1.442695
    %v757 = vpow.pop %v756
    %v758 = vmul.f32 %v609, 1.442695
    %v759 = vpow.pop %v758
    %v760 = vmul.f32 %v610, 1.442695
    %v761 = vpow.pop %v760
    %v762 = vmul.f32 %v611, 1.442695
    %v763 = vpow.pop %v762
    %v764 = vmul.f32 %v612, 1.442695
    %v765 = vpow.pop %v764
    %v766 = vmul.f32 %v613, 1.442695
    %v767 = vpow.pop %v766
    %v768 = vmul.f32 %v614, 1.442695
    %v769 = vpow.pop %v768
    %v770 = vmul.f32 %v615, 1.442695
    %v771 = vpow.pop %v770
    %v772 = vmul.f32 %v616, 1.442695
    %v773 = vpow.pop %v772
    %v774 = vmul.f32 %v617, 1.442695
    %v775 = vpow.pop %v774
    %v776 = vmul.f32 %v618, 1.442695
    %v777 = vpow.pop %v776
    %v778 = vmul.f32 %v619, 1.442695
    %v779 = vpow.pop %v778
    %v780 = vmul.f32 %v620, 1.442695
    %v781 = vpow.pop %v780
    %v782 = vmul.f32 %v621, 1.442695
    %v783 = vpow.pop %v782
    %v784 = vmul.f32 %v622, 1.442695
    %v785 = vpow.pop %v784
    %v786 = vmul.f32 %v623, 1.442695
    %v787 = vpow.pop %v786
    %v788 = vmul.f32 %v624, 1.442695
    %v789 = vpow.pop %v788
    %v790 = vmul.f32 %v625, 1.442695
    %v791 = vpow.pop %v790
    %v792 = vmul.f32 %v626, 1.442695
    %v793 = vpow.pop %v792
    %v794 = vmul.f32 %v627, 1.442695
    %v795 = vpow.pop %v794
    %v796 = vmul.f32 %v628, 1.442695
    %v797 = vpow.pop %v796
    %v798 = vmul.f32 %v629, 1.442695
    %v799 = vpow.pop %v798
    %v800 = vmul.f32 %v630, 1.442695
    %v801 = vpow.pop %v800
    %v802 = vmul.f32 %v631, 1.442695
    %v803 = vpow.pop %v802
    %v804 = vmul.f32 %v632, 1.442695
    %v805 = vpow.pop %v804
    %v806 = vmul.f32 %v633, 1.442695
    %v807 = vpow.pop %v806
    %v808 = vmul.f32 %v634, 1.442695
    %v809 = vpow.pop %v808
    %v810 = vmul.f32 %v635, 1.442695
    %v811 = vpow.pop %v810
    %v812 = vmul.f32 %v636, 1.442695
    %v813 = vpow.pop %v812
    %v814 = vmul.f32 %v637, 1.442695
    %v815 = vpow.pop %v814
    %v816 = vmul.f32 %v638, 1.442695
    %v817 = vpow.pop %v816
    %v818 = vmul.f32 %v639, 1.442695
    %v819 = vpow.pop %v818
    %v820 = vmul.f32 %v640, 1.442695
    %v821 = vpow.pop %v820
    %v822 = vmul.f32 %v641, 1.442695
    %v823 = vpow.pop %v822
    %v824 = vmul.f32 %v642, 1.442695
    %v825 = vpow.pop %v824
    %v826 = vmul.f32 %v643, 1.442695
    %v827 = vpow.pop %v826
    %v828 = vmul.f32 %v644, 1.442695
    %v829 = vpow.pop %v828
    %v830 = vmul.f32 %v645, 1.442695
    %v831 = vpow.pop %v830
    %v832 = vmul.f32 %v646, 1.442695
    %v833 = vpow.pop %v832
    %v834 = vmul.f32 %v647, 1.442695
    %v835 = vpow.pop %v834
    %v836 = vmul.f32 %v648, 1.442695
    %v837 = vpow.pop %v836
    %v838 = vmul.f32 %v649, 1.442695
    %v839 = vpow.pop %v838
    %v840 = vmul.f32 %v650, 1.442695
    %v841 = vpow.pop %v840
    %v842 = vmul.f32 %v651, 1.442695
    %v843 = vpow.pop %v842
    %v844 = vsub.f32 %v717, 1.0
    %v845 = vsub.f32 %v719, 1.0
    %v846 = vsub.f32 %v721, 1.0
    %v847 = vsub.f32 %v723, 1.0
    %v848 = vsub.f32 %v725, 1.0
    %v849 = vsub.f32 %v727, 1.0
    %v850 = vsub.f32 %v729, 1.0
    %v851 = vsub.f32 %v731, 1.0
    %v852 = vsub.f32 %v733, 1.0
    %v853 = vsub.f32 %v735, 1.0
    %v854 = vsub.f32 %v737, 1.0
    %v855 = vsub.f32 %v739, 1.0
    %v856 = vsub.f32 %v741, 1.0
    %v857 = vsub.f32 %v743, 1.0
    %v858 = vsub.f32 %v745, 1.0
    %v859 = vsub.f32 %v747, 1.0
    %v860 = vsub.f32 %v749, 1.0
    %v861 = vsub.f32 %v751, 1.0
    %v862 = vsub.f32 %v753, 1.0
    %v863 = vsub.f32 %v755, 1.0
    %v864 = vsub.f32 %v757, 1.0
    %v865 = vsub.f32 %v759, 1.0
    %v866 = vsub.f32 %v761, 1.0
    %v867 = vsub.f32 %v763, 1.0
    %v868 = vsub.f32 %v765, 1.0
    %v869 = vsub.f32 %v767, 1.0
    %v870 = vsub.f32 %v769, 1.0
    %v871 = vsub.f32 %v771, 1.0
    %v872 = vsub.f32 %v773, 1.0
    %v873 = vsub.f32 %v775, 1.0
    %v874 = vsub.f32 %v777, 1.0
    %v875 = vsub.f32 %v779, 1.0
    %v876 = vsub.f32 %v781, 1.0
    %v877 = vsub.f32 %v783, 1.0
    %v878 = vsub.f32 %v785, 1.0
    %v879 = vsub.f32 %v787, 1.0
    %v880 = vsub.f32 %v789, 1.0
    %v881 = vsub.f32 %v791, 1.0
    %v882 = vsub.f32 %v793, 1.0
    %v883 = vsub.f32 %v795, 1.0
    %v884 = vsub.f32 %v797, 1.0
    %v885 = vsub.f32 %v799, 1.0
    %v886 = vsub.f32 %v801, 1.0
    %v887 = vsub.f32 %v803, 1.0
    %v888 = vsub.f32 %v805, 1.0
    %v889 = vsub.f32 %v807, 1.0
    %v890 = vsub.f32 %v809, 1.0
    %v891 = vsub.f32 %v811, 1.0
    %v892 = vsub.f32 %v813, 1.0
    %v893 = vsub.f32 %v815, 1.0
    %v894 = vsub.f32 %v817, 1.0
    %v895 = vsub.f32 %v819, 1.0
    %v896 = vsub.f32 %v821, 1.0
    %v897 = vsub.f32 %v823, 1.0
    %v898 = vsub.f32 %v825, 1.0
    %v899 = vsub.f32 %v827, 1.0
    %v900 = vsub.f32 %v829, 1.0
    %v901 = vsub.f32 %v831, 1.0
    %v902 = vsub.f32 %v833, 1.0
    %v903 = vsub.f32 %v835, 1.0
    %v904 = vsub.f32 %v837, 1.0
    %v905 = vsub.f32 %v839, 1.0
    %v906 = vsub.f32 %v841, 1.0
    %v907 = vsub.f32 %v843, 1.0
    %v908 = vsel %vm652, %v588, %v844
    %v909 = vsel %vm653, %v589, %v845
    %v910 = vsel %vm654, %v590, %v846
    %v911 = vsel %vm655, %v591, %v847
    %v912 = vsel %vm656, %v592, %v848
    %v913 = vsel %vm657, %v593, %v849
    %v914 = vsel %vm658, %v594, %v850
    %v915 = vsel %vm659, %v595, %v851
    %v916 = vsel %vm660, %v596, %v852
    %v917 = vsel %vm661, %v597, %v853
    %v918 = vsel %vm662, %v598, %v854
    %v919 = vsel %vm663, %v599, %v855
    %v920 = vsel %vm664, %v600, %v856
    %v921 = vsel %vm665, %v601, %v857
    %v922 = vsel %vm666, %v602, %v858
    %v923 = vsel %vm667, %v603, %v859
    %v924 = vsel %vm668, %v604, %v860
    %v925 = vsel %vm669, %v605, %v861
    %v926 = vsel %vm670, %v606, %v862
    %v927 = vsel %vm671, %v607, %v863
    %v928 = vsel %vm672, %v608, %v864
    %v929 = vsel %vm673, %v609, %v865
    %v930 = vsel %vm674, %v610, %v866
    %v931 = vsel %vm675, %v611, %v867
    %v932 = vsel %vm676, %v612, %v868
    %v933 = vsel %vm677, %v613, %v869
    %v934 = vsel %vm678, %v614, %v870
    %v935 = vsel %vm679, %v615, %v871
    %v936 = vsel %vm680, %v616, %v872
    %v937 = vsel %vm681, %v617, %v873
    %v938 = vsel %vm682, %v618, %v874
    %v939 = vsel %vm683, %v619, %v875
    %v940 = vsel %vm684, %v620, %v876
    %v941 = vsel %vm685, %v621, %v877
    %v942 = vsel %vm686, %v622, %v878
    %v943 = vsel %vm687, %v623, %v879
    %v944 = vsel %vm688, %v624, %v880
    %v945 = vsel %vm689, %v625, %v881
    %v946 = vsel %vm690, %v626, %v882
    %v947 = vsel %vm691, %v627, %v883
    %v948 = vsel %vm692, %v628, %v884
    %v949 = vsel %vm693, %v629, %v885
    %v950 = vsel %vm694, %v630, %v886
    %v951 = vsel %vm695, %v631, %v887
    %v952 = vsel %vm696, %v632, %v888
    %v953 = vsel %vm697, %v633, %v889
    %v954 = vsel %vm698, %v634, %v890
    %v955 = vsel %vm699, %v635, %v891
    %v956 = vsel %vm700, %v636, %v892
    %v957 = vsel %vm701, %v637, %v893
    %v958 = vsel %vm702, %v638, %v894
    %v959 = vsel %vm703, %v639, %v895
    %v960 = vsel %vm704, %v640, %v896
    %v961 = vsel %vm705, %v641, %v897
    %v962 = vsel %vm706, %v642, %v898
    %v963 = vsel %vm707, %v643, %v899
    %v964 = vsel %vm708, %v644, %v900
    %v965 = vsel %vm709, %v645, %v901
    %v966 = vsel %vm710, %v646, %v902
    %v967 = vsel %vm711, %v647, %v903
    %v968 = vsel %vm712, %v648, %v904
    %v969 = vsel %vm713, %v649, %v905
    %v970 = vsel %vm714, %v650, %v906
    %v971 = vsel %vm715, %v651, %v907
    %v972 = vld [vmem:[%s4] sm:$0xff]
    %v973 = vld [vmem:[%s4 + $0x8] sm:$0xff]
    %v974 = vld [vmem:[%s4 + $0x10] sm:$0xff]
    %v975 = vld [vmem:[%s4 + $0x18] sm:$0xff]
    %v976 = vld [vmem:[%s4 + $0x20] sm:$0xff]
    %v977 = vld [vmem:[%s4 + $0x28] sm:$0xff]
    %v978 = vld [vmem:[%s4 + $0x30] sm:$0xff]
    %v979 = vld [vmem:[%s4 + $0x38] sm:$0xff]
    %vm980 = vcmask 261120
    %v982 = vsel %vm980, %v916, 0
    %v985 = vsel %vm980, %v917, 0
    %v988 = vsel %vm980, %v918, 0
    %v991 = vsel %vm980, %v919, 0
    %v994 = vsel %vm980, %v920, 0
    %v997 = vsel %vm980, %v921, 0
    %v1000 = vsel %vm980, %v922, 0
    %v1003 = vsel %vm980, %v923, 0
    %1005 = vmatpush.msra.mxu0 0.0
    %1006 = vmatpush.msra.mxu0 0.0
    %1007 = vmatpush.msra.mxu0 0.0
    %1008 = vmatpush.msra.mxu0 0.0
    %1009 = vmatpush.msra.mxu0 0.0
    %1010 = vmatpush.msra.mxu0 0.0
    %1011 = vmatpush.msra.mxu0 0.0
    %1012 = vmatpush.msra.mxu0 0.0
    %1013 = vmatpush.msra.mxu0 0.0
    %1014 = vmatpush.msra.mxu0 0.0
    %1015 = vmatpush.msra.mxu0 0.0
    %1016 = vmatpush.msra.mxu0 0.0
    %1017 = vmatpush.msra.mxu0 %v979
    %1018 = vmatpush.msra.mxu0 %v978
    %1019 = vmatpush.msra.mxu0 %v977
    %1020 = vmatpush.msra.mxu0 %v976
    %1021 = vmatmul.f32.gmra.mxu0 %v982
    %v1022 = vpop.f32.mrf.mxu0
    %v1023 = vadd.f32 0.0, %v1022
    %1024 = vmatmul.f32.gmra.mxu0 %v985
    %v1025 = vpop.f32.mrf.mxu0
    %v1026 = vadd.f32 0.0, %v1025
    %1027 = vmatmul.f32.gmra.mxu0 %v988
    %v1028 = vpop.f32.mrf.mxu0
    %v1029 = vadd.f32 0.0, %v1028
    %1030 = vmatmul.f32.gmra.mxu0 %v991
    %v1031 = vpop.f32.mrf.mxu0
    %v1032 = vadd.f32 0.0, %v1031
    %1033 = vmatmul.f32.gmra.mxu0 %v994
    %v1034 = vpop.f32.mrf.mxu0
    %v1035 = vadd.f32 0.0, %v1034
    %1036 = vmatmul.f32.gmra.mxu0 %v997
    %v1037 = vpop.f32.mrf.mxu0
    %v1038 = vadd.f32 0.0, %v1037
    %1039 = vmatmul.f32.gmra.mxu0 %v1000
    %v1040 = vpop.f32.mrf.mxu0
    %v1041 = vadd.f32 0.0, %v1040
    %1042 = vmatmul.f32.gmra.mxu0 %v1003
    %v1043 = vpop.f32.mrf.mxu0
    %v1044 = vadd.f32 0.0, %v1043
    %1045 = vdwg.mxu0
    %v1047 = vsel %vm980, %v908, 0
    %v1050 = vsel %vm980, %v909, 0
    %v1053 = vsel %vm980, %v910, 0
    %v1056 = vsel %vm980, %v911, 0
    %v1059 = vsel %vm980, %v912, 0
    %v1062 = vsel %vm980, %v913, 0
    %v1065 = vsel %vm980, %v914, 0
    %v1068 = vsel %vm980, %v915, 0
    %1070 = vmatpush.msra.mxu0 0.0
    %1071 = vmatpush.msra.mxu0 0.0
    %1072 = vmatpush.msra.mxu0 0.0
    %1073 = vmatpush.msra.mxu0 0.0
    %1074 = vmatpush.msra.mxu0 0.0
    %1075 = vmatpush.msra.mxu0 0.0
    %1076 = vmatpush.msra.mxu0 0.0
    %1077 = vmatpush.msra.mxu0 0.0
    %1078 = vmatpush.msra.mxu0 0.0
    %1079 = vmatpush.msra.mxu0 0.0
    %1080 = vmatpush.msra.mxu0 0.0
    %1081 = vmatpush.msra.mxu0 0.0
    %1082 = vmatpush.msra.mxu0 %v975
    %1083 = vmatpush.msra.mxu0 %v974
    %1084 = vmatpush.msra.mxu0 %v973
    %1085 = vmatpush.msra.mxu0 %v972
    %1086 = vmatmul.f32.gmra.mxu0 %v1047
    %v1087 = vpop.f32.mrf.mxu0
    %v1088 = vadd.f32 %v1023, %v1087
    %1089 = vmatmul.f32.gmra.mxu0 %v1050
    %v1090 = vpop.f32.mrf.mxu0
    %v1091 = vadd.f32 %v1026, %v1090
    %1092 = vmatmul.f32.gmra.mxu0 %v1053
    %v1093 = vpop.f32.mrf.mxu0
    %v1094 = vadd.f32 %v1029, %v1093
    %1095 = vmatmul.f32.gmra.mxu0 %v1056
    %v1096 = vpop.f32.mrf.mxu0
    %v1097 = vadd.f32 %v1032, %v1096
    %1098 = vmatmul.f32.gmra.mxu0 %v1059
    %v1099 = vpop.f32.mrf.mxu0
    %v1100 = vadd.f32 %v1035, %v1099
    %1101 = vmatmul.f32.gmra.mxu0 %v1062
    %v1102 = vpop.f32.mrf.mxu0
    %v1103 = vadd.f32 %v1038, %v1102
    %1104 = vmatmul.f32.gmra.mxu0 %v1065
    %v1105 = vpop.f32.mrf.mxu0
    %v1106 = vadd.f32 %v1041, %v1105
    %1107 = vmatmul.f32.gmra.mxu0 %v1068
    %v1108 = vpop.f32.mrf.mxu0
    %v1109 = vadd.f32 %v1044, %v1108
    %1110 = vdwg.mxu0
    %v1111 = vld [vmem:[%s4 + $0x40] sm:$0xff]
    %v1112 = vld [vmem:[%s4 + $0x48] sm:$0xff]
    %v1113 = vld [vmem:[%s4 + $0x50] sm:$0xff]
    %v1114 = vld [vmem:[%s4 + $0x58] sm:$0xff]
    %v1116 = vsel %vm980, %v924, 0
    %v1119 = vsel %vm980, %v925, 0
    %v1122 = vsel %vm980, %v926, 0
    %v1125 = vsel %vm980, %v927, 0
    %v1128 = vsel %vm980, %v928, 0
    %v1131 = vsel %vm980, %v929, 0
    %v1134 = vsel %vm980, %v930, 0
    %v1137 = vsel %vm980, %v931, 0
    %1139 = vmatpush.msra.mxu0 0.0
    %1140 = vmatpush.msra.mxu0 0.0
    %1141 = vmatpush.msra.mxu0 0.0
    %1142 = vmatpush.msra.mxu0 0.0
    %1143 = vmatpush.msra.mxu0 0.0
    %1144 = vmatpush.msra.mxu0 0.0
    %1145 = vmatpush.msra.mxu0 0.0
    %1146 = vmatpush.msra.mxu0 0.0
    %1147 = vmatpush.msra.mxu0 0.0
    %1148 = vmatpush.msra.mxu0 0.0
    %1149 = vmatpush.msra.mxu0 0.0
    %1150 = vmatpush.msra.mxu0 0.0
    %1151 = vmatpush.msra.mxu0 %v1114
    %1152 = vmatpush.msra.mxu0 %v1113
    %1153 = vmatpush.msra.mxu0 %v1112
    %1154 = vmatpush.msra.mxu0 %v1111
    %1155 = vmatmul.f32.gmra.mxu0 %v1116
    %v1156 = vpop.f32.mrf.mxu0
    %v1157 = vadd.f32 0.0, %v1156
    %1158 = vmatmul.f32.gmra.mxu0 %v1119
    %v1159 = vpop.f32.mrf.mxu0
    %v1160 = vadd.f32 0.0, %v1159
    %1161 = vmatmul.f32.gmra.mxu0 %v1122
    %v1162 = vpop.f32.mrf.mxu0
    %v1163 = vadd.f32 0.0, %v1162
    %1164 = vmatmul.f32.gmra.mxu0 %v1125
    %v1165 = vpop.f32.mrf.mxu0
    %v1166 = vadd.f32 0.0, %v1165
    %1167 = vmatmul.f32.gmra.mxu0 %v1128
    %v1168 = vpop.f32.mrf.mxu0
    %v1169 = vadd.f32 0.0, %v1168
    %1170 = vmatmul.f32.gmra.mxu0 %v1131
    %v1171 = vpop.f32.mrf.mxu0
    %v1172 = vadd.f32 0.0, %v1171
    %1173 = vmatmul.f32.gmra.mxu0 %v1134
    %v1174 = vpop.f32.mrf.mxu0
    %v1175 = vadd.f32 0.0, %v1174
    %1176 = vmatmul.f32.gmra.mxu0 %v1137
    %v1177 = vpop.f32.mrf.mxu0
    %v1178 = vadd.f32 0.0, %v1177
    %1179 = vdwg.mxu0
    %v1180 = vadd.f32 %v1088, %v1157
    %v1181 = vadd.f32 %v1091, %v1160
    %v1182 = vadd.f32 %v1094, %v1163
    %v1183 = vadd.f32 %v1097, %v1166
    %v1184 = vadd.f32 %v1100, %v1169
    %v1185 = vadd.f32 %v1103, %v1172
    %v1186 = vadd.f32 %v1106, %v1175
    %v1187 = vadd.f32 %v1109, %v1178
    %v1188 = vld [vmem:[%s4 + $0x60] sm:$0xff]
    %v1189 = vld [vmem:[%s4 + $0x68] sm:$0xff]
    %v1190 = vld [vmem:[%s4 + $0x70] sm:$0xff]
    %v1191 = vld [vmem:[%s4 + $0x78] sm:$0xff]
    %v1193 = vsel %vm980, %v932, 0
    %v1196 = vsel %vm980, %v933, 0
    %v1199 = vsel %vm980, %v934, 0
    %v1202 = vsel %vm980, %v935, 0
    %v1205 = vsel %vm980, %v936, 0
    %v1208 = vsel %vm980, %v937, 0
    %v1211 = vsel %vm980, %v938, 0
    %v1214 = vsel %vm980, %v939, 0
    %1216 = vmatpush.msra.mxu0 0.0
    %1217 = vmatpush.msra.mxu0 0.0
    %1218 = vmatpush.msra.mxu0 0.0
    %1219 = vmatpush.msra.mxu0 0.0
    %1220 = vmatpush.msra.mxu0 0.0
    %1221 = vmatpush.msra.mxu0 0.0
    %1222 = vmatpush.msra.mxu0 0.0
    %1223 = vmatpush.msra.mxu0 0.0
    %1224 = vmatpush.msra.mxu0 0.0
    %1225 = vmatpush.msra.mxu0 0.0
    %1226 = vmatpush.msra.mxu0 0.0
    %1227 = vmatpush.msra.mxu0 0.0
    %1228 = vmatpush.msra.mxu0 %v1191
    %1229 = vmatpush.msra.mxu0 %v1190
    %1230 = vmatpush.msra.mxu0 %v1189
    %1231 = vmatpush.msra.mxu0 %v1188
    %1232 = vmatmul.f32.gmra.mxu0 %v1193
    %v1233 = vpop.f32.mrf.mxu0
    %v1234 = vadd.f32 0.0, %v1233
    %1235 = vmatmul.f32.gmra.mxu0 %v1196
    %v1236 = vpop.f32.mrf.mxu0
    %v1237 = vadd.f32 0.0, %v1236
    %1238 = vmatmul.f32.gmra.mxu0 %v1199
    %v1239 = vpop.f32.mrf.mxu0
    %v1240 = vadd.f32 0.0, %v1239
    %1241 = vmatmul.f32.gmra.mxu0 %v1202
    %v1242 = vpop.f32.mrf.mxu0
    %v1243 = vadd.f32 0.0, %v1242
    %1244 = vmatmul.f32.gmra.mxu0 %v1205
    %v1245 = vpop.f32.mrf.mxu0
    %v1246 = vadd.f32 0.0, %v1245
    %1247 = vmatmul.f32.gmra.mxu0 %v1208
    %v1248 = vpop.f32.mrf.mxu0
    %v1249 = vadd.f32 0.0, %v1248
    %1250 = vmatmul.f32.gmra.mxu0 %v1211
    %v1251 = vpop.f32.mrf.mxu0
    %v1252 = vadd.f32 0.0, %v1251
    %1253 = vmatmul.f32.gmra.mxu0 %v1214
    %v1254 = vpop.f32.mrf.mxu0
    %v1255 = vadd.f32 0.0, %v1254
    %1256 = vdwg.mxu0
    %v1257 = vadd.f32 %v1180, %v1234
    %v1258 = vadd.f32 %v1181, %v1237
    %v1259 = vadd.f32 %v1182, %v1240
    %v1260 = vadd.f32 %v1183, %v1243
    %v1261 = vadd.f32 %v1184, %v1246
    %v1262 = vadd.f32 %v1185, %v1249
    %v1263 = vadd.f32 %v1186, %v1252
    %v1264 = vadd.f32 %v1187, %v1255
    %v1265 = vld [vmem:[%s5] sm:$0x1]
    %v1267 = vperm.slane %v1265, 0
    %v1269 = vmul.f32 %v1257, %v1267
    %v1270 = vmul.f32 %v1258, %v1267
    %v1271 = vmul.f32 %v1259, %v1267
    %v1272 = vmul.f32 %v1260, %v1267
    %v1273 = vmul.f32 %v1261, %v1267
    %v1274 = vmul.f32 %v1262, %v1267
    %v1275 = vmul.f32 %v1263, %v1267
    %v1276 = vmul.f32 %v1264, %v1267
    %v1277 = vld [vmem:[%s6] sm:$0x1]
    %v1279 = vperm.slane %v1277, 0
    %v1281 = vadd.f32 %v1269, %v1279
    %v1282 = vadd.f32 %v1270, %v1279
    %v1283 = vadd.f32 %v1271, %v1279
    %v1284 = vadd.f32 %v1272, %v1279
    %v1285 = vadd.f32 %v1273, %v1279
    %v1286 = vadd.f32 %v1274, %v1279
    %v1287 = vadd.f32 %v1275, %v1279
    %v1288 = vadd.f32 %v1276, %v1279
    %vm1289 = vcmp.gt.f32.partialorder %v1281, 0.0
    %vm1290 = vcmp.gt.f32.partialorder %v1282, 0.0
    %vm1291 = vcmp.gt.f32.partialorder %v1283, 0.0
    %vm1292 = vcmp.gt.f32.partialorder %v1284, 0.0
    %vm1293 = vcmp.gt.f32.partialorder %v1285, 0.0
    %vm1294 = vcmp.gt.f32.partialorder %v1286, 0.0
    %vm1295 = vcmp.gt.f32.partialorder %v1287, 0.0
    %vm1296 = vcmp.gt.f32.partialorder %v1288, 0.0
    %v1297 = vmul.f32 %v1281, 1.442695
    %v1298 = vpow.pop %v1297
    %v1299 = vmul.f32 %v1282, 1.442695
    %v1300 = vpow.pop %v1299
    %v1301 = vmul.f32 %v1283, 1.442695
    %v1302 = vpow.pop %v1301
    %v1303 = vmul.f32 %v1284, 1.442695
    %v1304 = vpow.pop %v1303
    %v1305 = vmul.f32 %v1285, 1.442695
    %v1306 = vpow.pop %v1305
    %v1307 = vmul.f32 %v1286, 1.442695
    %v1308 = vpow.pop %v1307
    %v1309 = vmul.f32 %v1287, 1.442695
    %v1310 = vpow.pop %v1309
    %v1311 = vmul.f32 %v1288, 1.442695
    %v1312 = vpow.pop %v1311
    %v1313 = vsub.f32 %v1298, 1.0
    %v1314 = vsub.f32 %v1300, 1.0
    %v1315 = vsub.f32 %v1302, 1.0
    %v1316 = vsub.f32 %v1304, 1.0
    %v1317 = vsub.f32 %v1306, 1.0
    %v1318 = vsub.f32 %v1308, 1.0
    %v1319 = vsub.f32 %v1310, 1.0
    %v1320 = vsub.f32 %v1312, 1.0
    %v1321 = vsel %vm1289, %v1281, %v1313
    %v1322 = vsel %vm1290, %v1282, %v1314
    %v1323 = vsel %vm1291, %v1283, %v1315
    %v1324 = vsel %vm1292, %v1284, %v1316
    %v1325 = vsel %vm1293, %v1285, %v1317
    %v1326 = vsel %vm1294, %v1286, %v1318
    %v1327 = vsel %vm1295, %v1287, %v1319
    %v1328 = vsel %vm1296, %v1288, %v1320
    %1329 = vst.msk [vmem:[%s7] sm:$0xff] %vm114, %v1321
    %1330 = vst.msk [vmem:[%s7 + $0x8] sm:$0xff] %vm114, %v1322
    %1331 = vst.msk [vmem:[%s7 + $0x10] sm:$0xff] %vm114, %v1323
    %1332 = vst.msk [vmem:[%s7 + $0x18] sm:$0xff] %vm114, %v1324
    %1333 = vst.msk [vmem:[%s7 + $0x20] sm:$0xff] %vm114, %v1325
    %1334 = vst.msk [vmem:[%s7 + $0x28] sm:$0xff] %vm114, %v1326
    %1335 = vst.msk [vmem:[%s7 + $0x30] sm:$0xff] %vm114, %v1327
    %1336 = vst.msk [vmem:[%s7 + $0x38] sm:$0xff] %vm114, %v1328
    %v1337 = vld [vmem:[%s4] sm:$0xff]
    %v1338 = vld [vmem:[%s4 + $0x8] sm:$0xff]
    %v1339 = vld [vmem:[%s4 + $0x10] sm:$0xff]
    %v1340 = vld [vmem:[%s4 + $0x18] sm:$0xff]
    %v1341 = vld [vmem:[%s4 + $0x20] sm:$0xff]
    %v1342 = vld [vmem:[%s4 + $0x28] sm:$0xff]
    %v1343 = vld [vmem:[%s4 + $0x30] sm:$0xff]
    %v1344 = vld [vmem:[%s4 + $0x38] sm:$0xff]
    %v1346 = vsel %vm980, %v948, 0
    %v1349 = vsel %vm980, %v949, 0
    %v1352 = vsel %vm980, %v950, 0
    %v1355 = vsel %vm980, %v951, 0
    %v1358 = vsel %vm980, %v952, 0
    %v1361 = vsel %vm980, %v953, 0
    %v1364 = vsel %vm980, %v954, 0
    %v1367 = vsel %vm980, %v955, 0
    %1369 = vmatpush.msra.mxu0 0.0
    %1370 = vmatpush.msra.mxu0 0.0
    %1371 = vmatpush.msra.mxu0 0.0
    %1372 = vmatpush.msra.mxu0 0.0
    %1373 = vmatpush.msra.mxu0 0.0
    %1374 = vmatpush.msra.mxu0 0.0
    %1375 = vmatpush.msra.mxu0 0.0
    %1376 = vmatpush.msra.mxu0 0.0
    %1377 = vmatpush.msra.mxu0 0.0
    %1378 = vmatpush.msra.mxu0 0.0
    %1379 = vmatpush.msra.mxu0 0.0
    %1380 = vmatpush.msra.mxu0 0.0
    %1381 = vmatpush.msra.mxu0 %v1344
    %1382 = vmatpush.msra.mxu0 %v1343
    %1383 = vmatpush.msra.mxu0 %v1342
    %1384 = vmatpush.msra.mxu0 %v1341
    %1385 = vmatmul.f32.gmra.mxu0 %v1346
    %v1386 = vpop.f32.mrf.mxu0
    %v1387 = vadd.f32 0.0, %v1386
    %1388 = vmatmul.f32.gmra.mxu0 %v1349
    %v1389 = vpop.f32.mrf.mxu0
    %v1390 = vadd.f32 0.0, %v1389
    %1391 = vmatmul.f32.gmra.mxu0 %v1352
    %v1392 = vpop.f32.mrf.mxu0
    %v1393 = vadd.f32 0.0, %v1392
    %1394 = vmatmul.f32.gmra.mxu0 %v1355
    %v1395 = vpop.f32.mrf.mxu0
    %v1396 = vadd.f32 0.0, %v1395
    %1397 = vmatmul.f32.gmra.mxu0 %v1358
    %v1398 = vpop.f32.mrf.mxu0
    %v1399 = vadd.f32 0.0, %v1398
    %1400 = vmatmul.f32.gmra.mxu0 %v1361
    %v1401 = vpop.f32.mrf.mxu0
    %v1402 = vadd.f32 0.0, %v1401
    %1403 = vmatmul.f32.gmra.mxu0 %v1364
    %v1404 = vpop.f32.mrf.mxu0
    %v1405 = vadd.f32 0.0, %v1404
    %1406 = vmatmul.f32.gmra.mxu0 %v1367
    %v1407 = vpop.f32.mrf.mxu0
    %v1408 = vadd.f32 0.0, %v1407
    %1409 = vdwg.mxu0
    %v1411 = vsel %vm980, %v940, 0
    %v1414 = vsel %vm980, %v941, 0
    %v1417 = vsel %vm980, %v942, 0
    %v1420 = vsel %vm980, %v943, 0
    %v1423 = vsel %vm980, %v944, 0
    %v1426 = vsel %vm980, %v945, 0
    %v1429 = vsel %vm980, %v946, 0
    %v1432 = vsel %vm980, %v947, 0
    %1434 = vmatpush.msra.mxu0 0.0
    %1435 = vmatpush.msra.mxu0 0.0
    %1436 = vmatpush.msra.mxu0 0.0
    %1437 = vmatpush.msra.mxu0 0.0
    %1438 = vmatpush.msra.mxu0 0.0
    %1439 = vmatpush.msra.mxu0 0.0
    %1440 = vmatpush.msra.mxu0 0.0
    %1441 = vmatpush.msra.mxu0 0.0
    %1442 = vmatpush.msra.mxu0 0.0
    %1443 = vmatpush.msra.mxu0 0.0
    %1444 = vmatpush.msra.mxu0 0.0
    %1445 = vmatpush.msra.mxu0 0.0
    %1446 = vmatpush.msra.mxu0 %v1340
    %1447 = vmatpush.msra.mxu0 %v1339
    %1448 = vmatpush.msra.mxu0 %v1338
    %1449 = vmatpush.msra.mxu0 %v1337
    %1450 = vmatmul.f32.gmra.mxu0 %v1411
    %v1451 = vpop.f32.mrf.mxu0
    %v1452 = vadd.f32 %v1387, %v1451
    %1453 = vmatmul.f32.gmra.mxu0 %v1414
    %v1454 = vpop.f32.mrf.mxu0
    %v1455 = vadd.f32 %v1390, %v1454
    %1456 = vmatmul.f32.gmra.mxu0 %v1417
    %v1457 = vpop.f32.mrf.mxu0
    %v1458 = vadd.f32 %v1393, %v1457
    %1459 = vmatmul.f32.gmra.mxu0 %v1420
    %v1460 = vpop.f32.mrf.mxu0
    %v1461 = vadd.f32 %v1396, %v1460
    %1462 = vmatmul.f32.gmra.mxu0 %v1423
    %v1463 = vpop.f32.mrf.mxu0
    %v1464 = vadd.f32 %v1399, %v1463
    %1465 = vmatmul.f32.gmra.mxu0 %v1426
    %v1466 = vpop.f32.mrf.mxu0
    %v1467 = vadd.f32 %v1402, %v1466
    %1468 = vmatmul.f32.gmra.mxu0 %v1429
    %v1469 = vpop.f32.mrf.mxu0
    %v1470 = vadd.f32 %v1405, %v1469
    %1471 = vmatmul.f32.gmra.mxu0 %v1432
    %v1472 = vpop.f32.mrf.mxu0
    %v1473 = vadd.f32 %v1408, %v1472
    %1474 = vdwg.mxu0
    %v1475 = vld [vmem:[%s4 + $0x40] sm:$0xff]
    %v1476 = vld [vmem:[%s4 + $0x48] sm:$0xff]
    %v1477 = vld [vmem:[%s4 + $0x50] sm:$0xff]
    %v1478 = vld [vmem:[%s4 + $0x58] sm:$0xff]
    %v1480 = vsel %vm980, %v956, 0
    %v1483 = vsel %vm980, %v957, 0
    %v1486 = vsel %vm980, %v958, 0
    %v1489 = vsel %vm980, %v959, 0
    %v1492 = vsel %vm980, %v960, 0
    %v1495 = vsel %vm980, %v961, 0
    %v1498 = vsel %vm980, %v962, 0
    %v1501 = vsel %vm980, %v963, 0
    %1503 = vmatpush.msra.mxu0 0.0
    %1504 = vmatpush.msra.mxu0 0.0
    %1505 = vmatpush.msra.mxu0 0.0
    %1506 = vmatpush.msra.mxu0 0.0
    %1507 = vmatpush.msra.mxu0 0.0
    %1508 = vmatpush.msra.mxu0 0.0
    %1509 = vmatpush.msra.mxu0 0.0
    %1510 = vmatpush.msra.mxu0 0.0
    %1511 = vmatpush.msra.mxu0 0.0
    %1512 = vmatpush.msra.mxu0 0.0
    %1513 = vmatpush.msra.mxu0 0.0
    %1514 = vmatpush.msra.mxu0 0.0
    %1515 = vmatpush.msra.mxu0 %v1478
    %1516 = vmatpush.msra.mxu0 %v1477
    %1517 = vmatpush.msra.mxu0 %v1476
    %1518 = vmatpush.msra.mxu0 %v1475
    %1519 = vmatmul.f32.gmra.mxu0 %v1480
    %v1520 = vpop.f32.mrf.mxu0
    %v1521 = vadd.f32 0.0, %v1520
    %1522 = vmatmul.f32.gmra.mxu0 %v1483
    %v1523 = vpop.f32.mrf.mxu0
    %v1524 = vadd.f32 0.0, %v1523
    %1525 = vmatmul.f32.gmra.mxu0 %v1486
    %v1526 = vpop.f32.mrf.mxu0
    %v1527 = vadd.f32 0.0, %v1526
    %1528 = vmatmul.f32.gmra.mxu0 %v1489
    %v1529 = vpop.f32.mrf.mxu0
    %v1530 = vadd.f32 0.0, %v1529
    %1531 = vmatmul.f32.gmra.mxu0 %v1492
    %v1532 = vpop.f32.mrf.mxu0
    %v1533 = vadd.f32 0.0, %v1532
    %1534 = vmatmul.f32.gmra.mxu0 %v1495
    %v1535 = vpop.f32.mrf.mxu0
    %v1536 = vadd.f32 0.0, %v1535
    %1537 = vmatmul.f32.gmra.mxu0 %v1498
    %v1538 = vpop.f32.mrf.mxu0
    %v1539 = vadd.f32 0.0, %v1538
    %1540 = vmatmul.f32.gmra.mxu0 %v1501
    %v1541 = vpop.f32.mrf.mxu0
    %v1542 = vadd.f32 0.0, %v1541
    %1543 = vdwg.mxu0
    %v1544 = vadd.f32 %v1452, %v1521
    %v1545 = vadd.f32 %v1455, %v1524
    %v1546 = vadd.f32 %v1458, %v1527
    %v1547 = vadd.f32 %v1461, %v1530
    %v1548 = vadd.f32 %v1464, %v1533
    %v1549 = vadd.f32 %v1467, %v1536
    %v1550 = vadd.f32 %v1470, %v1539
    %v1551 = vadd.f32 %v1473, %v1542
    %v1552 = vld [vmem:[%s4 + $0x60] sm:$0xff]
    %v1553 = vld [vmem:[%s4 + $0x68] sm:$0xff]
    %v1554 = vld [vmem:[%s4 + $0x70] sm:$0xff]
    %v1555 = vld [vmem:[%s4 + $0x78] sm:$0xff]
    %v1557 = vsel %vm980, %v964, 0
    %v1560 = vsel %vm980, %v965, 0
    %v1563 = vsel %vm980, %v966, 0
    %v1566 = vsel %vm980, %v967, 0
    %v1569 = vsel %vm980, %v968, 0
    %v1572 = vsel %vm980, %v969, 0
    %v1575 = vsel %vm980, %v970, 0
    %v1578 = vsel %vm980, %v971, 0
    %1580 = vmatpush.msra.mxu0 0.0
    %1581 = vmatpush.msra.mxu0 0.0
    %1582 = vmatpush.msra.mxu0 0.0
    %1583 = vmatpush.msra.mxu0 0.0
    %1584 = vmatpush.msra.mxu0 0.0
    %1585 = vmatpush.msra.mxu0 0.0
    %1586 = vmatpush.msra.mxu0 0.0
    %1587 = vmatpush.msra.mxu0 0.0
    %1588 = vmatpush.msra.mxu0 0.0
    %1589 = vmatpush.msra.mxu0 0.0
    %1590 = vmatpush.msra.mxu0 0.0
    %1591 = vmatpush.msra.mxu0 0.0
    %1592 = vmatpush.msra.mxu0 %v1555
    %1593 = vmatpush.msra.mxu0 %v1554
    %1594 = vmatpush.msra.mxu0 %v1553
    %1595 = vmatpush.msra.mxu0 %v1552
    %1596 = vmatmul.f32.gmra.mxu0 %v1557
    %v1597 = vpop.f32.mrf.mxu0
    %v1598 = vadd.f32 0.0, %v1597
    %1599 = vmatmul.f32.gmra.mxu0 %v1560
    %v1600 = vpop.f32.mrf.mxu0
    %v1601 = vadd.f32 0.0, %v1600
    %1602 = vmatmul.f32.gmra.mxu0 %v1563
    %v1603 = vpop.f32.mrf.mxu0
    %v1604 = vadd.f32 0.0, %v1603
    %1605 = vmatmul.f32.gmra.mxu0 %v1566
    %v1606 = vpop.f32.mrf.mxu0
    %v1607 = vadd.f32 0.0, %v1606
    %1608 = vmatmul.f32.gmra.mxu0 %v1569
    %v1609 = vpop.f32.mrf.mxu0
    %v1610 = vadd.f32 0.0, %v1609
    %1611 = vmatmul.f32.gmra.mxu0 %v1572
    %v1612 = vpop.f32.mrf.mxu0
    %v1613 = vadd.f32 0.0, %v1612
    %1614 = vmatmul.f32.gmra.mxu0 %v1575
    %v1615 = vpop.f32.mrf.mxu0
    %v1616 = vadd.f32 0.0, %v1615
    %1617 = vmatmul.f32.gmra.mxu0 %v1578
    %v1618 = vpop.f32.mrf.mxu0
    %v1619 = vadd.f32 0.0, %v1618
    %1620 = vdwg.mxu0
    %v1621 = vadd.f32 %v1544, %v1598
    %v1622 = vadd.f32 %v1545, %v1601
    %v1623 = vadd.f32 %v1546, %v1604
    %v1624 = vadd.f32 %v1547, %v1607
    %v1625 = vadd.f32 %v1548, %v1610
    %v1626 = vadd.f32 %v1549, %v1613
    %v1627 = vadd.f32 %v1550, %v1616
    %v1628 = vadd.f32 %v1551, %v1619
    %v1629 = vld [vmem:[%s5] sm:$0x1]
    %v1631 = vperm.slane %v1629, 0
    %v1633 = vmul.f32 %v1621, %v1631
    %v1634 = vmul.f32 %v1622, %v1631
    %v1635 = vmul.f32 %v1623, %v1631
    %v1636 = vmul.f32 %v1624, %v1631
    %v1637 = vmul.f32 %v1625, %v1631
    %v1638 = vmul.f32 %v1626, %v1631
    %v1639 = vmul.f32 %v1627, %v1631
    %v1640 = vmul.f32 %v1628, %v1631
    %v1641 = vld [vmem:[%s6] sm:$0x1]
    %v1643 = vperm.slane %v1641, 0
    %v1645 = vadd.f32 %v1633, %v1643
    %v1646 = vadd.f32 %v1634, %v1643
    %v1647 = vadd.f32 %v1635, %v1643
    %v1648 = vadd.f32 %v1636, %v1643
    %v1649 = vadd.f32 %v1637, %v1643
    %v1650 = vadd.f32 %v1638, %v1643
    %v1651 = vadd.f32 %v1639, %v1643
    %v1652 = vadd.f32 %v1640, %v1643
    %vm1653 = vcmp.gt.f32.partialorder %v1645, 0.0
    %vm1654 = vcmp.gt.f32.partialorder %v1646, 0.0
    %vm1655 = vcmp.gt.f32.partialorder %v1647, 0.0
    %vm1656 = vcmp.gt.f32.partialorder %v1648, 0.0
    %vm1657 = vcmp.gt.f32.partialorder %v1649, 0.0
    %vm1658 = vcmp.gt.f32.partialorder %v1650, 0.0
    %vm1659 = vcmp.gt.f32.partialorder %v1651, 0.0
    %vm1660 = vcmp.gt.f32.partialorder %v1652, 0.0
    %v1661 = vmul.f32 %v1645, 1.442695
    %v1662 = vpow.pop %v1661
    %v1663 = vmul.f32 %v1646, 1.442695
    %v1664 = vpow.pop %v1663
    %v1665 = vmul.f32 %v1647, 1.442695
    %v1666 = vpow.pop %v1665
    %v1667 = vmul.f32 %v1648, 1.442695
    %v1668 = vpow.pop %v1667
    %v1669 = vmul.f32 %v1649, 1.442695
    %v1670 = vpow.pop %v1669
    %v1671 = vmul.f32 %v1650, 1.442695
    %v1672 = vpow.pop %v1671
    %v1673 = vmul.f32 %v1651, 1.442695
    %v1674 = vpow.pop %v1673
    %v1675 = vmul.f32 %v1652, 1.442695
    %v1676 = vpow.pop %v1675
    %v1677 = vsub.f32 %v1662, 1.0
    %v1678 = vsub.f32 %v1664, 1.0
    %v1679 = vsub.f32 %v1666, 1.0
    %v1680 = vsub.f32 %v1668, 1.0
    %v1681 = vsub.f32 %v1670, 1.0
    %v1682 = vsub.f32 %v1672, 1.0
    %v1683 = vsub.f32 %v1674, 1.0
    %v1684 = vsub.f32 %v1676, 1.0
    %v1685 = vsel %vm1653, %v1645, %v1677
    %v1686 = vsel %vm1654, %v1646, %v1678
    %v1687 = vsel %vm1655, %v1647, %v1679
    %v1688 = vsel %vm1656, %v1648, %v1680
    %v1689 = vsel %vm1657, %v1649, %v1681
    %v1690 = vsel %vm1658, %v1650, %v1682
    %v1691 = vsel %vm1659, %v1651, %v1683
    %v1692 = vsel %vm1660, %v1652, %v1684
    %1693 = vst.msk [vmem:[%s7 + $0x40] sm:$0xff] %vm114, %v1685
    %1694 = vst.msk [vmem:[%s7 + $0x48] sm:$0xff] %vm114, %v1686
    %1695 = vst.msk [vmem:[%s7 + $0x50] sm:$0xff] %vm114, %v1687
    %1696 = vst.msk [vmem:[%s7 + $0x58] sm:$0xff] %vm114, %v1688
    %1697 = vst.msk [vmem:[%s7 + $0x60] sm:$0xff] %vm114, %v1689
    %1698 = vst.msk [vmem:[%s7 + $0x68] sm:$0xff] %vm114, %v1690
    %1699 = vst.msk [vmem:[%s7 + $0x70] sm:$0xff] %vm114, %v1691
    %1700 = vst.msk [vmem:[%s7 + $0x78] sm:$0xff] %vm114, %v1692
    // Predicated region
    $region34: #{branch3dcnn_srf_forward.2} parent=1 // pred_check
      _
    $region35: #{branch3dcnn_srf_forward.2} parent=1 // pred_check_branch
      %1702 = sbr.rel (0) target = $region37
    $region36: #{branch3dcnn_srf_forward.2} parent=1 // pred_region
      _
    $region37: #{branch3dcnn_srf_forward.2} parent=1 // pred_fallthru
      _
    // Predicated region
    $region38: #{branch3dcnn_srf_forward.2} parent=1 // pred_check
      _
    $region39: #{branch3dcnn_srf_forward.2} parent=1 // pred_check_branch
      %1704 = sbr.rel (0) target = $region41
    $region40: #{branch3dcnn_srf_forward.2} parent=1 // pred_region
      _
    $region41: #{branch3dcnn_srf_forward.2} parent=1 // pred_fallthru
      _
    %1705 = vsyncpa [#allocation3], 1

// kernel: branch3dcnn_srf_forward.3
$region0: #{branch3dcnn_srf_forward.3}
  #allocation0 [shape = 'u32[]', space=smem, size = 0x4, offset = 0x4, fixed_abs, tag = 'smem constant byte address 0x4 - core index']
  #allocation1 [shape = 'u32[72,128]{1,0:T(1,128)}', space=vmem, size = 0x9000, scoped, tag = 'internal scratch']
  %s0 = inlined_call_operand.vmem [shape: f32[2,4096], index: 0, kind: input, shape index: {}]
  %s1 = inlined_call_operand.vmem [shape: f32[4096,32], index: 1, kind: input, shape index: {}]
  %s2 = inlined_call_operand.vmem [shape: f32[1,32], index: 2, kind: input, shape index: {}]
  %s3 = inlined_call_operand.vmem [shape: f32[1,32], index: 3, kind: input, shape index: {}]
  %s4 = inlined_call_operand.vmem [shape: f32[32,32], index: 4, kind: input, shape index: {}]
  %s5 = inlined_call_operand.vmem [shape: f32[1,32], index: 5, kind: input, shape index: {}]
  %s6 = inlined_call_operand.vmem [shape: f32[1,32], index: 6, kind: input, shape index: {}]
  %s7 = inlined_call_operand.vmem [shape: f32[32,4], index: 7, kind: input, shape index: {}]
  %s8 = inlined_call_operand.vmem [shape: f32[1,4], index: 8, kind: input, shape index: {}]
  %s9 = inlined_call_operand.hbm [shape: f32[2,4], index: 9, kind: output, shape index: {}]
  %s10 = sld [smem:[#allocation0]]
  $region46: #{branch3dcnn_srf_forward.3} parent=0
    _
  %s12 = ssub.s32 1, %s10
  %s13 = scalar_select 0, %s12, %s10
  $region1: #{branch3dcnn_srf_forward.3} parent=0
    #allocation2 [shape = 'u8[1024]{0}', space=vmem, size = 0x400, scoped, tag = 'output window, operand 0, single buffered']
    #allocation3 [shape = 's32[1]{0}', space=sflag, size = 0x4, scoped, tag = 'scoped memory for branch3dcnn_srf_forward.3']
    %14 = vsyncpa [#allocation3], 0
    // Predicated region
    $region2: #{branch3dcnn_srf_forward.3} parent=1 // pred_check
      _
    $region3: #{branch3dcnn_srf_forward.3} parent=1 // pred_check_branch
      %16 = sbr.rel (0) target = $region5
    $region4: #{branch3dcnn_srf_forward.3} parent=1 // pred_region
      _
    $region5: #{branch3dcnn_srf_forward.3} parent=1 // pred_fallthru
      _
    // Predicated region
    $region6: #{branch3dcnn_srf_forward.3} parent=1 // pred_check
      _
    $region7: #{branch3dcnn_srf_forward.3} parent=1 // pred_check_branch
      %18 = sbr.rel (0) target = $region9
    $region8: #{branch3dcnn_srf_forward.3} parent=1 // pred_region
      _
    $region9: #{branch3dcnn_srf_forward.3} parent=1 // pred_fallthru
      _
    // Predicated region
    $region10: #{branch3dcnn_srf_forward.3} parent=1 // pred_check
      _
    $region11: #{branch3dcnn_srf_forward.3} parent=1 // pred_check_branch
      %20 = sbr.rel (0) target = $region13
    $region12: #{branch3dcnn_srf_forward.3} parent=1 // pred_region
      _
    $region13: #{branch3dcnn_srf_forward.3} parent=1 // pred_fallthru
      _
    // Predicated region
    $region14: #{branch3dcnn_srf_forward.3} parent=1 // pred_check
      _
    $region15: #{branch3dcnn_srf_forward.3} parent=1 // pred_check_branch
      %22 = sbr.rel (0) target = $region17
    $region16: #{branch3dcnn_srf_forward.3} parent=1 // pred_region
      _
    $region17: #{branch3dcnn_srf_forward.3} parent=1 // pred_fallthru
      _
    // Predicated region
    $region18: #{branch3dcnn_srf_forward.3} parent=1 // pred_check
      _
    $region19: #{branch3dcnn_srf_forward.3} parent=1 // pred_check_branch
      %24 = sbr.rel (0) target = $region21
    $region20: #{branch3dcnn_srf_forward.3} parent=1 // pred_region
      _
    $region21: #{branch3dcnn_srf_forward.3} parent=1 // pred_fallthru
      _
    // Predicated region
    $region22: #{branch3dcnn_srf_forward.3} parent=1 // pred_check
      _
    $region23: #{branch3dcnn_srf_forward.3} parent=1 // pred_check_branch
      %26 = sbr.rel (0) target = $region25
    $region24: #{branch3dcnn_srf_forward.3} parent=1 // pred_region
      _
    $region25: #{branch3dcnn_srf_forward.3} parent=1 // pred_fallthru
      _
    // Predicated region
    $region26: #{branch3dcnn_srf_forward.3} parent=1 // pred_check
      _
    $region27: #{branch3dcnn_srf_forward.3} parent=1 // pred_check_branch
      %28 = sbr.rel (0) target = $region29
    $region28: #{branch3dcnn_srf_forward.3} parent=1 // pred_region
      _
    $region29: #{branch3dcnn_srf_forward.3} parent=1 // pred_fallthru
      _
    // Predicated region
    $region30: #{branch3dcnn_srf_forward.3} parent=1 // pred_check
      _
    $region31: #{branch3dcnn_srf_forward.3} parent=1 // pred_check_branch
      %30 = sbr.rel (0) target = $region33
    $region32: #{branch3dcnn_srf_forward.3} parent=1 // pred_region
      _
    $region33: #{branch3dcnn_srf_forward.3} parent=1 // pred_fallthru
      _
    // Predicated region
    $region34: #{branch3dcnn_srf_forward.3} parent=1 // pred_check
      _
    $region35: #{branch3dcnn_srf_forward.3} parent=1 // pred_check_branch
      %32 = sbr.rel (0) target = $region37
    $region36: #{branch3dcnn_srf_forward.3} parent=1 // pred_region
      _
    $region37: #{branch3dcnn_srf_forward.3} parent=1 // pred_fallthru
      _
    %v33 = vld [vmem:[%s0] sm:$0xff]
    %v34 = vld [vmem:[%s0 + $0x8] sm:$0xff]
    %v35 = vld [vmem:[%s0 + $0x10] sm:$0xff]
    %v36 = vld [vmem:[%s0 + $0x18] sm:$0xff]
    %v37 = vld [vmem:[%s0 + $0x20] sm:$0xff]
    %v38 = vld [vmem:[%s0 + $0x28] sm:$0xff]
    %v39 = vld [vmem:[%s0 + $0x30] sm:$0xff]
    %v40 = vld [vmem:[%s0 + $0x38] sm:$0xff]
    %v41 = vld [vmem:[%s1] sm:$0xff]
    %v42 = vld [vmem:[%s1 + $0x8] sm:$0xff]
    %v43 = vld [vmem:[%s1 + $0x10] sm:$0xff]
    %v44 = vld [vmem:[%s1 + $0x18] sm:$0xff]
    %v45 = vld [vmem:[%s1 + $0x20] sm:$0xff]
    %v46 = vld [vmem:[%s1 + $0x28] sm:$0xff]
    %v47 = vld [vmem:[%s1 + $0x30] sm:$0xff]
    %v48 = vld [vmem:[%s1 + $0x38] sm:$0xff]
    %v49 = vld [vmem:[%s1 + $0x40] sm:$0xff]
    %v50 = vld [vmem:[%s1 + $0x48] sm:$0xff]
    %v51 = vld [vmem:[%s1 + $0x50] sm:$0xff]
    %v52 = vld [vmem:[%s1 + $0x58] sm:$0xff]
    %v53 = vld [vmem:[%s1 + $0x60] sm:$0xff]
    %v54 = vld [vmem:[%s1 + $0x68] sm:$0xff]
    %v55 = vld [vmem:[%s1 + $0x70] sm:$0xff]
    %v56 = vld [vmem:[%s1 + $0x78] sm:$0xff]
    %v57 = vld [vmem:[%s1 + $0x80] sm:$0xff]
    %v58 = vld [vmem:[%s1 + $0x88] sm:$0xff]
    %v59 = vld [vmem:[%s1 + $0x90] sm:$0xff]
    %v60 = vld [vmem:[%s1 + $0x98] sm:$0xff]
    %v61 = vld [vmem:[%s1 + $0xa0] sm:$0xff]
    %v62 = vld [vmem:[%s1 + $0xa8] sm:$0xff]
    %v63 = vld [vmem:[%s1 + $0xb0] sm:$0xff]
    %v64 = vld [vmem:[%s1 + $0xb8] sm:$0xff]
    %v65 = vld [vmem:[%s1 + $0xc0] sm:$0xff]
    %v66 = vld [vmem:[%s1 + $0xc8] sm:$0xff]
    %v67 = vld [vmem:[%s1 + $0xd0] sm:$0xff]
    %v68 = vld [vmem:[%s1 + $0xd8] sm:$0xff]
    %v69 = vld [vmem:[%s1 + $0xe0] sm:$0xff]
    %v70 = vld [vmem:[%s1 + $0xe8] sm:$0xff]
    %v71 = vld [vmem:[%s1 + $0xf0] sm:$0xff]
    %v72 = vld [vmem:[%s1 + $0xf8] sm:$0xff]
    %v73 = vld [vmem:[%s1 + $0x100] sm:$0xff]
    %v74 = vld [vmem:[%s1 + $0x108] sm:$0xff]
    %v75 = vld [vmem:[%s1 + $0x110] sm:$0xff]
    %v76 = vld [vmem:[%s1 + $0x118] sm:$0xff]
    %v77 = vld [vmem:[%s1 + $0x120] sm:$0xff]
    %v78 = vld [vmem:[%s1 + $0x128] sm:$0xff]
    %v79 = vld [vmem:[%s1 + $0x130] sm:$0xff]
    %v80 = vld [vmem:[%s1 + $0x138] sm:$0xff]
    %v81 = vld [vmem:[%s1 + $0x140] sm:$0xff]
    %v82 = vld [vmem:[%s1 + $0x148] sm:$0xff]
    %v83 = vld [vmem:[%s1 + $0x150] sm:$0xff]
    %v84 = vld [vmem:[%s1 + $0x158] sm:$0xff]
    %v85 = vld [vmem:[%s1 + $0x160] sm:$0xff]
    %v86 = vld [vmem:[%s1 + $0x168] sm:$0xff]
    %v87 = vld [vmem:[%s1 + $0x170] sm:$0xff]
    %v88 = vld [vmem:[%s1 + $0x178] sm:$0xff]
    %v89 = vld [vmem:[%s1 + $0x180] sm:$0xff]
    %v90 = vld [vmem:[%s1 + $0x188] sm:$0xff]
    %v91 = vld [vmem:[%s1 + $0x190] sm:$0xff]
    %v92 = vld [vmem:[%s1 + $0x198] sm:$0xff]
    %v93 = vld [vmem:[%s1 + $0x1a0] sm:$0xff]
    %v94 = vld [vmem:[%s1 + $0x1a8] sm:$0xff]
    %v95 = vld [vmem:[%s1 + $0x1b0] sm:$0xff]
    %v96 = vld [vmem:[%s1 + $0x1b8] sm:$0xff]
    %v97 = vld [vmem:[%s1 + $0x1c0] sm:$0xff]
    %v98 = vld [vmem:[%s1 + $0x1c8] sm:$0xff]
    %v99 = vld [vmem:[%s1 + $0x1d0] sm:$0xff]
    %v100 = vld [vmem:[%s1 + $0x1d8] sm:$0xff]
    %v101 = vld [vmem:[%s1 + $0x1e0] sm:$0xff]
    %v102 = vld [vmem:[%s1 + $0x1e8] sm:$0xff]
    %v103 = vld [vmem:[%s1 + $0x1f0] sm:$0xff]
    %v104 = vld [vmem:[%s1 + $0x1f8] sm:$0xff]
    %v105 = vld [vmem:[%s1 + $0x200] sm:$0xff]
    %v106 = vld [vmem:[%s1 + $0x208] sm:$0xff]
    %v107 = vld [vmem:[%s1 + $0x210] sm:$0xff]
    %v108 = vld [vmem:[%s1 + $0x218] sm:$0xff]
    %v109 = vld [vmem:[%s1 + $0x220] sm:$0xff]
    %v110 = vld [vmem:[%s1 + $0x228] sm:$0xff]
    %v111 = vld [vmem:[%s1 + $0x230] sm:$0xff]
    %v112 = vld [vmem:[%s1 + $0x238] sm:$0xff]
    %v113 = vld [vmem:[%s1 + $0x240] sm:$0xff]
    %v114 = vld [vmem:[%s1 + $0x248] sm:$0xff]
    %v115 = vld [vmem:[%s1 + $0x250] sm:$0xff]
    %v116 = vld [vmem:[%s1 + $0x258] sm:$0xff]
    %v117 = vld [vmem:[%s1 + $0x260] sm:$0xff]
    %v118 = vld [vmem:[%s1 + $0x268] sm:$0xff]
    %v119 = vld [vmem:[%s1 + $0x270] sm:$0xff]
    %v120 = vld [vmem:[%s1 + $0x278] sm:$0xff]
    %v121 = vld [vmem:[%s1 + $0x280] sm:$0xff]
    %v122 = vld [vmem:[%s1 + $0x288] sm:$0xff]
    %v123 = vld [vmem:[%s1 + $0x290] sm:$0xff]
    %v124 = vld [vmem:[%s1 + $0x298] sm:$0xff]
    %v125 = vld [vmem:[%s1 + $0x2a0] sm:$0xff]
    %v126 = vld [vmem:[%s1 + $0x2a8] sm:$0xff]
    %v127 = vld [vmem:[%s1 + $0x2b0] sm:$0xff]
    %v128 = vld [vmem:[%s1 + $0x2b8] sm:$0xff]
    %v129 = vld [vmem:[%s1 + $0x2c0] sm:$0xff]
    %v130 = vld [vmem:[%s1 + $0x2c8] sm:$0xff]
    %v131 = vld [vmem:[%s1 + $0x2d0] sm:$0xff]
    %v132 = vld [vmem:[%s1 + $0x2d8] sm:$0xff]
    %v133 = vld [vmem:[%s1 + $0x2e0] sm:$0xff]
    %v134 = vld [vmem:[%s1 + $0x2e8] sm:$0xff]
    %v135 = vld [vmem:[%s1 + $0x2f0] sm:$0xff]
    %v136 = vld [vmem:[%s1 + $0x2f8] sm:$0xff]
    %v137 = vld [vmem:[%s1 + $0x300] sm:$0xff]
    %v138 = vld [vmem:[%s1 + $0x308] sm:$0xff]
    %v139 = vld [vmem:[%s1 + $0x310] sm:$0xff]
    %v140 = vld [vmem:[%s1 + $0x318] sm:$0xff]
    %v141 = vld [vmem:[%s1 + $0x320] sm:$0xff]
    %v142 = vld [vmem:[%s1 + $0x328] sm:$0xff]
    %v143 = vld [vmem:[%s1 + $0x330] sm:$0xff]
    %v144 = vld [vmem:[%s1 + $0x338] sm:$0xff]
    %v145 = vld [vmem:[%s1 + $0x340] sm:$0xff]
    %v146 = vld [vmem:[%s1 + $0x348] sm:$0xff]
    %v147 = vld [vmem:[%s1 + $0x350] sm:$0xff]
    %v148 = vld [vmem:[%s1 + $0x358] sm:$0xff]
    %v149 = vld [vmem:[%s1 + $0x360] sm:$0xff]
    %v150 = vld [vmem:[%s1 + $0x368] sm:$0xff]
    %v151 = vld [vmem:[%s1 + $0x370] sm:$0xff]
    %v152 = vld [vmem:[%s1 + $0x378] sm:$0xff]
    %v153 = vld [vmem:[%s1 + $0x380] sm:$0xff]
    %v154 = vld [vmem:[%s1 + $0x388] sm:$0xff]
    %v155 = vld [vmem:[%s1 + $0x390] sm:$0xff]
    %v156 = vld [vmem:[%s1 + $0x398] sm:$0xff]
    %v157 = vld [vmem:[%s1 + $0x3a0] sm:$0xff]
    %v158 = vld [vmem:[%s1 + $0x3a8] sm:$0xff]
    %v159 = vld [vmem:[%s1 + $0x3b0] sm:$0xff]
    %v160 = vld [vmem:[%s1 + $0x3b8] sm:$0xff]
    %v161 = vld [vmem:[%s1 + $0x3c0] sm:$0xff]
    %v162 = vld [vmem:[%s1 + $0x3c8] sm:$0xff]
    %v163 = vld [vmem:[%s1 + $0x3d0] sm:$0xff]
    %v164 = vld [vmem:[%s1 + $0x3d8] sm:$0xff]
    %v165 = vld [vmem:[%s1 + $0x3e0] sm:$0xff]
    %v166 = vld [vmem:[%s1 + $0x3e8] sm:$0xff]
    %v167 = vld [vmem:[%s1 + $0x3f0] sm:$0xff]
    %v168 = vld [vmem:[%s1 + $0x3f8] sm:$0xff]
    %v169 = vld [vmem:[%s1 + $0x400] sm:$0xff]
    %v170 = vld [vmem:[%s1 + $0x408] sm:$0xff]
    %v171 = vld [vmem:[%s1 + $0x410] sm:$0xff]
    %v172 = vld [vmem:[%s1 + $0x418] sm:$0xff]
    %v173 = vld [vmem:[%s1 + $0x420] sm:$0xff]
    %v174 = vld [vmem:[%s1 + $0x428] sm:$0xff]
    %v175 = vld [vmem:[%s1 + $0x430] sm:$0xff]
    %v176 = vld [vmem:[%s1 + $0x438] sm:$0xff]
    %v177 = vld [vmem:[%s1 + $0x440] sm:$0xff]
    %v178 = vld [vmem:[%s1 + $0x448] sm:$0xff]
    %v179 = vld [vmem:[%s1 + $0x450] sm:$0xff]
    %v180 = vld [vmem:[%s1 + $0x458] sm:$0xff]
    %v181 = vld [vmem:[%s1 + $0x460] sm:$0xff]
    %v182 = vld [vmem:[%s1 + $0x468] sm:$0xff]
    %v183 = vld [vmem:[%s1 + $0x470] sm:$0xff]
    %v184 = vld [vmem:[%s1 + $0x478] sm:$0xff]
    %v185 = vld [vmem:[%s1 + $0x480] sm:$0xff]
    %v186 = vld [vmem:[%s1 + $0x488] sm:$0xff]
    %v187 = vld [vmem:[%s1 + $0x490] sm:$0xff]
    %v188 = vld [vmem:[%s1 + $0x498] sm:$0xff]
    %v189 = vld [vmem:[%s1 + $0x4a0] sm:$0xff]
    %v190 = vld [vmem:[%s1 + $0x4a8] sm:$0xff]
    %v191 = vld [vmem:[%s1 + $0x4b0] sm:$0xff]
    %v192 = vld [vmem:[%s1 + $0x4b8] sm:$0xff]
    %v193 = vld [vmem:[%s1 + $0x4c0] sm:$0xff]
    %v194 = vld [vmem:[%s1 + $0x4c8] sm:$0xff]
    %v195 = vld [vmem:[%s1 + $0x4d0] sm:$0xff]
    %v196 = vld [vmem:[%s1 + $0x4d8] sm:$0xff]
    %v197 = vld [vmem:[%s1 + $0x4e0] sm:$0xff]
    %v198 = vld [vmem:[%s1 + $0x4e8] sm:$0xff]
    %v199 = vld [vmem:[%s1 + $0x4f0] sm:$0xff]
    %v200 = vld [vmem:[%s1 + $0x4f8] sm:$0xff]
    %v201 = vld [vmem:[%s1 + $0x500] sm:$0xff]
    %v202 = vld [vmem:[%s1 + $0x508] sm:$0xff]
    %v203 = vld [vmem:[%s1 + $0x510] sm:$0xff]
    %v204 = vld [vmem:[%s1 + $0x518] sm:$0xff]
    %v205 = vld [vmem:[%s1 + $0x520] sm:$0xff]
    %v206 = vld [vmem:[%s1 + $0x528] sm:$0xff]
    %v207 = vld [vmem:[%s1 + $0x530] sm:$0xff]
    %v208 = vld [vmem:[%s1 + $0x538] sm:$0xff]
    %v209 = vld [vmem:[%s1 + $0x540] sm:$0xff]
    %v210 = vld [vmem:[%s1 + $0x548] sm:$0xff]
    %v211 = vld [vmem:[%s1 + $0x550] sm:$0xff]
    %v212 = vld [vmem:[%s1 + $0x558] sm:$0xff]
    %v213 = vld [vmem:[%s1 + $0x560] sm:$0xff]
    %v214 = vld [vmem:[%s1 + $0x568] sm:$0xff]
    %v215 = vld [vmem:[%s1 + $0x570] sm:$0xff]
    %v216 = vld [vmem:[%s1 + $0x578] sm:$0xff]
    %v217 = vld [vmem:[%s1 + $0x580] sm:$0xff]
    %v218 = vld [vmem:[%s1 + $0x588] sm:$0xff]
    %v219 = vld [vmem:[%s1 + $0x590] sm:$0xff]
    %v220 = vld [vmem:[%s1 + $0x598] sm:$0xff]
    %v221 = vld [vmem:[%s1 + $0x5a0] sm:$0xff]
    %v222 = vld [vmem:[%s1 + $0x5a8] sm:$0xff]
    %v223 = vld [vmem:[%s1 + $0x5b0] sm:$0xff]
    %v224 = vld [vmem:[%s1 + $0x5b8] sm:$0xff]
    %v225 = vld [vmem:[%s1 + $0x5c0] sm:$0xff]
    %v226 = vld [vmem:[%s1 + $0x5c8] sm:$0xff]
    %v227 = vld [vmem:[%s1 + $0x5d0] sm:$0xff]
    %v228 = vld [vmem:[%s1 + $0x5d8] sm:$0xff]
    %v229 = vld [vmem:[%s1 + $0x5e0] sm:$0xff]
    %v230 = vld [vmem:[%s1 + $0x5e8] sm:$0xff]
    %v231 = vld [vmem:[%s1 + $0x5f0] sm:$0xff]
    %v232 = vld [vmem:[%s1 + $0x5f8] sm:$0xff]
    %v233 = vld [vmem:[%s1 + $0x600] sm:$0xff]
    %v234 = vld [vmem:[%s1 + $0x608] sm:$0xff]
    %v235 = vld [vmem:[%s1 + $0x610] sm:$0xff]
    %v236 = vld [vmem:[%s1 + $0x618] sm:$0xff]
    %v237 = vld [vmem:[%s1 + $0x620] sm:$0xff]
    %v238 = vld [vmem:[%s1 + $0x628] sm:$0xff]
    %v239 = vld [vmem:[%s1 + $0x630] sm:$0xff]
    %v240 = vld [vmem:[%s1 + $0x638] sm:$0xff]
    %v241 = vld [vmem:[%s1 + $0x640] sm:$0xff]
    %v242 = vld [vmem:[%s1 + $0x648] sm:$0xff]
    %v243 = vld [vmem:[%s1 + $0x650] sm:$0xff]
    %v244 = vld [vmem:[%s1 + $0x658] sm:$0xff]
    %v245 = vld [vmem:[%s1 + $0x660] sm:$0xff]
    %v246 = vld [vmem:[%s1 + $0x668] sm:$0xff]
    %v247 = vld [vmem:[%s1 + $0x670] sm:$0xff]
    %v248 = vld [vmem:[%s1 + $0x678] sm:$0xff]
    %v249 = vld [vmem:[%s1 + $0x680] sm:$0xff]
    %v250 = vld [vmem:[%s1 + $0x688] sm:$0xff]
    %v251 = vld [vmem:[%s1 + $0x690] sm:$0xff]
    %v252 = vld [vmem:[%s1 + $0x698] sm:$0xff]
    %v253 = vld [vmem:[%s1 + $0x6a0] sm:$0xff]
    %v254 = vld [vmem:[%s1 + $0x6a8] sm:$0xff]
    %v255 = vld [vmem:[%s1 + $0x6b0] sm:$0xff]
    %v256 = vld [vmem:[%s1 + $0x6b8] sm:$0xff]
    %v257 = vld [vmem:[%s1 + $0x6c0] sm:$0xff]
    %v258 = vld [vmem:[%s1 + $0x6c8] sm:$0xff]
    %v259 = vld [vmem:[%s1 + $0x6d0] sm:$0xff]
    %v260 = vld [vmem:[%s1 + $0x6d8] sm:$0xff]
    %v261 = vld [vmem:[%s1 + $0x6e0] sm:$0xff]
    %v262 = vld [vmem:[%s1 + $0x6e8] sm:$0xff]
    %v263 = vld [vmem:[%s1 + $0x6f0] sm:$0xff]
    %v264 = vld [vmem:[%s1 + $0x6f8] sm:$0xff]
    %v265 = vld [vmem:[%s1 + $0x700] sm:$0xff]
    %v266 = vld [vmem:[%s1 + $0x708] sm:$0xff]
    %v267 = vld [vmem:[%s1 + $0x710] sm:$0xff]
    %v268 = vld [vmem:[%s1 + $0x718] sm:$0xff]
    %v269 = vld [vmem:[%s1 + $0x720] sm:$0xff]
    %v270 = vld [vmem:[%s1 + $0x728] sm:$0xff]
    %v271 = vld [vmem:[%s1 + $0x730] sm:$0xff]
    %v272 = vld [vmem:[%s1 + $0x738] sm:$0xff]
    %v273 = vld [vmem:[%s1 + $0x740] sm:$0xff]
    %v274 = vld [vmem:[%s1 + $0x748] sm:$0xff]
    %v275 = vld [vmem:[%s1 + $0x750] sm:$0xff]
    %v276 = vld [vmem:[%s1 + $0x758] sm:$0xff]
    %v277 = vld [vmem:[%s1 + $0x760] sm:$0xff]
    %v278 = vld [vmem:[%s1 + $0x768] sm:$0xff]
    %v279 = vld [vmem:[%s1 + $0x770] sm:$0xff]
    %v280 = vld [vmem:[%s1 + $0x778] sm:$0xff]
    %v281 = vld [vmem:[%s1 + $0x780] sm:$0xff]
    %v282 = vld [vmem:[%s1 + $0x788] sm:$0xff]
    %v283 = vld [vmem:[%s1 + $0x790] sm:$0xff]
    %v284 = vld [vmem:[%s1 + $0x798] sm:$0xff]
    %v285 = vld [vmem:[%s1 + $0x7a0] sm:$0xff]
    %v286 = vld [vmem:[%s1 + $0x7a8] sm:$0xff]
    %v287 = vld [vmem:[%s1 + $0x7b0] sm:$0xff]
    %v288 = vld [vmem:[%s1 + $0x7b8] sm:$0xff]
    %v289 = vld [vmem:[%s1 + $0x7c0] sm:$0xff]
    %v290 = vld [vmem:[%s1 + $0x7c8] sm:$0xff]
    %v291 = vld [vmem:[%s1 + $0x7d0] sm:$0xff]
    %v292 = vld [vmem:[%s1 + $0x7d8] sm:$0xff]
    %v293 = vld [vmem:[%s1 + $0x7e0] sm:$0xff]
    %v294 = vld [vmem:[%s1 + $0x7e8] sm:$0xff]
    %v295 = vld [vmem:[%s1 + $0x7f0] sm:$0xff]
    %v296 = vld [vmem:[%s1 + $0x7f8] sm:$0xff]
    %v297 = vld [vmem:[%s1 + $0x800] sm:$0xff]
    %v298 = vld [vmem:[%s1 + $0x808] sm:$0xff]
    %v299 = vld [vmem:[%s1 + $0x810] sm:$0xff]
    %v300 = vld [vmem:[%s1 + $0x818] sm:$0xff]
    %v301 = vld [vmem:[%s1 + $0x820] sm:$0xff]
    %v302 = vld [vmem:[%s1 + $0x828] sm:$0xff]
    %v303 = vld [vmem:[%s1 + $0x830] sm:$0xff]
    %v304 = vld [vmem:[%s1 + $0x838] sm:$0xff]
    %v305 = vld [vmem:[%s1 + $0x840] sm:$0xff]
    %v306 = vld [vmem:[%s1 + $0x848] sm:$0xff]
    %v307 = vld [vmem:[%s1 + $0x850] sm:$0xff]
    %v308 = vld [vmem:[%s1 + $0x858] sm:$0xff]
    %v309 = vld [vmem:[%s1 + $0x860] sm:$0xff]
    %v310 = vld [vmem:[%s1 + $0x868] sm:$0xff]
    %v311 = vld [vmem:[%s1 + $0x870] sm:$0xff]
    %v312 = vld [vmem:[%s1 + $0x878] sm:$0xff]
    %v313 = vld [vmem:[%s1 + $0x880] sm:$0xff]
    %v314 = vld [vmem:[%s1 + $0x888] sm:$0xff]
    %v315 = vld [vmem:[%s1 + $0x890] sm:$0xff]
    %v316 = vld [vmem:[%s1 + $0x898] sm:$0xff]
    %v317 = vld [vmem:[%s1 + $0x8a0] sm:$0xff]
    %v318 = vld [vmem:[%s1 + $0x8a8] sm:$0xff]
    %v319 = vld [vmem:[%s1 + $0x8b0] sm:$0xff]
    %v320 = vld [vmem:[%s1 + $0x8b8] sm:$0xff]
    %v321 = vld [vmem:[%s1 + $0x8c0] sm:$0xff]
    %v322 = vld [vmem:[%s1 + $0x8c8] sm:$0xff]
    %v323 = vld [vmem:[%s1 + $0x8d0] sm:$0xff]
    %v324 = vld [vmem:[%s1 + $0x8d8] sm:$0xff]
    %v325 = vld [vmem:[%s1 + $0x8e0] sm:$0xff]
    %v326 = vld [vmem:[%s1 + $0x8e8] sm:$0xff]
    %v327 = vld [vmem:[%s1 + $0x8f0] sm:$0xff]
    %v328 = vld [vmem:[%s1 + $0x8f8] sm:$0xff]
    %v329 = vld [vmem:[%s1 + $0x900] sm:$0xff]
    %v330 = vld [vmem:[%s1 + $0x908] sm:$0xff]
    %v331 = vld [vmem:[%s1 + $0x910] sm:$0xff]
    %v332 = vld [vmem:[%s1 + $0x918] sm:$0xff]
    %v333 = vld [vmem:[%s1 + $0x920] sm:$0xff]
    %v334 = vld [vmem:[%s1 + $0x928] sm:$0xff]
    %v335 = vld [vmem:[%s1 + $0x930] sm:$0xff]
    %v336 = vld [vmem:[%s1 + $0x938] sm:$0xff]
    %v337 = vld [vmem:[%s1 + $0x940] sm:$0xff]
    %v338 = vld [vmem:[%s1 + $0x948] sm:$0xff]
    %v339 = vld [vmem:[%s1 + $0x950] sm:$0xff]
    %v340 = vld [vmem:[%s1 + $0x958] sm:$0xff]
    %v341 = vld [vmem:[%s1 + $0x960] sm:$0xff]
    %v342 = vld [vmem:[%s1 + $0x968] sm:$0xff]
    %v343 = vld [vmem:[%s1 + $0x970] sm:$0xff]
    %v344 = vld [vmem:[%s1 + $0x978] sm:$0xff]
    %v345 = vld [vmem:[%s1 + $0x980] sm:$0xff]
    %v346 = vld [vmem:[%s1 + $0x988] sm:$0xff]
    %v347 = vld [vmem:[%s1 + $0x990] sm:$0xff]
    %v348 = vld [vmem:[%s1 + $0x998] sm:$0xff]
    %v349 = vld [vmem:[%s1 + $0x9a0] sm:$0xff]
    %v350 = vld [vmem:[%s1 + $0x9a8] sm:$0xff]
    %v351 = vld [vmem:[%s1 + $0x9b0] sm:$0xff]
    %v352 = vld [vmem:[%s1 + $0x9b8] sm:$0xff]
    %v353 = vld [vmem:[%s1 + $0x9c0] sm:$0xff]
    %v354 = vld [vmem:[%s1 + $0x9c8] sm:$0xff]
    %v355 = vld [vmem:[%s1 + $0x9d0] sm:$0xff]
    %v356 = vld [vmem:[%s1 + $0x9d8] sm:$0xff]
    %v357 = vld [vmem:[%s1 + $0x9e0] sm:$0xff]
    %v358 = vld [vmem:[%s1 + $0x9e8] sm:$0xff]
    %v359 = vld [vmem:[%s1 + $0x9f0] sm:$0xff]
    %v360 = vld [vmem:[%s1 + $0x9f8] sm:$0xff]
    %v361 = vld [vmem:[%s1 + $0xa00] sm:$0xff]
    %v362 = vld [vmem:[%s1 + $0xa08] sm:$0xff]
    %v363 = vld [vmem:[%s1 + $0xa10] sm:$0xff]
    %v364 = vld [vmem:[%s1 + $0xa18] sm:$0xff]
    %v365 = vld [vmem:[%s1 + $0xa20] sm:$0xff]
    %v366 = vld [vmem:[%s1 + $0xa28] sm:$0xff]
    %v367 = vld [vmem:[%s1 + $0xa30] sm:$0xff]
    %v368 = vld [vmem:[%s1 + $0xa38] sm:$0xff]
    %v369 = vld [vmem:[%s1 + $0xa40] sm:$0xff]
    %v370 = vld [vmem:[%s1 + $0xa48] sm:$0xff]
    %v371 = vld [vmem:[%s1 + $0xa50] sm:$0xff]
    %v372 = vld [vmem:[%s1 + $0xa58] sm:$0xff]
    %v373 = vld [vmem:[%s1 + $0xa60] sm:$0xff]
    %v374 = vld [vmem:[%s1 + $0xa68] sm:$0xff]
    %v375 = vld [vmem:[%s1 + $0xa70] sm:$0xff]
    %v376 = vld [vmem:[%s1 + $0xa78] sm:$0xff]
    %v377 = vld [vmem:[%s1 + $0xa80] sm:$0xff]
    %v378 = vld [vmem:[%s1 + $0xa88] sm:$0xff]
    %v379 = vld [vmem:[%s1 + $0xa90] sm:$0xff]
    %v380 = vld [vmem:[%s1 + $0xa98] sm:$0xff]
    %v381 = vld [vmem:[%s1 + $0xaa0] sm:$0xff]
    %v382 = vld [vmem:[%s1 + $0xaa8] sm:$0xff]
    %v383 = vld [vmem:[%s1 + $0xab0] sm:$0xff]
    %v384 = vld [vmem:[%s1 + $0xab8] sm:$0xff]
    %v385 = vld [vmem:[%s1 + $0xac0] sm:$0xff]
    %v386 = vld [vmem:[%s1 + $0xac8] sm:$0xff]
    %v387 = vld [vmem:[%s1 + $0xad0] sm:$0xff]
    %v388 = vld [vmem:[%s1 + $0xad8] sm:$0xff]
    %v389 = vld [vmem:[%s1 + $0xae0] sm:$0xff]
    %v390 = vld [vmem:[%s1 + $0xae8] sm:$0xff]
    %v391 = vld [vmem:[%s1 + $0xaf0] sm:$0xff]
    %v392 = vld [vmem:[%s1 + $0xaf8] sm:$0xff]
    %v393 = vld [vmem:[%s1 + $0xb00] sm:$0xff]
    %v394 = vld [vmem:[%s1 + $0xb08] sm:$0xff]
    %v395 = vld [vmem:[%s1 + $0xb10] sm:$0xff]
    %v396 = vld [vmem:[%s1 + $0xb18] sm:$0xff]
    %v397 = vld [vmem:[%s1 + $0xb20] sm:$0xff]
    %v398 = vld [vmem:[%s1 + $0xb28] sm:$0xff]
    %v399 = vld [vmem:[%s1 + $0xb30] sm:$0xff]
    %v400 = vld [vmem:[%s1 + $0xb38] sm:$0xff]
    %v401 = vld [vmem:[%s1 + $0xb40] sm:$0xff]
    %v402 = vld [vmem:[%s1 + $0xb48] sm:$0xff]
    %v403 = vld [vmem:[%s1 + $0xb50] sm:$0xff]
    %v404 = vld [vmem:[%s1 + $0xb58] sm:$0xff]
    %v405 = vld [vmem:[%s1 + $0xb60] sm:$0xff]
    %v406 = vld [vmem:[%s1 + $0xb68] sm:$0xff]
    %v407 = vld [vmem:[%s1 + $0xb70] sm:$0xff]
    %v408 = vld [vmem:[%s1 + $0xb78] sm:$0xff]
    %v409 = vld [vmem:[%s1 + $0xb80] sm:$0xff]
    %v410 = vld [vmem:[%s1 + $0xb88] sm:$0xff]
    %v411 = vld [vmem:[%s1 + $0xb90] sm:$0xff]
    %v412 = vld [vmem:[%s1 + $0xb98] sm:$0xff]
    %v413 = vld [vmem:[%s1 + $0xba0] sm:$0xff]
    %v414 = vld [vmem:[%s1 + $0xba8] sm:$0xff]
    %v415 = vld [vmem:[%s1 + $0xbb0] sm:$0xff]
    %v416 = vld [vmem:[%s1 + $0xbb8] sm:$0xff]
    %v417 = vld [vmem:[%s1 + $0xbc0] sm:$0xff]
    %v418 = vld [vmem:[%s1 + $0xbc8] sm:$0xff]
    %v419 = vld [vmem:[%s1 + $0xbd0] sm:$0xff]
    %v420 = vld [vmem:[%s1 + $0xbd8] sm:$0xff]
    %v421 = vld [vmem:[%s1 + $0xbe0] sm:$0xff]
    %v422 = vld [vmem:[%s1 + $0xbe8] sm:$0xff]
    %v423 = vld [vmem:[%s1 + $0xbf0] sm:$0xff]
    %v424 = vld [vmem:[%s1 + $0xbf8] sm:$0xff]
    %v425 = vld [vmem:[%s1 + $0xc00] sm:$0xff]
    %v426 = vld [vmem:[%s1 + $0xc08] sm:$0xff]
    %v427 = vld [vmem:[%s1 + $0xc10] sm:$0xff]
    %v428 = vld [vmem:[%s1 + $0xc18] sm:$0xff]
    %v429 = vld [vmem:[%s1 + $0xc20] sm:$0xff]
    %v430 = vld [vmem:[%s1 + $0xc28] sm:$0xff]
    %v431 = vld [vmem:[%s1 + $0xc30] sm:$0xff]
    %v432 = vld [vmem:[%s1 + $0xc38] sm:$0xff]
    %v433 = vld [vmem:[%s1 + $0xc40] sm:$0xff]
    %v434 = vld [vmem:[%s1 + $0xc48] sm:$0xff]
    %v435 = vld [vmem:[%s1 + $0xc50] sm:$0xff]
    %v436 = vld [vmem:[%s1 + $0xc58] sm:$0xff]
    %v437 = vld [vmem:[%s1 + $0xc60] sm:$0xff]
    %v438 = vld [vmem:[%s1 + $0xc68] sm:$0xff]
    %v439 = vld [vmem:[%s1 + $0xc70] sm:$0xff]
    %v440 = vld [vmem:[%s1 + $0xc78] sm:$0xff]
    %v441 = vld [vmem:[%s1 + $0xc80] sm:$0xff]
    %v442 = vld [vmem:[%s1 + $0xc88] sm:$0xff]
    %v443 = vld [vmem:[%s1 + $0xc90] sm:$0xff]
    %v444 = vld [vmem:[%s1 + $0xc98] sm:$0xff]
    %v445 = vld [vmem:[%s1 + $0xca0] sm:$0xff]
    %v446 = vld [vmem:[%s1 + $0xca8] sm:$0xff]
    %v447 = vld [vmem:[%s1 + $0xcb0] sm:$0xff]
    %v448 = vld [vmem:[%s1 + $0xcb8] sm:$0xff]
    %v449 = vld [vmem:[%s1 + $0xcc0] sm:$0xff]
    %v450 = vld [vmem:[%s1 + $0xcc8] sm:$0xff]
    %v451 = vld [vmem:[%s1 + $0xcd0] sm:$0xff]
    %v452 = vld [vmem:[%s1 + $0xcd8] sm:$0xff]
    %v453 = vld [vmem:[%s1 + $0xce0] sm:$0xff]
    %v454 = vld [vmem:[%s1 + $0xce8] sm:$0xff]
    %v455 = vld [vmem:[%s1 + $0xcf0] sm:$0xff]
    %v456 = vld [vmem:[%s1 + $0xcf8] sm:$0xff]
    %v457 = vld [vmem:[%s1 + $0xd00] sm:$0xff]
    %v458 = vld [vmem:[%s1 + $0xd08] sm:$0xff]
    %v459 = vld [vmem:[%s1 + $0xd10] sm:$0xff]
    %v460 = vld [vmem:[%s1 + $0xd18] sm:$0xff]
    %v461 = vld [vmem:[%s1 + $0xd20] sm:$0xff]
    %v462 = vld [vmem:[%s1 + $0xd28] sm:$0xff]
    %v463 = vld [vmem:[%s1 + $0xd30] sm:$0xff]
    %v464 = vld [vmem:[%s1 + $0xd38] sm:$0xff]
    %v465 = vld [vmem:[%s1 + $0xd40] sm:$0xff]
    %v466 = vld [vmem:[%s1 + $0xd48] sm:$0xff]
    %v467 = vld [vmem:[%s1 + $0xd50] sm:$0xff]
    %v468 = vld [vmem:[%s1 + $0xd58] sm:$0xff]
    %v469 = vld [vmem:[%s1 + $0xd60] sm:$0xff]
    %v470 = vld [vmem:[%s1 + $0xd68] sm:$0xff]
    %v471 = vld [vmem:[%s1 + $0xd70] sm:$0xff]
    %v472 = vld [vmem:[%s1 + $0xd78] sm:$0xff]
    %v473 = vld [vmem:[%s1 + $0xd80] sm:$0xff]
    %v474 = vld [vmem:[%s1 + $0xd88] sm:$0xff]
    %v475 = vld [vmem:[%s1 + $0xd90] sm:$0xff]
    %v476 = vld [vmem:[%s1 + $0xd98] sm:$0xff]
    %v477 = vld [vmem:[%s1 + $0xda0] sm:$0xff]
    %v478 = vld [vmem:[%s1 + $0xda8] sm:$0xff]
    %v479 = vld [vmem:[%s1 + $0xdb0] sm:$0xff]
    %v480 = vld [vmem:[%s1 + $0xdb8] sm:$0xff]
    %v481 = vld [vmem:[%s1 + $0xdc0] sm:$0xff]
    %v482 = vld [vmem:[%s1 + $0xdc8] sm:$0xff]
    %v483 = vld [vmem:[%s1 + $0xdd0] sm:$0xff]
    %v484 = vld [vmem:[%s1 + $0xdd8] sm:$0xff]
    %v485 = vld [vmem:[%s1 + $0xde0] sm:$0xff]
    %v486 = vld [vmem:[%s1 + $0xde8] sm:$0xff]
    %v487 = vld [vmem:[%s1 + $0xdf0] sm:$0xff]
    %v488 = vld [vmem:[%s1 + $0xdf8] sm:$0xff]
    %v489 = vld [vmem:[%s1 + $0xe00] sm:$0xff]
    %v490 = vld [vmem:[%s1 + $0xe08] sm:$0xff]
    %v491 = vld [vmem:[%s1 + $0xe10] sm:$0xff]
    %v492 = vld [vmem:[%s1 + $0xe18] sm:$0xff]
    %v493 = vld [vmem:[%s1 + $0xe20] sm:$0xff]
    %v494 = vld [vmem:[%s1 + $0xe28] sm:$0xff]
    %v495 = vld [vmem:[%s1 + $0xe30] sm:$0xff]
    %v496 = vld [vmem:[%s1 + $0xe38] sm:$0xff]
    %v497 = vld [vmem:[%s1 + $0xe40] sm:$0xff]
    %v498 = vld [vmem:[%s1 + $0xe48] sm:$0xff]
    %v499 = vld [vmem:[%s1 + $0xe50] sm:$0xff]
    %v500 = vld [vmem:[%s1 + $0xe58] sm:$0xff]
    %v501 = vld [vmem:[%s1 + $0xe60] sm:$0xff]
    %v502 = vld [vmem:[%s1 + $0xe68] sm:$0xff]
    %v503 = vld [vmem:[%s1 + $0xe70] sm:$0xff]
    %v504 = vld [vmem:[%s1 + $0xe78] sm:$0xff]
    %v505 = vld [vmem:[%s1 + $0xe80] sm:$0xff]
    %v506 = vld [vmem:[%s1 + $0xe88] sm:$0xff]
    %v507 = vld [vmem:[%s1 + $0xe90] sm:$0xff]
    %v508 = vld [vmem:[%s1 + $0xe98] sm:$0xff]
    %v509 = vld [vmem:[%s1 + $0xea0] sm:$0xff]
    %v510 = vld [vmem:[%s1 + $0xea8] sm:$0xff]
    %v511 = vld [vmem:[%s1 + $0xeb0] sm:$0xff]
    %v512 = vld [vmem:[%s1 + $0xeb8] sm:$0xff]
    %v513 = vld [vmem:[%s1 + $0xec0] sm:$0xff]
    %v514 = vld [vmem:[%s1 + $0xec8] sm:$0xff]
    %v515 = vld [vmem:[%s1 + $0xed0] sm:$0xff]
    %v516 = vld [vmem:[%s1 + $0xed8] sm:$0xff]
    %v517 = vld [vmem:[%s1 + $0xee0] sm:$0xff]
    %v518 = vld [vmem:[%s1 + $0xee8] sm:$0xff]
    %v519 = vld [vmem:[%s1 + $0xef0] sm:$0xff]
    %v520 = vld [vmem:[%s1 + $0xef8] sm:$0xff]
    %v521 = vld [vmem:[%s1 + $0xf00] sm:$0xff]
    %v522 = vld [vmem:[%s1 + $0xf08] sm:$0xff]
    %v523 = vld [vmem:[%s1 + $0xf10] sm:$0xff]
    %v524 = vld [vmem:[%s1 + $0xf18] sm:$0xff]
    %v525 = vld [vmem:[%s1 + $0xf20] sm:$0xff]
    %v526 = vld [vmem:[%s1 + $0xf28] sm:$0xff]
    %v527 = vld [vmem:[%s1 + $0xf30] sm:$0xff]
    %v528 = vld [vmem:[%s1 + $0xf38] sm:$0xff]
    %v529 = vld [vmem:[%s1 + $0xf40] sm:$0xff]
    %v530 = vld [vmem:[%s1 + $0xf48] sm:$0xff]
    %v531 = vld [vmem:[%s1 + $0xf50] sm:$0xff]
    %v532 = vld [vmem:[%s1 + $0xf58] sm:$0xff]
    %v533 = vld [vmem:[%s1 + $0xf60] sm:$0xff]
    %v534 = vld [vmem:[%s1 + $0xf68] sm:$0xff]
    %v535 = vld [vmem:[%s1 + $0xf70] sm:$0xff]
    %v536 = vld [vmem:[%s1 + $0xf78] sm:$0xff]
    %v537 = vld [vmem:[%s1 + $0xf80] sm:$0xff]
    %v538 = vld [vmem:[%s1 + $0xf88] sm:$0xff]
    %v539 = vld [vmem:[%s1 + $0xf90] sm:$0xff]
    %v540 = vld [vmem:[%s1 + $0xf98] sm:$0xff]
    %v541 = vld [vmem:[%s1 + $0xfa0] sm:$0xff]
    %v542 = vld [vmem:[%s1 + $0xfa8] sm:$0xff]
    %v543 = vld [vmem:[%s1 + $0xfb0] sm:$0xff]
    %v544 = vld [vmem:[%s1 + $0xfb8] sm:$0xff]
    %v545 = vld [vmem:[%s1 + $0xfc0] sm:$0xff]
    %v546 = vld [vmem:[%s1 + $0xfc8] sm:$0xff]
    %v547 = vld [vmem:[%s1 + $0xfd0] sm:$0xff]
    %v548 = vld [vmem:[%s1 + $0xfd8] sm:$0xff]
    %v549 = vld [vmem:[%s1 + $0xfe0] sm:$0xff]
    %v550 = vld [vmem:[%s1 + $0xfe8] sm:$0xff]
    %v551 = vld [vmem:[%s1 + $0xff0] sm:$0xff]
    %v552 = vld [vmem:[%s1 + $0xff8] sm:$0xff]
    %561 = vst [vmem:[#allocation1] ss:$4 sm:$0xff] %v33
    %s562 = scalar_lea.vmem [#allocation1], 32
    %563 = vst [vmem:[%s562] ss:$4 sm:$0xff] %v34
    %v564 = vld.sshfl [vmem:[#allocation1] sm:$0xff pattern:$0x73625140]
    %v565 = vld.sshfl [vmem:[#allocation1 + $0x8] sm:$0xff pattern:$0x73625140]
    %v566 = vld.sshfl [vmem:[#allocation1 + $0x10] sm:$0xff pattern:$0x73625140]
    %v567 = vld.sshfl [vmem:[#allocation1 + $0x18] sm:$0xff pattern:$0x73625140]
    %v568 = vld.sshfl [vmem:[#allocation1 + $0x20] sm:$0xff pattern:$0x73625140]
    %v569 = vld.sshfl [vmem:[#allocation1 + $0x28] sm:$0xff pattern:$0x73625140]
    %v570 = vld.sshfl [vmem:[#allocation1 + $0x30] sm:$0xff pattern:$0x73625140]
    %v571 = vld.sshfl [vmem:[#allocation1 + $0x38] sm:$0xff pattern:$0x73625140]
    %572 = vst [vmem:[#allocation1] ss:$4 sm:$0xff] %v35
    %573 = vst [vmem:[%s562] ss:$4 sm:$0xff] %v36
    %v574 = vld.sshfl [vmem:[#allocation1] sm:$0xff pattern:$0x73625140]
    %v575 = vld.sshfl [vmem:[#allocation1 + $0x8] sm:$0xff pattern:$0x73625140]
    %v576 = vld.sshfl [vmem:[#allocation1 + $0x10] sm:$0xff pattern:$0x73625140]
    %v577 = vld.sshfl [vmem:[#allocation1 + $0x18] sm:$0xff pattern:$0x73625140]
    %v578 = vld.sshfl [vmem:[#allocation1 + $0x20] sm:$0xff pattern:$0x73625140]
    %v579 = vld.sshfl [vmem:[#allocation1 + $0x28] sm:$0xff pattern:$0x73625140]
    %v580 = vld.sshfl [vmem:[#allocation1 + $0x30] sm:$0xff pattern:$0x73625140]
    %v581 = vld.sshfl [vmem:[#allocation1 + $0x38] sm:$0xff pattern:$0x73625140]
    %582 = vst [vmem:[#allocation1] ss:$4 sm:$0xff] %v37
    %583 = vst [vmem:[%s562] ss:$4 sm:$0xff] %v38
    %v584 = vld.sshfl [vmem:[#allocation1] sm:$0xff pattern:$0x73625140]
    %v585 = vld.sshfl [vmem:[#allocation1 + $0x8] sm:$0xff pattern:$0x73625140]
    %v586 = vld.sshfl [vmem:[#allocation1 + $0x10] sm:$0xff pattern:$0x73625140]
    %v587 = vld.sshfl [vmem:[#allocation1 + $0x18] sm:$0xff pattern:$0x73625140]
    %v588 = vld.sshfl [vmem:[#allocation1 + $0x20] sm:$0xff pattern:$0x73625140]
    %v589 = vld.sshfl [vmem:[#allocation1 + $0x28] sm:$0xff pattern:$0x73625140]
    %v590 = vld.sshfl [vmem:[#allocation1 + $0x30] sm:$0xff pattern:$0x73625140]
    %v591 = vld.sshfl [vmem:[#allocation1 + $0x38] sm:$0xff pattern:$0x73625140]
    %592 = vst [vmem:[#allocation1] ss:$4 sm:$0xff] %v39
    %593 = vst [vmem:[%s562] ss:$4 sm:$0xff] %v40
    %v594 = vld.sshfl [vmem:[#allocation1] sm:$0xff pattern:$0x73625140]
    %v595 = vld.sshfl [vmem:[#allocation1 + $0x8] sm:$0xff pattern:$0x73625140]
    %v596 = vld.sshfl [vmem:[#allocation1 + $0x10] sm:$0xff pattern:$0x73625140]
    %v597 = vld.sshfl [vmem:[#allocation1 + $0x18] sm:$0xff pattern:$0x73625140]
    %v598 = vld.sshfl [vmem:[#allocation1 + $0x20] sm:$0xff pattern:$0x73625140]
    %v599 = vld.sshfl [vmem:[#allocation1 + $0x28] sm:$0xff pattern:$0x73625140]
    %v600 = vld.sshfl [vmem:[#allocation1 + $0x30] sm:$0xff pattern:$0x73625140]
    %v601 = vld.sshfl [vmem:[#allocation1 + $0x38] sm:$0xff pattern:$0x73625140]
    %634 = vmatpush.msra.mxu0 %v56
    %635 = vmatpush.msra.mxu0 %v55
    %636 = vmatpush.msra.mxu0 %v54
    %637 = vmatpush.msra.mxu0 %v53
    %638 = vmatpush.msra.mxu0 %v52
    %639 = vmatpush.msra.mxu0 %v51
    %640 = vmatpush.msra.mxu0 %v50
    %641 = vmatpush.msra.mxu0 %v49
    %642 = vmatpush.msra.mxu0 %v48
    %643 = vmatpush.msra.mxu0 %v47
    %644 = vmatpush.msra.mxu0 %v46
    %645 = vmatpush.msra.mxu0 %v45
    %646 = vmatpush.msra.mxu0 %v44
    %647 = vmatpush.msra.mxu0 %v43
    %648 = vmatpush.msra.mxu0 %v42
    %649 = vmatpush.msra.mxu0 %v41
    %650 = vmatmul.f32.gmra.mxu0 %v564
    %v651 = vpop.f32.mrf.mxu0
    %v652 = vadd.f32 0.0, %v651
    %653 = vdwg.mxu0
    %654 = vmatpush.msra.mxu0 %v72
    %655 = vmatpush.msra.mxu0 %v71
    %656 = vmatpush.msra.mxu0 %v70
    %657 = vmatpush.msra.mxu0 %v69
    %658 = vmatpush.msra.mxu0 %v68
    %659 = vmatpush.msra.mxu0 %v67
    %660 = vmatpush.msra.mxu0 %v66
    %661 = vmatpush.msra.mxu0 %v65
    %662 = vmatpush.msra.mxu0 %v64
    %663 = vmatpush.msra.mxu0 %v63
    %664 = vmatpush.msra.mxu0 %v62
    %665 = vmatpush.msra.mxu0 %v61
    %666 = vmatpush.msra.mxu0 %v60
    %667 = vmatpush.msra.mxu0 %v59
    %668 = vmatpush.msra.mxu0 %v58
    %669 = vmatpush.msra.mxu0 %v57
    %670 = vmatmul.f32.gmra.mxu0 %v565
    %v671 = vpop.f32.mrf.mxu0
    %v672 = vadd.f32 %v652, %v671
    %673 = vdwg.mxu0
    %674 = vmatpush.msra.mxu0 %v88
    %675 = vmatpush.msra.mxu0 %v87
    %676 = vmatpush.msra.mxu0 %v86
    %677 = vmatpush.msra.mxu0 %v85
    %678 = vmatpush.msra.mxu0 %v84
    %679 = vmatpush.msra.mxu0 %v83
    %680 = vmatpush.msra.mxu0 %v82
    %681 = vmatpush.msra.mxu0 %v81
    %682 = vmatpush.msra.mxu0 %v80
    %683 = vmatpush.msra.mxu0 %v79
    %684 = vmatpush.msra.mxu0 %v78
    %685 = vmatpush.msra.mxu0 %v77
    %686 = vmatpush.msra.mxu0 %v76
    %687 = vmatpush.msra.mxu0 %v75
    %688 = vmatpush.msra.mxu0 %v74
    %689 = vmatpush.msra.mxu0 %v73
    %690 = vmatmul.f32.gmra.mxu0 %v566
    %v691 = vpop.f32.mrf.mxu0
    %v692 = vadd.f32 %v672, %v691
    %693 = vdwg.mxu0
    %694 = vmatpush.msra.mxu0 %v104
    %695 = vmatpush.msra.mxu0 %v103
    %696 = vmatpush.msra.mxu0 %v102
    %697 = vmatpush.msra.mxu0 %v101
    %698 = vmatpush.msra.mxu0 %v100
    %699 = vmatpush.msra.mxu0 %v99
    %700 = vmatpush.msra.mxu0 %v98
    %701 = vmatpush.msra.mxu0 %v97
    %702 = vmatpush.msra.mxu0 %v96
    %703 = vmatpush.msra.mxu0 %v95
    %704 = vmatpush.msra.mxu0 %v94
    %705 = vmatpush.msra.mxu0 %v93
    %706 = vmatpush.msra.mxu0 %v92
    %707 = vmatpush.msra.mxu0 %v91
    %708 = vmatpush.msra.mxu0 %v90
    %709 = vmatpush.msra.mxu0 %v89
    %710 = vmatmul.f32.gmra.mxu0 %v567
    %v711 = vpop.f32.mrf.mxu0
    %v712 = vadd.f32 %v692, %v711
    %713 = vdwg.mxu0
    %714 = vmatpush.msra.mxu0 %v120
    %715 = vmatpush.msra.mxu0 %v119
    %716 = vmatpush.msra.mxu0 %v118
    %717 = vmatpush.msra.mxu0 %v117
    %718 = vmatpush.msra.mxu0 %v116
    %719 = vmatpush.msra.mxu0 %v115
    %720 = vmatpush.msra.mxu0 %v114
    %721 = vmatpush.msra.mxu0 %v113
    %722 = vmatpush.msra.mxu0 %v112
    %723 = vmatpush.msra.mxu0 %v111
    %724 = vmatpush.msra.mxu0 %v110
    %725 = vmatpush.msra.mxu0 %v109
    %726 = vmatpush.msra.mxu0 %v108
    %727 = vmatpush.msra.mxu0 %v107
    %728 = vmatpush.msra.mxu0 %v106
    %729 = vmatpush.msra.mxu0 %v105
    %730 = vmatmul.f32.gmra.mxu0 %v568
    %v731 = vpop.f32.mrf.mxu0
    %v732 = vadd.f32 %v712, %v731
    %733 = vdwg.mxu0
    %734 = vmatpush.msra.mxu0 %v136
    %735 = vmatpush.msra.mxu0 %v135
    %736 = vmatpush.msra.mxu0 %v134
    %737 = vmatpush.msra.mxu0 %v133
    %738 = vmatpush.msra.mxu0 %v132
    %739 = vmatpush.msra.mxu0 %v131
    %740 = vmatpush.msra.mxu0 %v130
    %741 = vmatpush.msra.mxu0 %v129
    %742 = vmatpush.msra.mxu0 %v128
    %743 = vmatpush.msra.mxu0 %v127
    %744 = vmatpush.msra.mxu0 %v126
    %745 = vmatpush.msra.mxu0 %v125
    %746 = vmatpush.msra.mxu0 %v124
    %747 = vmatpush.msra.mxu0 %v123
    %748 = vmatpush.msra.mxu0 %v122
    %749 = vmatpush.msra.mxu0 %v121
    %750 = vmatmul.f32.gmra.mxu0 %v569
    %v751 = vpop.f32.mrf.mxu0
    %v752 = vadd.f32 %v732, %v751
    %753 = vdwg.mxu0
    %754 = vmatpush.msra.mxu0 %v152
    %755 = vmatpush.msra.mxu0 %v151
    %756 = vmatpush.msra.mxu0 %v150
    %757 = vmatpush.msra.mxu0 %v149
    %758 = vmatpush.msra.mxu0 %v148
    %759 = vmatpush.msra.mxu0 %v147
    %760 = vmatpush.msra.mxu0 %v146
    %761 = vmatpush.msra.mxu0 %v145
    %762 = vmatpush.msra.mxu0 %v144
    %763 = vmatpush.msra.mxu0 %v143
    %764 = vmatpush.msra.mxu0 %v142
    %765 = vmatpush.msra.mxu0 %v141
    %766 = vmatpush.msra.mxu0 %v140
    %767 = vmatpush.msra.mxu0 %v139
    %768 = vmatpush.msra.mxu0 %v138
    %769 = vmatpush.msra.mxu0 %v137
    %770 = vmatmul.f32.gmra.mxu0 %v570
    %v771 = vpop.f32.mrf.mxu0
    %v772 = vadd.f32 %v752, %v771
    %773 = vdwg.mxu0
    %774 = vmatpush.msra.mxu0 %v168
    %775 = vmatpush.msra.mxu0 %v167
    %776 = vmatpush.msra.mxu0 %v166
    %777 = vmatpush.msra.mxu0 %v165
    %778 = vmatpush.msra.mxu0 %v164
    %779 = vmatpush.msra.mxu0 %v163
    %780 = vmatpush.msra.mxu0 %v162
    %781 = vmatpush.msra.mxu0 %v161
    %782 = vmatpush.msra.mxu0 %v160
    %783 = vmatpush.msra.mxu0 %v159
    %784 = vmatpush.msra.mxu0 %v158
    %785 = vmatpush.msra.mxu0 %v157
    %786 = vmatpush.msra.mxu0 %v156
    %787 = vmatpush.msra.mxu0 %v155
    %788 = vmatpush.msra.mxu0 %v154
    %789 = vmatpush.msra.mxu0 %v153
    %790 = vmatmul.f32.gmra.mxu0 %v571
    %v791 = vpop.f32.mrf.mxu0
    %v792 = vadd.f32 %v772, %v791
    %793 = vdwg.mxu0
    %794 = vmatpush.msra.mxu0 %v184
    %795 = vmatpush.msra.mxu0 %v183
    %796 = vmatpush.msra.mxu0 %v182
    %797 = vmatpush.msra.mxu0 %v181
    %798 = vmatpush.msra.mxu0 %v180
    %799 = vmatpush.msra.mxu0 %v179
    %800 = vmatpush.msra.mxu0 %v178
    %801 = vmatpush.msra.mxu0 %v177
    %802 = vmatpush.msra.mxu0 %v176
    %803 = vmatpush.msra.mxu0 %v175
    %804 = vmatpush.msra.mxu0 %v174
    %805 = vmatpush.msra.mxu0 %v173
    %806 = vmatpush.msra.mxu0 %v172
    %807 = vmatpush.msra.mxu0 %v171
    %808 = vmatpush.msra.mxu0 %v170
    %809 = vmatpush.msra.mxu0 %v169
    %810 = vmatmul.f32.gmra.mxu0 %v574
    %v811 = vpop.f32.mrf.mxu0
    %v812 = vadd.f32 %v792, %v811
    %813 = vdwg.mxu0
    %814 = vmatpush.msra.mxu0 %v200
    %815 = vmatpush.msra.mxu0 %v199
    %816 = vmatpush.msra.mxu0 %v198
    %817 = vmatpush.msra.mxu0 %v197
    %818 = vmatpush.msra.mxu0 %v196
    %819 = vmatpush.msra.mxu0 %v195
    %820 = vmatpush.msra.mxu0 %v194
    %821 = vmatpush.msra.mxu0 %v193
    %822 = vmatpush.msra.mxu0 %v192
    %823 = vmatpush.msra.mxu0 %v191
    %824 = vmatpush.msra.mxu0 %v190
    %825 = vmatpush.msra.mxu0 %v189
    %826 = vmatpush.msra.mxu0 %v188
    %827 = vmatpush.msra.mxu0 %v187
    %828 = vmatpush.msra.mxu0 %v186
    %829 = vmatpush.msra.mxu0 %v185
    %830 = vmatmul.f32.gmra.mxu0 %v575
    %v831 = vpop.f32.mrf.mxu0
    %v832 = vadd.f32 %v812, %v831
    %833 = vdwg.mxu0
    %834 = vmatpush.msra.mxu0 %v216
    %835 = vmatpush.msra.mxu0 %v215
    %836 = vmatpush.msra.mxu0 %v214
    %837 = vmatpush.msra.mxu0 %v213
    %838 = vmatpush.msra.mxu0 %v212
    %839 = vmatpush.msra.mxu0 %v211
    %840 = vmatpush.msra.mxu0 %v210
    %841 = vmatpush.msra.mxu0 %v209
    %842 = vmatpush.msra.mxu0 %v208
    %843 = vmatpush.msra.mxu0 %v207
    %844 = vmatpush.msra.mxu0 %v206
    %845 = vmatpush.msra.mxu0 %v205
    %846 = vmatpush.msra.mxu0 %v204
    %847 = vmatpush.msra.mxu0 %v203
    %848 = vmatpush.msra.mxu0 %v202
    %849 = vmatpush.msra.mxu0 %v201
    %850 = vmatmul.f32.gmra.mxu0 %v576
    %v851 = vpop.f32.mrf.mxu0
    %v852 = vadd.f32 %v832, %v851
    %853 = vdwg.mxu0
    %854 = vmatpush.msra.mxu0 %v232
    %855 = vmatpush.msra.mxu0 %v231
    %856 = vmatpush.msra.mxu0 %v230
    %857 = vmatpush.msra.mxu0 %v229
    %858 = vmatpush.msra.mxu0 %v228
    %859 = vmatpush.msra.mxu0 %v227
    %860 = vmatpush.msra.mxu0 %v226
    %861 = vmatpush.msra.mxu0 %v225
    %862 = vmatpush.msra.mxu0 %v224
    %863 = vmatpush.msra.mxu0 %v223
    %864 = vmatpush.msra.mxu0 %v222
    %865 = vmatpush.msra.mxu0 %v221
    %866 = vmatpush.msra.mxu0 %v220
    %867 = vmatpush.msra.mxu0 %v219
    %868 = vmatpush.msra.mxu0 %v218
    %869 = vmatpush.msra.mxu0 %v217
    %870 = vmatmul.f32.gmra.mxu0 %v577
    %v871 = vpop.f32.mrf.mxu0
    %v872 = vadd.f32 %v852, %v871
    %873 = vdwg.mxu0
    %874 = vmatpush.msra.mxu0 %v248
    %875 = vmatpush.msra.mxu0 %v247
    %876 = vmatpush.msra.mxu0 %v246
    %877 = vmatpush.msra.mxu0 %v245
    %878 = vmatpush.msra.mxu0 %v244
    %879 = vmatpush.msra.mxu0 %v243
    %880 = vmatpush.msra.mxu0 %v242
    %881 = vmatpush.msra.mxu0 %v241
    %882 = vmatpush.msra.mxu0 %v240
    %883 = vmatpush.msra.mxu0 %v239
    %884 = vmatpush.msra.mxu0 %v238
    %885 = vmatpush.msra.mxu0 %v237
    %886 = vmatpush.msra.mxu0 %v236
    %887 = vmatpush.msra.mxu0 %v235
    %888 = vmatpush.msra.mxu0 %v234
    %889 = vmatpush.msra.mxu0 %v233
    %890 = vmatmul.f32.gmra.mxu0 %v578
    %v891 = vpop.f32.mrf.mxu0
    %v892 = vadd.f32 %v872, %v891
    %893 = vdwg.mxu0
    %894 = vmatpush.msra.mxu0 %v264
    %895 = vmatpush.msra.mxu0 %v263
    %896 = vmatpush.msra.mxu0 %v262
    %897 = vmatpush.msra.mxu0 %v261
    %898 = vmatpush.msra.mxu0 %v260
    %899 = vmatpush.msra.mxu0 %v259
    %900 = vmatpush.msra.mxu0 %v258
    %901 = vmatpush.msra.mxu0 %v257
    %902 = vmatpush.msra.mxu0 %v256
    %903 = vmatpush.msra.mxu0 %v255
    %904 = vmatpush.msra.mxu0 %v254
    %905 = vmatpush.msra.mxu0 %v253
    %906 = vmatpush.msra.mxu0 %v252
    %907 = vmatpush.msra.mxu0 %v251
    %908 = vmatpush.msra.mxu0 %v250
    %909 = vmatpush.msra.mxu0 %v249
    %910 = vmatmul.f32.gmra.mxu0 %v579
    %v911 = vpop.f32.mrf.mxu0
    %v912 = vadd.f32 %v892, %v911
    %913 = vdwg.mxu0
    %914 = vmatpush.msra.mxu0 %v280
    %915 = vmatpush.msra.mxu0 %v279
    %916 = vmatpush.msra.mxu0 %v278
    %917 = vmatpush.msra.mxu0 %v277
    %918 = vmatpush.msra.mxu0 %v276
    %919 = vmatpush.msra.mxu0 %v275
    %920 = vmatpush.msra.mxu0 %v274
    %921 = vmatpush.msra.mxu0 %v273
    %922 = vmatpush.msra.mxu0 %v272
    %923 = vmatpush.msra.mxu0 %v271
    %924 = vmatpush.msra.mxu0 %v270
    %925 = vmatpush.msra.mxu0 %v269
    %926 = vmatpush.msra.mxu0 %v268
    %927 = vmatpush.msra.mxu0 %v267
    %928 = vmatpush.msra.mxu0 %v266
    %929 = vmatpush.msra.mxu0 %v265
    %930 = vmatmul.f32.gmra.mxu0 %v580
    %v931 = vpop.f32.mrf.mxu0
    %v932 = vadd.f32 %v912, %v931
    %933 = vdwg.mxu0
    %934 = vmatpush.msra.mxu0 %v296
    %935 = vmatpush.msra.mxu0 %v295
    %936 = vmatpush.msra.mxu0 %v294
    %937 = vmatpush.msra.mxu0 %v293
    %938 = vmatpush.msra.mxu0 %v292
    %939 = vmatpush.msra.mxu0 %v291
    %940 = vmatpush.msra.mxu0 %v290
    %941 = vmatpush.msra.mxu0 %v289
    %942 = vmatpush.msra.mxu0 %v288
    %943 = vmatpush.msra.mxu0 %v287
    %944 = vmatpush.msra.mxu0 %v286
    %945 = vmatpush.msra.mxu0 %v285
    %946 = vmatpush.msra.mxu0 %v284
    %947 = vmatpush.msra.mxu0 %v283
    %948 = vmatpush.msra.mxu0 %v282
    %949 = vmatpush.msra.mxu0 %v281
    %950 = vmatmul.f32.gmra.mxu0 %v581
    %v951 = vpop.f32.mrf.mxu0
    %v952 = vadd.f32 %v932, %v951
    %953 = vdwg.mxu0
    %954 = vmatpush.msra.mxu0 %v312
    %955 = vmatpush.msra.mxu0 %v311
    %956 = vmatpush.msra.mxu0 %v310
    %957 = vmatpush.msra.mxu0 %v309
    %958 = vmatpush.msra.mxu0 %v308
    %959 = vmatpush.msra.mxu0 %v307
    %960 = vmatpush.msra.mxu0 %v306
    %961 = vmatpush.msra.mxu0 %v305
    %962 = vmatpush.msra.mxu0 %v304
    %963 = vmatpush.msra.mxu0 %v303
    %964 = vmatpush.msra.mxu0 %v302
    %965 = vmatpush.msra.mxu0 %v301
    %966 = vmatpush.msra.mxu0 %v300
    %967 = vmatpush.msra.mxu0 %v299
    %968 = vmatpush.msra.mxu0 %v298
    %969 = vmatpush.msra.mxu0 %v297
    %970 = vmatmul.f32.gmra.mxu0 %v584
    %v971 = vpop.f32.mrf.mxu0
    %v972 = vadd.f32 %v952, %v971
    %973 = vdwg.mxu0
    %974 = vmatpush.msra.mxu0 %v328
    %975 = vmatpush.msra.mxu0 %v327
    %976 = vmatpush.msra.mxu0 %v326
    %977 = vmatpush.msra.mxu0 %v325
    %978 = vmatpush.msra.mxu0 %v324
    %979 = vmatpush.msra.mxu0 %v323
    %980 = vmatpush.msra.mxu0 %v322
    %981 = vmatpush.msra.mxu0 %v321
    %982 = vmatpush.msra.mxu0 %v320
    %983 = vmatpush.msra.mxu0 %v319
    %984 = vmatpush.msra.mxu0 %v318
    %985 = vmatpush.msra.mxu0 %v317
    %986 = vmatpush.msra.mxu0 %v316
    %987 = vmatpush.msra.mxu0 %v315
    %988 = vmatpush.msra.mxu0 %v314
    %989 = vmatpush.msra.mxu0 %v313
    %990 = vmatmul.f32.gmra.mxu0 %v585
    %v991 = vpop.f32.mrf.mxu0
    %v992 = vadd.f32 %v972, %v991
    %993 = vdwg.mxu0
    %994 = vmatpush.msra.mxu0 %v344
    %995 = vmatpush.msra.mxu0 %v343
    %996 = vmatpush.msra.mxu0 %v342
    %997 = vmatpush.msra.mxu0 %v341
    %998 = vmatpush.msra.mxu0 %v340
    %999 = vmatpush.msra.mxu0 %v339
    %1000 = vmatpush.msra.mxu0 %v338
    %1001 = vmatpush.msra.mxu0 %v337
    %1002 = vmatpush.msra.mxu0 %v336
    %1003 = vmatpush.msra.mxu0 %v335
    %1004 = vmatpush.msra.mxu0 %v334
    %1005 = vmatpush.msra.mxu0 %v333
    %1006 = vmatpush.msra.mxu0 %v332
    %1007 = vmatpush.msra.mxu0 %v331
    %1008 = vmatpush.msra.mxu0 %v330
    %1009 = vmatpush.msra.mxu0 %v329
    %1010 = vmatmul.f32.gmra.mxu0 %v586
    %v1011 = vpop.f32.mrf.mxu0
    %v1012 = vadd.f32 %v992, %v1011
    %1013 = vdwg.mxu0
    %1014 = vmatpush.msra.mxu0 %v360
    %1015 = vmatpush.msra.mxu0 %v359
    %1016 = vmatpush.msra.mxu0 %v358
    %1017 = vmatpush.msra.mxu0 %v357
    %1018 = vmatpush.msra.mxu0 %v356
    %1019 = vmatpush.msra.mxu0 %v355
    %1020 = vmatpush.msra.mxu0 %v354
    %1021 = vmatpush.msra.mxu0 %v353
    %1022 = vmatpush.msra.mxu0 %v352
    %1023 = vmatpush.msra.mxu0 %v351
    %1024 = vmatpush.msra.mxu0 %v350
    %1025 = vmatpush.msra.mxu0 %v349
    %1026 = vmatpush.msra.mxu0 %v348
    %1027 = vmatpush.msra.mxu0 %v347
    %1028 = vmatpush.msra.mxu0 %v346
    %1029 = vmatpush.msra.mxu0 %v345
    %1030 = vmatmul.f32.gmra.mxu0 %v587
    %v1031 = vpop.f32.mrf.mxu0
    %v1032 = vadd.f32 %v1012, %v1031
    %1033 = vdwg.mxu0
    %1034 = vmatpush.msra.mxu0 %v376
    %1035 = vmatpush.msra.mxu0 %v375
    %1036 = vmatpush.msra.mxu0 %v374
    %1037 = vmatpush.msra.mxu0 %v373
    %1038 = vmatpush.msra.mxu0 %v372
    %1039 = vmatpush.msra.mxu0 %v371
    %1040 = vmatpush.msra.mxu0 %v370
    %1041 = vmatpush.msra.mxu0 %v369
    %1042 = vmatpush.msra.mxu0 %v368
    %1043 = vmatpush.msra.mxu0 %v367
    %1044 = vmatpush.msra.mxu0 %v366
    %1045 = vmatpush.msra.mxu0 %v365
    %1046 = vmatpush.msra.mxu0 %v364
    %1047 = vmatpush.msra.mxu0 %v363
    %1048 = vmatpush.msra.mxu0 %v362
    %1049 = vmatpush.msra.mxu0 %v361
    %1050 = vmatmul.f32.gmra.mxu0 %v588
    %v1051 = vpop.f32.mrf.mxu0
    %v1052 = vadd.f32 %v1032, %v1051
    %1053 = vdwg.mxu0
    %1054 = vmatpush.msra.mxu0 %v392
    %1055 = vmatpush.msra.mxu0 %v391
    %1056 = vmatpush.msra.mxu0 %v390
    %1057 = vmatpush.msra.mxu0 %v389
    %1058 = vmatpush.msra.mxu0 %v388
    %1059 = vmatpush.msra.mxu0 %v387
    %1060 = vmatpush.msra.mxu0 %v386
    %1061 = vmatpush.msra.mxu0 %v385
    %1062 = vmatpush.msra.mxu0 %v384
    %1063 = vmatpush.msra.mxu0 %v383
    %1064 = vmatpush.msra.mxu0 %v382
    %1065 = vmatpush.msra.mxu0 %v381
    %1066 = vmatpush.msra.mxu0 %v380
    %1067 = vmatpush.msra.mxu0 %v379
    %1068 = vmatpush.msra.mxu0 %v378
    %1069 = vmatpush.msra.mxu0 %v377
    %1070 = vmatmul.f32.gmra.mxu0 %v589
    %v1071 = vpop.f32.mrf.mxu0
    %v1072 = vadd.f32 %v1052, %v1071
    %1073 = vdwg.mxu0
    %1074 = vmatpush.msra.mxu0 %v408
    %1075 = vmatpush.msra.mxu0 %v407
    %1076 = vmatpush.msra.mxu0 %v406
    %1077 = vmatpush.msra.mxu0 %v405
    %1078 = vmatpush.msra.mxu0 %v404
    %1079 = vmatpush.msra.mxu0 %v403
    %1080 = vmatpush.msra.mxu0 %v402
    %1081 = vmatpush.msra.mxu0 %v401
    %1082 = vmatpush.msra.mxu0 %v400
    %1083 = vmatpush.msra.mxu0 %v399
    %1084 = vmatpush.msra.mxu0 %v398
    %1085 = vmatpush.msra.mxu0 %v397
    %1086 = vmatpush.msra.mxu0 %v396
    %1087 = vmatpush.msra.mxu0 %v395
    %1088 = vmatpush.msra.mxu0 %v394
    %1089 = vmatpush.msra.mxu0 %v393
    %1090 = vmatmul.f32.gmra.mxu0 %v590
    %v1091 = vpop.f32.mrf.mxu0
    %v1092 = vadd.f32 %v1072, %v1091
    %1093 = vdwg.mxu0
    %1094 = vmatpush.msra.mxu0 %v424
    %1095 = vmatpush.msra.mxu0 %v423
    %1096 = vmatpush.msra.mxu0 %v422
    %1097 = vmatpush.msra.mxu0 %v421
    %1098 = vmatpush.msra.mxu0 %v420
    %1099 = vmatpush.msra.mxu0 %v419
    %1100 = vmatpush.msra.mxu0 %v418
    %1101 = vmatpush.msra.mxu0 %v417
    %1102 = vmatpush.msra.mxu0 %v416
    %1103 = vmatpush.msra.mxu0 %v415
    %1104 = vmatpush.msra.mxu0 %v414
    %1105 = vmatpush.msra.mxu0 %v413
    %1106 = vmatpush.msra.mxu0 %v412
    %1107 = vmatpush.msra.mxu0 %v411
    %1108 = vmatpush.msra.mxu0 %v410
    %1109 = vmatpush.msra.mxu0 %v409
    %1110 = vmatmul.f32.gmra.mxu0 %v591
    %v1111 = vpop.f32.mrf.mxu0
    %v1112 = vadd.f32 %v1092, %v1111
    %1113 = vdwg.mxu0
    %1114 = vmatpush.msra.mxu0 %v440
    %1115 = vmatpush.msra.mxu0 %v439
    %1116 = vmatpush.msra.mxu0 %v438
    %1117 = vmatpush.msra.mxu0 %v437
    %1118 = vmatpush.msra.mxu0 %v436
    %1119 = vmatpush.msra.mxu0 %v435
    %1120 = vmatpush.msra.mxu0 %v434
    %1121 = vmatpush.msra.mxu0 %v433
    %1122 = vmatpush.msra.mxu0 %v432
    %1123 = vmatpush.msra.mxu0 %v431
    %1124 = vmatpush.msra.mxu0 %v430
    %1125 = vmatpush.msra.mxu0 %v429
    %1126 = vmatpush.msra.mxu0 %v428
    %1127 = vmatpush.msra.mxu0 %v427
    %1128 = vmatpush.msra.mxu0 %v426
    %1129 = vmatpush.msra.mxu0 %v425
    %1130 = vmatmul.f32.gmra.mxu0 %v594
    %v1131 = vpop.f32.mrf.mxu0
    %v1132 = vadd.f32 %v1112, %v1131
    %1133 = vdwg.mxu0
    %1134 = vmatpush.msra.mxu0 %v456
    %1135 = vmatpush.msra.mxu0 %v455
    %1136 = vmatpush.msra.mxu0 %v454
    %1137 = vmatpush.msra.mxu0 %v453
    %1138 = vmatpush.msra.mxu0 %v452
    %1139 = vmatpush.msra.mxu0 %v451
    %1140 = vmatpush.msra.mxu0 %v450
    %1141 = vmatpush.msra.mxu0 %v449
    %1142 = vmatpush.msra.mxu0 %v448
    %1143 = vmatpush.msra.mxu0 %v447
    %1144 = vmatpush.msra.mxu0 %v446
    %1145 = vmatpush.msra.mxu0 %v445
    %1146 = vmatpush.msra.mxu0 %v444
    %1147 = vmatpush.msra.mxu0 %v443
    %1148 = vmatpush.msra.mxu0 %v442
    %1149 = vmatpush.msra.mxu0 %v441
    %1150 = vmatmul.f32.gmra.mxu0 %v595
    %v1151 = vpop.f32.mrf.mxu0
    %v1152 = vadd.f32 %v1132, %v1151
    %1153 = vdwg.mxu0
    %1154 = vmatpush.msra.mxu0 %v472
    %1155 = vmatpush.msra.mxu0 %v471
    %1156 = vmatpush.msra.mxu0 %v470
    %1157 = vmatpush.msra.mxu0 %v469
    %1158 = vmatpush.msra.mxu0 %v468
    %1159 = vmatpush.msra.mxu0 %v467
    %1160 = vmatpush.msra.mxu0 %v466
    %1161 = vmatpush.msra.mxu0 %v465
    %1162 = vmatpush.msra.mxu0 %v464
    %1163 = vmatpush.msra.mxu0 %v463
    %1164 = vmatpush.msra.mxu0 %v462
    %1165 = vmatpush.msra.mxu0 %v461
    %1166 = vmatpush.msra.mxu0 %v460
    %1167 = vmatpush.msra.mxu0 %v459
    %1168 = vmatpush.msra.mxu0 %v458
    %1169 = vmatpush.msra.mxu0 %v457
    %1170 = vmatmul.f32.gmra.mxu0 %v596
    %v1171 = vpop.f32.mrf.mxu0
    %v1172 = vadd.f32 %v1152, %v1171
    %1173 = vdwg.mxu0
    %1174 = vmatpush.msra.mxu0 %v488
    %1175 = vmatpush.msra.mxu0 %v487
    %1176 = vmatpush.msra.mxu0 %v486
    %1177 = vmatpush.msra.mxu0 %v485
    %1178 = vmatpush.msra.mxu0 %v484
    %1179 = vmatpush.msra.mxu0 %v483
    %1180 = vmatpush.msra.mxu0 %v482
    %1181 = vmatpush.msra.mxu0 %v481
    %1182 = vmatpush.msra.mxu0 %v480
    %1183 = vmatpush.msra.mxu0 %v479
    %1184 = vmatpush.msra.mxu0 %v478
    %1185 = vmatpush.msra.mxu0 %v477
    %1186 = vmatpush.msra.mxu0 %v476
    %1187 = vmatpush.msra.mxu0 %v475
    %1188 = vmatpush.msra.mxu0 %v474
    %1189 = vmatpush.msra.mxu0 %v473
    %1190 = vmatmul.f32.gmra.mxu0 %v597
    %v1191 = vpop.f32.mrf.mxu0
    %v1192 = vadd.f32 %v1172, %v1191
    %1193 = vdwg.mxu0
    %1194 = vmatpush.msra.mxu0 %v504
    %1195 = vmatpush.msra.mxu0 %v503
    %1196 = vmatpush.msra.mxu0 %v502
    %1197 = vmatpush.msra.mxu0 %v501
    %1198 = vmatpush.msra.mxu0 %v500
    %1199 = vmatpush.msra.mxu0 %v499
    %1200 = vmatpush.msra.mxu0 %v498
    %1201 = vmatpush.msra.mxu0 %v497
    %1202 = vmatpush.msra.mxu0 %v496
    %1203 = vmatpush.msra.mxu0 %v495
    %1204 = vmatpush.msra.mxu0 %v494
    %1205 = vmatpush.msra.mxu0 %v493
    %1206 = vmatpush.msra.mxu0 %v492
    %1207 = vmatpush.msra.mxu0 %v491
    %1208 = vmatpush.msra.mxu0 %v490
    %1209 = vmatpush.msra.mxu0 %v489
    %1210 = vmatmul.f32.gmra.mxu0 %v598
    %v1211 = vpop.f32.mrf.mxu0
    %v1212 = vadd.f32 %v1192, %v1211
    %1213 = vdwg.mxu0
    %1214 = vmatpush.msra.mxu0 %v520
    %1215 = vmatpush.msra.mxu0 %v519
    %1216 = vmatpush.msra.mxu0 %v518
    %1217 = vmatpush.msra.mxu0 %v517
    %1218 = vmatpush.msra.mxu0 %v516
    %1219 = vmatpush.msra.mxu0 %v515
    %1220 = vmatpush.msra.mxu0 %v514
    %1221 = vmatpush.msra.mxu0 %v513
    %1222 = vmatpush.msra.mxu0 %v512
    %1223 = vmatpush.msra.mxu0 %v511
    %1224 = vmatpush.msra.mxu0 %v510
    %1225 = vmatpush.msra.mxu0 %v509
    %1226 = vmatpush.msra.mxu0 %v508
    %1227 = vmatpush.msra.mxu0 %v507
    %1228 = vmatpush.msra.mxu0 %v506
    %1229 = vmatpush.msra.mxu0 %v505
    %1230 = vmatmul.f32.gmra.mxu0 %v599
    %v1231 = vpop.f32.mrf.mxu0
    %v1232 = vadd.f32 %v1212, %v1231
    %1233 = vdwg.mxu0
    %1234 = vmatpush.msra.mxu0 %v536
    %1235 = vmatpush.msra.mxu0 %v535
    %1236 = vmatpush.msra.mxu0 %v534
    %1237 = vmatpush.msra.mxu0 %v533
    %1238 = vmatpush.msra.mxu0 %v532
    %1239 = vmatpush.msra.mxu0 %v531
    %1240 = vmatpush.msra.mxu0 %v530
    %1241 = vmatpush.msra.mxu0 %v529
    %1242 = vmatpush.msra.mxu0 %v528
    %1243 = vmatpush.msra.mxu0 %v527
    %1244 = vmatpush.msra.mxu0 %v526
    %1245 = vmatpush.msra.mxu0 %v525
    %1246 = vmatpush.msra.mxu0 %v524
    %1247 = vmatpush.msra.mxu0 %v523
    %1248 = vmatpush.msra.mxu0 %v522
    %1249 = vmatpush.msra.mxu0 %v521
    %1250 = vmatmul.f32.gmra.mxu0 %v600
    %v1251 = vpop.f32.mrf.mxu0
    %v1252 = vadd.f32 %v1232, %v1251
    %1253 = vdwg.mxu0
    %1254 = vmatpush.msra.mxu0 %v552
    %1255 = vmatpush.msra.mxu0 %v551
    %1256 = vmatpush.msra.mxu0 %v550
    %1257 = vmatpush.msra.mxu0 %v549
    %1258 = vmatpush.msra.mxu0 %v548
    %1259 = vmatpush.msra.mxu0 %v547
    %1260 = vmatpush.msra.mxu0 %v546
    %1261 = vmatpush.msra.mxu0 %v545
    %1262 = vmatpush.msra.mxu0 %v544
    %1263 = vmatpush.msra.mxu0 %v543
    %1264 = vmatpush.msra.mxu0 %v542
    %1265 = vmatpush.msra.mxu0 %v541
    %1266 = vmatpush.msra.mxu0 %v540
    %1267 = vmatpush.msra.mxu0 %v539
    %1268 = vmatpush.msra.mxu0 %v538
    %1269 = vmatpush.msra.mxu0 %v537
    %1270 = vmatmul.f32.gmra.mxu0 %v601
    %v1271 = vpop.f32.mrf.mxu0
    %v1272 = vadd.f32 %v1252, %v1271
    %1273 = vdwg.mxu0
    %v1274 = vld [vmem:[%s2] sm:$0x1]
    %v1276 = vperm.slane %v1274, 0
    %v1278 = vmul.f32 %v1272, %v1276
    %v1279 = vld [vmem:[%s3] sm:$0x1]
    %v1281 = vperm.slane %v1279, 0
    %v1283 = vadd.f32 %v1278, %v1281
    %v1284 = vmax.f32 %v1283, 0.0
    %v1285 = vld [vmem:[%s4] sm:$0xff]
    %v1286 = vld [vmem:[%s4 + $0x8] sm:$0xff]
    %v1287 = vld [vmem:[%s4 + $0x10] sm:$0xff]
    %v1288 = vld [vmem:[%s4 + $0x18] sm:$0xff]
    %vm1289 = vcmask 261120
    %v1291 = vsel %vm1289, %v1284, 0
    %1293 = vmatpush.msra.mxu0 0.0
    %1294 = vmatpush.msra.mxu0 0.0
    %1295 = vmatpush.msra.mxu0 0.0
    %1296 = vmatpush.msra.mxu0 0.0
    %1297 = vmatpush.msra.mxu0 0.0
    %1298 = vmatpush.msra.mxu0 0.0
    %1299 = vmatpush.msra.mxu0 0.0
    %1300 = vmatpush.msra.mxu0 0.0
    %1301 = vmatpush.msra.mxu0 0.0
    %1302 = vmatpush.msra.mxu0 0.0
    %1303 = vmatpush.msra.mxu0 0.0
    %1304 = vmatpush.msra.mxu0 0.0
    %1305 = vmatpush.msra.mxu0 %v1288
    %1306 = vmatpush.msra.mxu0 %v1287
    %1307 = vmatpush.msra.mxu0 %v1286
    %1308 = vmatpush.msra.mxu0 %v1285
    %1309 = vmatmul.f32.gmra.mxu0 %v1291
    %v1310 = vpop.f32.mrf.mxu0
    %v1311 = vadd.f32 0.0, %v1310
    %1312 = vdwg.mxu0
    %v1313 = vld [vmem:[%s5] sm:$0x1]
    %v1315 = vperm.slane %v1313, 0
    %v1317 = vmul.f32 %v1311, %v1315
    %v1318 = vld [vmem:[%s6] sm:$0x1]
    %v1320 = vperm.slane %v1318, 0
    %v1322 = vadd.f32 %v1317, %v1320
    %v1323 = vmax.f32 %v1322, 0.0
    %v1324 = vld [vmem:[%s7] sm:$0xff]
    %v1325 = vld [vmem:[%s7 + $0x8] sm:$0xff]
    %v1326 = vld [vmem:[%s7 + $0x10] sm:$0xff]
    %v1327 = vld [vmem:[%s7 + $0x18] sm:$0xff]
    %v1328 = vld [vmem:[%s8] sm:$0x1]
    %v1330 = vperm.slane %v1328, 0
    %v1333 = vsel %vm1289, %v1323, 0
    %1335 = vmatpush.msra.mxu0 0.0
    %1336 = vmatpush.msra.mxu0 0.0
    %1337 = vmatpush.msra.mxu0 0.0
    %1338 = vmatpush.msra.mxu0 0.0
    %1339 = vmatpush.msra.mxu0 0.0
    %1340 = vmatpush.msra.mxu0 0.0
    %1341 = vmatpush.msra.mxu0 0.0
    %1342 = vmatpush.msra.mxu0 0.0
    %1343 = vmatpush.msra.mxu0 0.0
    %1344 = vmatpush.msra.mxu0 0.0
    %1345 = vmatpush.msra.mxu0 0.0
    %1346 = vmatpush.msra.mxu0 0.0
    %1347 = vmatpush.msra.mxu0 %v1327
    %1348 = vmatpush.msra.mxu0 %v1326
    %1349 = vmatpush.msra.mxu0 %v1325
    %1350 = vmatpush.msra.mxu0 %v1324
    %1351 = vmatmul.f32.gmra.mxu0 %v1333
    %v1352 = vpop.f32.mrf.mxu0
    %v1353 = vadd.f32 %v1330, %v1352
    %1354 = vdwg.mxu0
    %vm1355 = vcmask 25600
    %v1356 = vsel %vm1355, %v1353, -inf
    %1357 = vmax.xlane.f32.xlu0 %v1356
    %v1358 = vpop.xlane.xlu0 %1357
    %v1359 = vsub.f32 %v1353, %v1358
    %v1360 = vmul.f32 %v1359, 1.442695
    %v1361 = vpow.pop %v1360
    %v1362 = vsel %vm1355, %v1361, 0.0
    %1363 = vadd.xlane.f32.xlu0 %v1362
    %v1364 = vpop.xlane.xlu0 %1363
    %v1365 = vrcp.pop %v1364
    %v1366 = vmul.f32 %v1364, %v1365
    %v1367 = vsub.f32 1.0, %v1366
    %v1368 = vmul.f32 %v1365, %v1367
    %v1369 = vadd.f32 %v1365, %v1368
    %vm1370 = vweird.f32 %v1364
    %vm1371 = vweird.f32 %v1365
    %vm1372 = vmor %vm1370, %vm1371
    %v1373 = vsel %vm1372, %v1365, %v1369
    %v1374 = vand.u32 2147483647, %v1364
    %vm1375 = vcmp.eq.f32.partialorder %v1374, 8.507059e+37
    %v1376 = vand.u32 %v1364, 2147483648
    %v1377 = vor.u32 1.1754944e-38, %v1376
    %v1378 = vsel %vm1375, %v1377, %v1373
    %v1379 = vmul.f32 %v1361, %v1378
    %1380 = vst.msk [vmem:[#allocation2] sm:$0x3] %vm1355, %v1379
    // Predicated region
    $region38: #{branch3dcnn_srf_forward.3} parent=1 // pred_check
      _
    $region39: #{branch3dcnn_srf_forward.3} parent=1 // pred_check_branch
      %1382 = sbr.rel (0) target = $region41
    $region40: #{branch3dcnn_srf_forward.3} parent=1 // pred_region
      %1384 = vsyncadd [#allocation3], 0
      %s1386 = sshll.u32 [#allocation2], 4
      %s1387 = int_to_ptr.vmem [resolvable:$true] %s1386
      %s1388 = sshll.u32 %s9, 4
      %s1389 = int_to_ptr.hbm [resolvable:$true] %s1388
      %1391 = dma.vmem_to_hbm [thread:$0]  %s1387, 32, %s1389, [#allocation3]
    $region41: #{branch3dcnn_srf_forward.3} parent=1 // pred_fallthru
      _
    // Predicated region
    $region42: #{branch3dcnn_srf_forward.3} parent=1 // pred_check
      _
    $region43: #{branch3dcnn_srf_forward.3} parent=1 // pred_check_branch
      %1393 = sbr.rel (0) target = $region45
    $region44: #{branch3dcnn_srf_forward.3} parent=1 // pred_region
      %1395 = dma.done [#allocation3], 32
    $region45: #{branch3dcnn_srf_forward.3} parent=1 // pred_fallthru
      _
    %1396 = vsyncpa [#allocation3], 1

</llo_original>
